<compile_context>
chip_gen: v6e
topology: v6e:2x2x1
jax: 0.10.0
libtpu: 0.0.40
codegen_flags: <defaults>
</compile_context>

<pallas_src>
import math
import jax
import jax.numpy as jnp
import numpy as np
from jax.experimental import pallas as pl
from jax.experimental.pallas import tpu as pltpu

# ---- model dims (from the PyTorch module) ----
EMBED_DIM = 256
FFN_DIM = 1024
NUM_HEADS = 8
HEAD_DIM = EMBED_DIM // NUM_HEADS

# ---- small example shapes ----
BATCH = 2
SEQ = 8

LN_EPS = 1e-5


def _layernorm(x, gamma, beta, eps=LN_EPS):
    mu = jnp.mean(x, axis=-1, keepdims=True)
    var = jnp.mean((x - mu) ** 2, axis=-1, keepdims=True)
    return (x - mu) * jax.lax.rsqrt(var + eps) * gamma + beta


# ----------------------------------------------------------------------------
# Fused per-sequence kernel: QKV -> MHA -> out-proj -> +res -> LN1 -> FFN
#                            -> +res -> LN2
# ----------------------------------------------------------------------------
def _fused_layer_kernel(x_ref, wqkv_ref, bqkv_ref, wo_ref, bo_ref,
                        g1_ref, be1_ref, w1_ref, b1_ref, w2_ref, b2_ref,
                        g2_ref, be2_ref, o_ref, ctx_ref):
    e = EMBED_DIM
    scale = 1.0 / math.sqrt(HEAD_DIM)

    x = x_ref[0]                                    # (L, E) f32
    x_bf = x.astype(jnp.bfloat16)

    # --- QKV projection: one lane-dense (L,E)x(E,3E) bf16 matmul, f32 acc ---
    qkv = jnp.dot(x_bf, wqkv_ref[...],
                  preferred_element_type=jnp.float32) + bqkv_ref[...]  # (L, 3E)

    q = qkv[:, :e].astype(jnp.bfloat16)
    k = qkv[:, e:2 * e].astype(jnp.bfloat16)
    v = qkv[:, 2 * e:].astype(jnp.bfloat16)

    # --- multi-head attention: each head's (L, 32) result lands in its own
    #     32-lane slice of the VMEM ctx scratch (no concatenate relayouts).
    # TODO(synk): attention-weight dropout (nn.MultiheadAttention dropout) omitted (eval mode).
    # TODO(synk): for large L, switch to a flash-style online softmax (kv-tile
    # grid axis) and a head-batched (H*L, D) score matmul instead of the
    # per-head static loop.
    for h in range(NUM_HEADS):                       # static unroll, 8 heads
        sl = slice(h * HEAD_DIM, (h + 1) * HEAD_DIM)
        qh, kh, vh = q[:, sl], k[:, sl], v[:, sl]
        s = jnp.einsum('ld,md->lm', qh, kh,
                       preferred_element_type=jnp.float32) * scale     # (L, L)
        s = s - jnp.max(s, axis=-1, keepdims=True)
        p = jnp.exp(s)
        p = p * pl.reciprocal(jnp.sum(p, axis=-1, keepdims=True), approx=True)
        ctx_ref[:, sl] = jnp.dot(p.astype(jnp.bfloat16), vh,
                                 preferred_element_type=jnp.float32)   # (L, D)

    # --- out-projection + residual + LayerNorm 1 (dropout = identity) ---
    attn = jnp.dot(ctx_ref[...].astype(jnp.bfloat16), wo_ref[...],
                   preferred_element_type=jnp.float32) + bo_ref[...]
    x1 = _layernorm(x + attn, g1_ref[...], be1_ref[...])

    # --- FFN: Linear -> ReLU -> Linear (hidden stays in VMEM/regs; at L=8 the
    #     (L, FFN_DIM) f32 intermediate is tiny, so no hidden-dim tiling) ---
    hid = jnp.dot(x1.astype(jnp.bfloat16), w1_ref[...],
                  preferred_element_type=jnp.float32) + b1_ref[...]
    hid = jnp.maximum(hid, 0.0)
    ffn = jnp.dot(hid.astype(jnp.bfloat16), w2_ref[...],
                  preferred_element_type=jnp.float32) + b2_ref[...]

    # --- residual + LayerNorm 2 (dropout = identity) ---
    o_ref[0] = _layernorm(x1 + ffn, g2_ref[...], be2_ref[...]).astype(o_ref.dtype)


def transformer_layer(x, p):
    """x: (B, L, E) float32 -> (B, L, E) float32. One fused pallas_call."""
    b, l, e = x.shape
    f = FFN_DIM

    # Grid-invariant blocks: constant index_map, single-buffered.
    def const(shape):
        return pl.BlockSpec(shape, lambda i: (0,) * len(shape),
                            pipeline_mode=pl.Buffered(1))

    return pl.pallas_call(
        _fused_layer_kernel,
        out_shape=jax.ShapeDtypeStruct((b, l, e), jnp.float32),
        grid=(b,),
        in_specs=[
            pl.BlockSpec((1, l, e), lambda i: (i, 0, 0)),  # x (per-sequence)
            const((e, 3 * e)),                             # wqkv (bf16)
            const((1, 3 * e)),                             # bqkv
            const((e, e)),                                 # wo   (bf16)
            const((1, e)),                                 # bo
            const((1, e)),                                 # ln1 gamma
            const((1, e)),                                 # ln1 beta
            const((e, f)),                                 # w1   (bf16)
            const((1, f)),                                 # b1
            const((f, e)),                                 # w2   (bf16)
            const((1, e)),                                 # b2
            const((1, e)),                                 # ln2 gamma
            const((1, e)),                                 # ln2 beta
        ],
        out_specs=pl.BlockSpec((1, l, e), lambda i: (i, 0, 0)),
        scratch_shapes=[pltpu.VMEM((l, e), jnp.float32)],  # attention context
        compiler_params=pltpu.CompilerParams(
            dimension_semantics=("parallel",)),
    )(x, p["wqkv"], p["bqkv"], p["wo"], p["bo"], p["g1"], p["be1"],
      p["w1"], p["b1"], p["w2"], p["b2"], p["g2"], p["be2"])


def init_params(key):
    ks = jax.random.split(key, 8)
    e, f = EMBED_DIM, FFN_DIM
    scale = 0.02
    # big matmul weights stored pre-transposed (x @ W layout) in bf16;
    # biases / LayerNorm params stay f32.
    return {
        "wqkv": (scale * jax.random.normal(ks[0], (e, 3 * e), jnp.float32)).astype(jnp.bfloat16),
        "bqkv": scale * jax.random.normal(ks[1], (1, 3 * e), jnp.float32),
        "wo":   (scale * jax.random.normal(ks[2], (e, e), jnp.float32)).astype(jnp.bfloat16),
        "bo":   scale * jax.random.normal(ks[3], (1, e), jnp.float32),
        "w1":   (scale * jax.random.normal(ks[4], (e, f), jnp.float32)).astype(jnp.bfloat16),
        "b1":   scale * jax.random.normal(ks[5], (1, f), jnp.float32),
        "w2":   (scale * jax.random.normal(ks[6], (f, e), jnp.float32)).astype(jnp.bfloat16),
        "b2":   scale * jax.random.normal(ks[7], (1, e), jnp.float32),
        "g1":   jnp.ones((1, e), jnp.float32),
        "be1":  jnp.zeros((1, e), jnp.float32),
        "g2":   jnp.ones((1, e), jnp.float32),
        "be2":  jnp.zeros((1, e), jnp.float32),
    }


def reference(x, p):
    """Pure-JAX reference of the same forward pass (eval mode; bf16 matmul
    operands with f32 accumulation, matching the kernel's precision policy)."""
    b, l, e = x.shape
    h_, d = NUM_HEADS, HEAD_DIM

    def bdot(a, w):
        return jnp.dot(a.astype(jnp.bfloat16), w.astype(jnp.bfloat16),
                       preferred_element_type=jnp.float32)

    qkv = (bdot(x.reshape(b * l, e), p["wqkv"]) + p["bqkv"]).reshape(b, l, 3 * e)
    q, k, v = qkv[..., :e], qkv[..., e:2 * e], qkv[..., 2 * e:]
    qh = q.reshape(b, l, h_, d).transpose(0, 2, 1, 3).astype(jnp.bfloat16)
    kh = k.reshape(b, l, h_, d).transpose(0, 2, 1, 3).astype(jnp.bfloat16)
    vh = v.reshape(b, l, h_, d).transpose(0, 2, 1, 3).astype(jnp.bfloat16)
    s = jnp.einsum('bhld,bhmd->bhlm', qh, kh,
                   preferred_element_type=jnp.float32) / math.sqrt(d)
    pw = jax.nn.softmax(s, axis=-1)
    a = jnp.einsum('bhlm,bhmd->bhld', pw.astype(jnp.bfloat16), vh,
                   preferred_element_type=jnp.float32)
    a = a.transpose(0, 2, 1, 3).reshape(b, l, e)
    a = bdot(a.reshape(b * l, e), p["wo"]).reshape(b, l, e) + p["bo"]

    def ln(y, g, bb):
        mu = jnp.mean(y, -1, keepdims=True)
        var = jnp.mean((y - mu) ** 2, -1, keepdims=True)
        return (y - mu) / jnp.sqrt(var + LN_EPS) * g + bb

    x1 = ln(x + a, p["g1"], p["be1"])
    hh = jnp.maximum(bdot(x1.reshape(b * l, e), p["w1"]) + p["b1"], 0.0)
    ff = (bdot(hh, p["w2"]) + p["b2"]).reshape(b, l, e)
    return ln(x1 + ff, p["g2"], p["be2"])


if __name__ == "__main__":
    key = jax.random.PRNGKey(0)
    kx, kp = jax.random.split(key)
    x = jax.random.normal(kx, (BATCH, SEQ, EMBED_DIM), jnp.float32)
    params = init_params(kp)

    fwd = jax.jit(transformer_layer)
    out = jax.block_until_ready(fwd(x, params))
    ref = jax.block_until_ready(reference(x, params))

    assert out.shape == (BATCH, SEQ, EMBED_DIM)
    # Tolerance covers bf16 MXU operands and the approx (EUP) softmax reciprocal.
    np.testing.assert_allclose(np.asarray(out), np.asarray(ref), rtol=2e-2, atol=2e-2)

    print("KERNEL_OK")
</pallas_src>

<mosaic_0001>
module attributes {stable_mosaic.version = 11 : i64} {
  func.func @_fused_layer_kernel(%arg0: i32, %arg1: memref<1x8x256xf32, #tpu.memory_space<vmem>>, %arg2: memref<256x768xbf16, #tpu.memory_space<vmem>>, %arg3: memref<1x768xf32, #tpu.memory_space<vmem>>, %arg4: memref<256x256xbf16, #tpu.memory_space<vmem>>, %arg5: memref<1x256xf32, #tpu.memory_space<vmem>>, %arg6: memref<1x256xf32, #tpu.memory_space<vmem>>, %arg7: memref<1x256xf32, #tpu.memory_space<vmem>>, %arg8: memref<256x1024xbf16, #tpu.memory_space<vmem>>, %arg9: memref<1x1024xf32, #tpu.memory_space<vmem>>, %arg10: memref<1024x256xbf16, #tpu.memory_space<vmem>>, %arg11: memref<1x256xf32, #tpu.memory_space<vmem>>, %arg12: memref<1x256xf32, #tpu.memory_space<vmem>>, %arg13: memref<1x256xf32, #tpu.memory_space<vmem>>, %arg14: memref<1x8x256xf32, #tpu.memory_space<vmem>>, %arg15: memref<8x256xf32, #tpu.memory_space<vmem>>) attributes {dimension_semantics = [#tpu.dimension_semantics<parallel>], iteration_bounds = array<i64: 2>, scalar_prefetch = 0 : i64, scratch_operands = 1 : i64, tpu.core_type = #tpu.core_type<tc>, window_params = [{transform_indices = @transform_0, window_bounds = array<i64: 1, 8, 256>}, {pipeline_mode = #tpu.pipeline_mode<synchronous>, transform_indices = @transform_1, window_bounds = array<i64: 256, 768>}, {pipeline_mode = #tpu.pipeline_mode<synchronous>, transform_indices = @transform_2, window_bounds = array<i64: 1, 768>}, {pipeline_mode = #tpu.pipeline_mode<synchronous>, transform_indices = @transform_3, window_bounds = array<i64: 256, 256>}, {pipeline_mode = #tpu.pipeline_mode<synchronous>, transform_indices = @transform_4, window_bounds = array<i64: 1, 256>}, {pipeline_mode = #tpu.pipeline_mode<synchronous>, transform_indices = @transform_5, window_bounds = array<i64: 1, 256>}, {pipeline_mode = #tpu.pipeline_mode<synchronous>, transform_indices = @transform_6, window_bounds = array<i64: 1, 256>}, {pipeline_mode = #tpu.pipeline_mode<synchronous>, transform_indices = @transform_7, window_bounds = array<i64: 256, 1024>}, {pipeline_mode = #tpu.pipeline_mode<synchronous>, transform_indices = @transform_8, window_bounds = array<i64: 1, 1024>}, {pipeline_mode = #tpu.pipeline_mode<synchronous>, transform_indices = @transform_9, window_bounds = array<i64: 1024, 256>}, {pipeline_mode = #tpu.pipeline_mode<synchronous>, transform_indices = @transform_10, window_bounds = array<i64: 1, 256>}, {pipeline_mode = #tpu.pipeline_mode<synchronous>, transform_indices = @transform_11, window_bounds = array<i64: 1, 256>}, {pipeline_mode = #tpu.pipeline_mode<synchronous>, transform_indices = @transform_12, window_bounds = array<i64: 1, 256>}, {transform_indices = @transform_13, window_bounds = array<i64: 1, 8, 256>}]} {
    %c0 = arith.constant 0 : index
    %c0_0 = arith.constant 0 : index
    %c0_1 = arith.constant 0 : index
    %0 = vector.load %arg1[%c0, %c0_0, %c0_1] : memref<1x8x256xf32, #tpu.memory_space<vmem>>, vector<1x8x256xf32>
    %1 = vector.shape_cast %0 : vector<1x8x256xf32> to vector<8x256xf32>
    %2 = arith.truncf %1 : vector<8x256xf32> to vector<8x256xbf16>
    %c0_2 = arith.constant 0 : index
    %c0_3 = arith.constant 0 : index
    %3 = vector.load %arg2[%c0_2, %c0_3] : memref<256x768xbf16, #tpu.memory_space<vmem>>, vector<256x768xbf16>
    %cst = arith.constant dense<0.000000e+00> : vector<8x768xf32>
    %4 = tpu.matmul %2, %3, %cst {dimension_numbers = #tpu.dot_dimension_numbers<[1], [0], [0], [1], [0, 0, 1, 1], [], []>} : vector<8x256xbf16>, vector<256x768xbf16>, vector<8x768xf32> -> vector<8x768xf32>
    %c0_4 = arith.constant 0 : index
    %c0_5 = arith.constant 0 : index
    %5 = vector.load %arg3[%c0_4, %c0_5] : memref<1x768xf32, #tpu.memory_space<vmem>>, vector<1x768xf32>
    %6 = vector.broadcast %5 : vector<1x768xf32> to vector<8x768xf32>
    %7 = arith.addf %4, %6 : vector<8x768xf32>
    %8 = vector.extract_strided_slice %7 {offsets = [0, 0], sizes = [8, 256], strides = [1, 1]} : vector<8x768xf32> to vector<8x256xf32>
    %9 = arith.truncf %8 : vector<8x256xf32> to vector<8x256xbf16>
    %10 = vector.extract_strided_slice %7 {offsets = [0, 256], sizes = [8, 256], strides = [1, 1]} : vector<8x768xf32> to vector<8x256xf32>
    %11 = arith.truncf %10 : vector<8x256xf32> to vector<8x256xbf16>
    %12 = vector.extract_strided_slice %7 {offsets = [0, 512], sizes = [8, 256], strides = [1, 1]} : vector<8x768xf32> to vector<8x256xf32>
    %13 = arith.truncf %12 : vector<8x256xf32> to vector<8x256xbf16>
    %14 = vector.extract_strided_slice %9 {offsets = [0, 0], sizes = [8, 32], strides = [1, 1]} : vector<8x256xbf16> to vector<8x32xbf16>
    %15 = vector.extract_strided_slice %11 {offsets = [0, 0], sizes = [8, 32], strides = [1, 1]} : vector<8x256xbf16> to vector<8x32xbf16>
    %16 = vector.extract_strided_slice %13 {offsets = [0, 0], sizes = [8, 32], strides = [1, 1]} : vector<8x256xbf16> to vector<8x32xbf16>
    "tpu.trace_start"() <{level = 10 : i32, message = "ld,md->lm"}> : () -> ()
    %cst_6 = arith.constant dense<0.000000e+00> : vector<8x8xf32>
    %17 = tpu.matmul %14, %15, %cst_6 {dimension_numbers = #tpu.dot_dimension_numbers<[1], [1], [0], [0], [0, 0, 1, 0], [], []>} : vector<8x32xbf16>, vector<8x32xbf16>, vector<8x8xf32> -> vector<8x8xf32>
    "tpu.trace_stop"() : () -> ()
    %cst_7 = arith.constant 0.176776692 : f32
    %18 = vector.broadcast %cst_7 : f32 to vector<8x8xf32>
    %19 = arith.mulf %17, %18 : vector<8x8xf32>
    %cst_8 = arith.constant dense<0xFF800000> : vector<8xf32>
    %20 = vector.multi_reduction <maximumf>, %19, %cst_8 [1] : vector<8x8xf32> to vector<8xf32>
    %21 = vector.shape_cast %20 : vector<8xf32> to vector<8x1xf32>
    %22 = vector.broadcast %21 : vector<8x1xf32> to vector<8x8xf32>
    %23 = arith.subf %19, %22 : vector<8x8xf32>
    %24 = math.exp %23 : vector<8x8xf32>
    %cst_9 = arith.constant dense<0.000000e+00> : vector<8xf32>
    %25 = vector.multi_reduction <add>, %24, %cst_9 [1] : vector<8x8xf32> to vector<8xf32>
    %26 = vector.shape_cast %25 : vector<8xf32> to vector<8x1xf32>
    %27 = tpu.reciprocal %26 {approx = true} : vector<8x1xf32> -> vector<8x1xf32>
    %28 = vector.broadcast %27 : vector<8x1xf32> to vector<8x8xf32>
    %29 = arith.mulf %24, %28 : vector<8x8xf32>
    %30 = arith.truncf %29 : vector<8x8xf32> to vector<8x8xbf16>
    %cst_10 = arith.constant dense<0.000000e+00> : vector<8x32xf32>
    %31 = tpu.matmul %30, %16, %cst_10 {dimension_numbers = #tpu.dot_dimension_numbers<[1], [0], [0], [1], [0, 0, 1, 1], [], []>} : vector<8x8xbf16>, vector<8x32xbf16>, vector<8x32xf32> -> vector<8x32xf32>
    %c0_11 = arith.constant 0 : index
    %c0_12 = arith.constant 0 : index
    %32 = vector.load %arg15[%c0_11, %c0_12] : memref<8x256xf32, #tpu.memory_space<vmem>>, vector<8x32xf32>
    tpu.vector_store %arg15[%c0_11, %c0_12], %31 {strides = array<i32>} : memref<8x256xf32, #tpu.memory_space<vmem>>, vector<8x32xf32>,
    %33 = vector.extract_strided_slice %9 {offsets = [0, 32], sizes = [8, 32], strides = [1, 1]} : vector<8x256xbf16> to vector<8x32xbf16>
    %34 = vector.extract_strided_slice %11 {offsets = [0, 32], sizes = [8, 32], strides = [1, 1]} : vector<8x256xbf16> to vector<8x32xbf16>
    %35 = vector.extract_strided_slice %13 {offsets = [0, 32], sizes = [8, 32], strides = [1, 1]} : vector<8x256xbf16> to vector<8x32xbf16>
    "tpu.trace_start"() <{level = 10 : i32, message = "ld,md->lm"}> : () -> ()
    %cst_13 = arith.constant dense<0.000000e+00> : vector<8x8xf32>
    %36 = tpu.matmul %33, %34, %cst_13 {dimension_numbers = #tpu.dot_dimension_numbers<[1], [1], [0], [0], [0, 0, 1, 0], [], []>} : vector<8x32xbf16>, vector<8x32xbf16>, vector<8x8xf32> -> vector<8x8xf32>
    "tpu.trace_stop"() : () -> ()
    %cst_14 = arith.constant 0.176776692 : f32
    %37 = vector.broadcast %cst_14 : f32 to vector<8x8xf32>
    %38 = arith.mulf %36, %37 : vector<8x8xf32>
    %cst_15 = arith.constant dense<0xFF800000> : vector<8xf32>
    %39 = vector.multi_reduction <maximumf>, %38, %cst_15 [1] : vector<8x8xf32> to vector<8xf32>
    %40 = vector.shape_cast %39 : vector<8xf32> to vector<8x1xf32>
    %41 = vector.broadcast %40 : vector<8x1xf32> to vector<8x8xf32>
    %42 = arith.subf %38, %41 : vector<8x8xf32>
    %43 = math.exp %42 : vector<8x8xf32>
    %cst_16 = arith.constant dense<0.000000e+00> : vector<8xf32>
    %44 = vector.multi_reduction <add>, %43, %cst_16 [1] : vector<8x8xf32> to vector<8xf32>
    %45 = vector.shape_cast %44 : vector<8xf32> to vector<8x1xf32>
    %46 = tpu.reciprocal %45 {approx = true} : vector<8x1xf32> -> vector<8x1xf32>
    %47 = vector.broadcast %46 : vector<8x1xf32> to vector<8x8xf32>
    %48 = arith.mulf %43, %47 : vector<8x8xf32>
    %49 = arith.truncf %48 : vector<8x8xf32> to vector<8x8xbf16>
    %cst_17 = arith.constant dense<0.000000e+00> : vector<8x32xf32>
    %50 = tpu.matmul %49, %35, %cst_17 {dimension_numbers = #tpu.dot_dimension_numbers<[1], [0], [0], [1], [0, 0, 1, 1], [], []>} : vector<8x8xbf16>, vector<8x32xbf16>, vector<8x32xf32> -> vector<8x32xf32>
    %c0_18 = arith.constant 0 : index
    %c32 = arith.constant 32 : index
    %51 = vector.load %arg15[%c0_18, %c32] : memref<8x256xf32, #tpu.memory_space<vmem>>, vector<8x32xf32>
    tpu.vector_store %arg15[%c0_18, %c32], %50 {strides = array<i32>} : memref<8x256xf32, #tpu.memory_space<vmem>>, vector<8x32xf32>,
    %52 = vector.extract_strided_slice %9 {offsets = [0, 64], sizes = [8, 32], strides = [1, 1]} : vector<8x256xbf16> to vector<8x32xbf16>
    %53 = vector.extract_strided_slice %11 {offsets = [0, 64], sizes = [8, 32], strides = [1, 1]} : vector<8x256xbf16> to vector<8x32xbf16>
    %54 = vector.extract_strided_slice %13 {offsets = [0, 64], sizes = [8, 32], strides = [1, 1]} : vector<8x256xbf16> to vector<8x32xbf16>
    "tpu.trace_start"() <{level = 10 : i32, message = "ld,md->lm"}> : () -> ()
    %cst_19 = arith.constant dense<0.000000e+00> : vector<8x8xf32>
    %55 = tpu.matmul %52, %53, %cst_19 {dimension_numbers = #tpu.dot_dimension_numbers<[1], [1], [0], [0], [0, 0, 1, 0], [], []>} : vector<8x32xbf16>, vector<8x32xbf16>, vector<8x8xf32> -> vector<8x8xf32>
    "tpu.trace_stop"() : () -> ()
    %cst_20 = arith.constant 0.176776692 : f32
    %56 = vector.broadcast %cst_20 : f32 to vector<8x8xf32>
    %57 = arith.mulf %55, %56 : vector<8x8xf32>
    %cst_21 = arith.constant dense<0xFF800000> : vector<8xf32>
    %58 = vector.multi_reduction <maximumf>, %57, %cst_21 [1] : vector<8x8xf32> to vector<8xf32>
    %59 = vector.shape_cast %58 : vector<8xf32> to vector<8x1xf32>
    %60 = vector.broadcast %59 : vector<8x1xf32> to vector<8x8xf32>
    %61 = arith.subf %57, %60 : vector<8x8xf32>
    %62 = math.exp %61 : vector<8x8xf32>
    %cst_22 = arith.constant dense<0.000000e+00> : vector<8xf32>
    %63 = vector.multi_reduction <add>, %62, %cst_22 [1] : vector<8x8xf32> to vector<8xf32>
    %64 = vector.shape_cast %63 : vector<8xf32> to vector<8x1xf32>
    %65 = tpu.reciprocal %64 {approx = true} : vector<8x1xf32> -> vector<8x1xf32>
    %66 = vector.broadcast %65 : vector<8x1xf32> to vector<8x8xf32>
    %67 = arith.mulf %62, %66 : vector<8x8xf32>
    %68 = arith.truncf %67 : vector<8x8xf32> to vector<8x8xbf16>
    %cst_23 = arith.constant dense<0.000000e+00> : vector<8x32xf32>
    %69 = tpu.matmul %68, %54, %cst_23 {dimension_numbers = #tpu.dot_dimension_numbers<[1], [0], [0], [1], [0, 0, 1, 1], [], []>} : vector<8x8xbf16>, vector<8x32xbf16>, vector<8x32xf32> -> vector<8x32xf32>
    %c0_24 = arith.constant 0 : index
    %c64 = arith.constant 64 : index
    %70 = vector.load %arg15[%c0_24, %c64] : memref<8x256xf32, #tpu.memory_space<vmem>>, vector<8x32xf32>
    tpu.vector_store %arg15[%c0_24, %c64], %69 {strides = array<i32>} : memref<8x256xf32, #tpu.memory_space<vmem>>, vector<8x32xf32>,
    %71 = vector.extract_strided_slice %9 {offsets = [0, 96], sizes = [8, 32], strides = [1, 1]} : vector<8x256xbf16> to vector<8x32xbf16>
    %72 = vector.extract_strided_slice %11 {offsets = [0, 96], sizes = [8, 32], strides = [1, 1]} : vector<8x256xbf16> to vector<8x32xbf16>
    %73 = vector.extract_strided_slice %13 {offsets = [0, 96], sizes = [8, 32], strides = [1, 1]} : vector<8x256xbf16> to vector<8x32xbf16>
    "tpu.trace_start"() <{level = 10 : i32, message = "ld,md->lm"}> : () -> ()
    %cst_25 = arith.constant dense<0.000000e+00> : vector<8x8xf32>
    %74 = tpu.matmul %71, %72, %cst_25 {dimension_numbers = #tpu.dot_dimension_numbers<[1], [1], [0], [0], [0, 0, 1, 0], [], []>} : vector<8x32xbf16>, vector<8x32xbf16>, vector<8x8xf32> -> vector<8x8xf32>
    "tpu.trace_stop"() : () -> ()
    %cst_26 = arith.constant 0.176776692 : f32
    %75 = vector.broadcast %cst_26 : f32 to vector<8x8xf32>
    %76 = arith.mulf %74, %75 : vector<8x8xf32>
    %cst_27 = arith.constant dense<0xFF800000> : vector<8xf32>
    %77 = vector.multi_reduction <maximumf>, %76, %cst_27 [1] : vector<8x8xf32> to vector<8xf32>
    %78 = vector.shape_cast %77 : vector<8xf32> to vector<8x1xf32>
    %79 = vector.broadcast %78 : vector<8x1xf32> to vector<8x8xf32>
    %80 = arith.subf %76, %79 : vector<8x8xf32>
    %81 = math.exp %80 : vector<8x8xf32>
    %cst_28 = arith.constant dense<0.000000e+00> : vector<8xf32>
    %82 = vector.multi_reduction <add>, %81, %cst_28 [1] : vector<8x8xf32> to vector<8xf32>
    %83 = vector.shape_cast %82 : vector<8xf32> to vector<8x1xf32>
    %84 = tpu.reciprocal %83 {approx = true} : vector<8x1xf32> -> vector<8x1xf32>
    %85 = vector.broadcast %84 : vector<8x1xf32> to vector<8x8xf32>
    %86 = arith.mulf %81, %85 : vector<8x8xf32>
    %87 = arith.truncf %86 : vector<8x8xf32> to vector<8x8xbf16>
    %cst_29 = arith.constant dense<0.000000e+00> : vector<8x32xf32>
    %88 = tpu.matmul %87, %73, %cst_29 {dimension_numbers = #tpu.dot_dimension_numbers<[1], [0], [0], [1], [0, 0, 1, 1], [], []>} : vector<8x8xbf16>, vector<8x32xbf16>, vector<8x32xf32> -> vector<8x32xf32>
    %c0_30 = arith.constant 0 : index
    %c96 = arith.constant 96 : index
    %89 = vector.load %arg15[%c0_30, %c96] : memref<8x256xf32, #tpu.memory_space<vmem>>, vector<8x32xf32>
    tpu.vector_store %arg15[%c0_30, %c96], %88 {strides = array<i32>} : memref<8x256xf32, #tpu.memory_space<vmem>>, vector<8x32xf32>,
    %90 = vector.extract_strided_slice %9 {offsets = [0, 128], sizes = [8, 32], strides = [1, 1]} : vector<8x256xbf16> to vector<8x32xbf16>
    %91 = vector.extract_strided_slice %11 {offsets = [0, 128], sizes = [8, 32], strides = [1, 1]} : vector<8x256xbf16> to vector<8x32xbf16>
    %92 = vector.extract_strided_slice %13 {offsets = [0, 128], sizes = [8, 32], strides = [1, 1]} : vector<8x256xbf16> to vector<8x32xbf16>
    "tpu.trace_start"() <{level = 10 : i32, message = "ld,md->lm"}> : () -> ()
    %cst_31 = arith.constant dense<0.000000e+00> : vector<8x8xf32>
    %93 = tpu.matmul %90, %91, %cst_31 {dimension_numbers = #tpu.dot_dimension_numbers<[1], [1], [0], [0], [0, 0, 1, 0], [], []>} : vector<8x32xbf16>, vector<8x32xbf16>, vector<8x8xf32> -> vector<8x8xf32>
    "tpu.trace_stop"() : () -> ()
    %cst_32 = arith.constant 0.176776692 : f32
    %94 = vector.broadcast %cst_32 : f32 to vector<8x8xf32>
    %95 = arith.mulf %93, %94 : vector<8x8xf32>
    %cst_33 = arith.constant dense<0xFF800000> : vector<8xf32>
    %96 = vector.multi_reduction <maximumf>, %95, %cst_33 [1] : vector<8x8xf32> to vector<8xf32>
    %97 = vector.shape_cast %96 : vector<8xf32> to vector<8x1xf32>
    %98 = vector.broadcast %97 : vector<8x1xf32> to vector<8x8xf32>
    %99 = arith.subf %95, %98 : vector<8x8xf32>
    %100 = math.exp %99 : vector<8x8xf32>
    %cst_34 = arith.constant dense<0.000000e+00> : vector<8xf32>
    %101 = vector.multi_reduction <add>, %100, %cst_34 [1] : vector<8x8xf32> to vector<8xf32>
    %102 = vector.shape_cast %101 : vector<8xf32> to vector<8x1xf32>
    %103 = tpu.reciprocal %102 {approx = true} : vector<8x1xf32> -> vector<8x1xf32>
    %104 = vector.broadcast %103 : vector<8x1xf32> to vector<8x8xf32>
    %105 = arith.mulf %100, %104 : vector<8x8xf32>
    %106 = arith.truncf %105 : vector<8x8xf32> to vector<8x8xbf16>
    %cst_35 = arith.constant dense<0.000000e+00> : vector<8x32xf32>
    %107 = tpu.matmul %106, %92, %cst_35 {dimension_numbers = #tpu.dot_dimension_numbers<[1], [0], [0], [1], [0, 0, 1, 1], [], []>} : vector<8x8xbf16>, vector<8x32xbf16>, vector<8x32xf32> -> vector<8x32xf32>
    %c0_36 = arith.constant 0 : index
    %c128 = arith.constant 128 : index
    %108 = vector.load %arg15[%c0_36, %c128] : memref<8x256xf32, #tpu.memory_space<vmem>>, vector<8x32xf32>
    tpu.vector_store %arg15[%c0_36, %c128], %107 {strides = array<i32>} : memref<8x256xf32, #tpu.memory_space<vmem>>, vector<8x32xf32>,
    %109 = vector.extract_strided_slice %9 {offsets = [0, 160], sizes = [8, 32], strides = [1, 1]} : vector<8x256xbf16> to vector<8x32xbf16>
    %110 = vector.extract_strided_slice %11 {offsets = [0, 160], sizes = [8, 32], strides = [1, 1]} : vector<8x256xbf16> to vector<8x32xbf16>
    %111 = vector.extract_strided_slice %13 {offsets = [0, 160], sizes = [8, 32], strides = [1, 1]} : vector<8x256xbf16> to vector<8x32xbf16>
    "tpu.trace_start"() <{level = 10 : i32, message = "ld,md->lm"}> : () -> ()
    %cst_37 = arith.constant dense<0.000000e+00> : vector<8x8xf32>
    %112 = tpu.matmul %109, %110, %cst_37 {dimension_numbers = #tpu.dot_dimension_numbers<[1], [1], [0], [0], [0, 0, 1, 0], [], []>} : vector<8x32xbf16>, vector<8x32xbf16>, vector<8x8xf32> -> vector<8x8xf32>
    "tpu.trace_stop"() : () -> ()
    %cst_38 = arith.constant 0.176776692 : f32
    %113 = vector.broadcast %cst_38 : f32 to vector<8x8xf32>
    %114 = arith.mulf %112, %113 : vector<8x8xf32>
    %cst_39 = arith.constant dense<0xFF800000> : vector<8xf32>
    %115 = vector.multi_reduction <maximumf>, %114, %cst_39 [1] : vector<8x8xf32> to vector<8xf32>
    %116 = vector.shape_cast %115 : vector<8xf32> to vector<8x1xf32>
    %117 = vector.broadcast %116 : vector<8x1xf32> to vector<8x8xf32>
    %118 = arith.subf %114, %117 : vector<8x8xf32>
    %119 = math.exp %118 : vector<8x8xf32>
    %cst_40 = arith.constant dense<0.000000e+00> : vector<8xf32>
    %120 = vector.multi_reduction <add>, %119, %cst_40 [1] : vector<8x8xf32> to vector<8xf32>
    %121 = vector.shape_cast %120 : vector<8xf32> to vector<8x1xf32>
    %122 = tpu.reciprocal %121 {approx = true} : vector<8x1xf32> -> vector<8x1xf32>
    %123 = vector.broadcast %122 : vector<8x1xf32> to vector<8x8xf32>
    %124 = arith.mulf %119, %123 : vector<8x8xf32>
    %125 = arith.truncf %124 : vector<8x8xf32> to vector<8x8xbf16>
    %cst_41 = arith.constant dense<0.000000e+00> : vector<8x32xf32>
    %126 = tpu.matmul %125, %111, %cst_41 {dimension_numbers = #tpu.dot_dimension_numbers<[1], [0], [0], [1], [0, 0, 1, 1], [], []>} : vector<8x8xbf16>, vector<8x32xbf16>, vector<8x32xf32> -> vector<8x32xf32>
    %c0_42 = arith.constant 0 : index
    %c160 = arith.constant 160 : index
    %127 = vector.load %arg15[%c0_42, %c160] : memref<8x256xf32, #tpu.memory_space<vmem>>, vector<8x32xf32>
    tpu.vector_store %arg15[%c0_42, %c160], %126 {strides = array<i32>} : memref<8x256xf32, #tpu.memory_space<vmem>>, vector<8x32xf32>,
    %128 = vector.extract_strided_slice %9 {offsets = [0, 192], sizes = [8, 32], strides = [1, 1]} : vector<8x256xbf16> to vector<8x32xbf16>
    %129 = vector.extract_strided_slice %11 {offsets = [0, 192], sizes = [8, 32], strides = [1, 1]} : vector<8x256xbf16> to vector<8x32xbf16>
    %130 = vector.extract_strided_slice %13 {offsets = [0, 192], sizes = [8, 32], strides = [1, 1]} : vector<8x256xbf16> to vector<8x32xbf16>
    "tpu.trace_start"() <{level = 10 : i32, message = "ld,md->lm"}> : () -> ()
    %cst_43 = arith.constant dense<0.000000e+00> : vector<8x8xf32>
    %131 = tpu.matmul %128, %129, %cst_43 {dimension_numbers = #tpu.dot_dimension_numbers<[1], [1], [0], [0], [0, 0, 1, 0], [], []>} : vector<8x32xbf16>, vector<8x32xbf16>, vector<8x8xf32> -> vector<8x8xf32>
    "tpu.trace_stop"() : () -> ()
    %cst_44 = arith.constant 0.176776692 : f32
    %132 = vector.broadcast %cst_44 : f32 to vector<8x8xf32>
    %133 = arith.mulf %131, %132 : vector<8x8xf32>
    %cst_45 = arith.constant dense<0xFF800000> : vector<8xf32>
    %134 = vector.multi_reduction <maximumf>, %133, %cst_45 [1] : vector<8x8xf32> to vector<8xf32>
    %135 = vector.shape_cast %134 : vector<8xf32> to vector<8x1xf32>
    %136 = vector.broadcast %135 : vector<8x1xf32> to vector<8x8xf32>
    %137 = arith.subf %133, %136 : vector<8x8xf32>
    %138 = math.exp %137 : vector<8x8xf32>
    %cst_46 = arith.constant dense<0.000000e+00> : vector<8xf32>
    %139 = vector.multi_reduction <add>, %138, %cst_46 [1] : vector<8x8xf32> to vector<8xf32>
    %140 = vector.shape_cast %139 : vector<8xf32> to vector<8x1xf32>
    %141 = tpu.reciprocal %140 {approx = true} : vector<8x1xf32> -> vector<8x1xf32>
    %142 = vector.broadcast %141 : vector<8x1xf32> to vector<8x8xf32>
    %143 = arith.mulf %138, %142 : vector<8x8xf32>
    %144 = arith.truncf %143 : vector<8x8xf32> to vector<8x8xbf16>
    %cst_47 = arith.constant dense<0.000000e+00> : vector<8x32xf32>
    %145 = tpu.matmul %144, %130, %cst_47 {dimension_numbers = #tpu.dot_dimension_numbers<[1], [0], [0], [1], [0, 0, 1, 1], [], []>} : vector<8x8xbf16>, vector<8x32xbf16>, vector<8x32xf32> -> vector<8x32xf32>
    %c0_48 = arith.constant 0 : index
    %c192 = arith.constant 192 : index
    %146 = vector.load %arg15[%c0_48, %c192] : memref<8x256xf32, #tpu.memory_space<vmem>>, vector<8x32xf32>
    tpu.vector_store %arg15[%c0_48, %c192], %145 {strides = array<i32>} : memref<8x256xf32, #tpu.memory_space<vmem>>, vector<8x32xf32>,
    %147 = vector.extract_strided_slice %9 {offsets = [0, 224], sizes = [8, 32], strides = [1, 1]} : vector<8x256xbf16> to vector<8x32xbf16>
    %148 = vector.extract_strided_slice %11 {offsets = [0, 224], sizes = [8, 32], strides = [1, 1]} : vector<8x256xbf16> to vector<8x32xbf16>
    %149 = vector.extract_strided_slice %13 {offsets = [0, 224], sizes = [8, 32], strides = [1, 1]} : vector<8x256xbf16> to vector<8x32xbf16>
    "tpu.trace_start"() <{level = 10 : i32, message = "ld,md->lm"}> : () -> ()
    %cst_49 = arith.constant dense<0.000000e+00> : vector<8x8xf32>
    %150 = tpu.matmul %147, %148, %cst_49 {dimension_numbers = #tpu.dot_dimension_numbers<[1], [1], [0], [0], [0, 0, 1, 0], [], []>} : vector<8x32xbf16>, vector<8x32xbf16>, vector<8x8xf32> -> vector<8x8xf32>
    "tpu.trace_stop"() : () -> ()
    %cst_50 = arith.constant 0.176776692 : f32
    %151 = vector.broadcast %cst_50 : f32 to vector<8x8xf32>
    %152 = arith.mulf %150, %151 : vector<8x8xf32>
    %cst_51 = arith.constant dense<0xFF800000> : vector<8xf32>
    %153 = vector.multi_reduction <maximumf>, %152, %cst_51 [1] : vector<8x8xf32> to vector<8xf32>
    %154 = vector.shape_cast %153 : vector<8xf32> to vector<8x1xf32>
    %155 = vector.broadcast %154 : vector<8x1xf32> to vector<8x8xf32>
    %156 = arith.subf %152, %155 : vector<8x8xf32>
    %157 = math.exp %156 : vector<8x8xf32>
    %cst_52 = arith.constant dense<0.000000e+00> : vector<8xf32>
    %158 = vector.multi_reduction <add>, %157, %cst_52 [1] : vector<8x8xf32> to vector<8xf32>
    %159 = vector.shape_cast %158 : vector<8xf32> to vector<8x1xf32>
    %160 = tpu.reciprocal %159 {approx = true} : vector<8x1xf32> -> vector<8x1xf32>
    %161 = vector.broadcast %160 : vector<8x1xf32> to vector<8x8xf32>
    %162 = arith.mulf %157, %161 : vector<8x8xf32>
    %163 = arith.truncf %162 : vector<8x8xf32> to vector<8x8xbf16>
    %cst_53 = arith.constant dense<0.000000e+00> : vector<8x32xf32>
    %164 = tpu.matmul %163, %149, %cst_53 {dimension_numbers = #tpu.dot_dimension_numbers<[1], [0], [0], [1], [0, 0, 1, 1], [], []>} : vector<8x8xbf16>, vector<8x32xbf16>, vector<8x32xf32> -> vector<8x32xf32>
    %c0_54 = arith.constant 0 : index
    %c224 = arith.constant 224 : index
    %165 = vector.load %arg15[%c0_54, %c224] : memref<8x256xf32, #tpu.memory_space<vmem>>, vector<8x32xf32>
    tpu.vector_store %arg15[%c0_54, %c224], %164 {strides = array<i32>} : memref<8x256xf32, #tpu.memory_space<vmem>>, vector<8x32xf32>,
    %c0_55 = arith.constant 0 : index
    %c0_56 = arith.constant 0 : index
    %166 = vector.load %arg15[%c0_55, %c0_56] : memref<8x256xf32, #tpu.memory_space<vmem>>, vector<8x256xf32>
    %167 = arith.truncf %166 : vector<8x256xf32> to vector<8x256xbf16>
    %c0_57 = arith.constant 0 : index
    %c0_58 = arith.constant 0 : index
    %168 = vector.load %arg4[%c0_57, %c0_58] : memref<256x256xbf16, #tpu.memory_space<vmem>>, vector<256x256xbf16>
    %cst_59 = arith.constant dense<0.000000e+00> : vector<8x256xf32>
    %169 = tpu.matmul %167, %168, %cst_59 {dimension_numbers = #tpu.dot_dimension_numbers<[1], [0], [0], [1], [0, 0, 1, 1], [], []>} : vector<8x256xbf16>, vector<256x256xbf16>, vector<8x256xf32> -> vector<8x256xf32>
    %c0_60 = arith.constant 0 : index
    %c0_61 = arith.constant 0 : index
    %170 = vector.load %arg5[%c0_60, %c0_61] : memref<1x256xf32, #tpu.memory_space<vmem>>, vector<1x256xf32>
    %171 = vector.broadcast %170 : vector<1x256xf32> to vector<8x256xf32>
    %172 = arith.addf %169, %171 : vector<8x256xf32>
    %173 = arith.addf %1, %172 : vector<8x256xf32>
    %c0_62 = arith.constant 0 : index
    %c0_63 = arith.constant 0 : index
    %174 = vector.load %arg6[%c0_62, %c0_63] : memref<1x256xf32, #tpu.memory_space<vmem>>, vector<1x256xf32>
    %c0_64 = arith.constant 0 : index
    %c0_65 = arith.constant 0 : index
    %175 = vector.load %arg7[%c0_64, %c0_65] : memref<1x256xf32, #tpu.memory_space<vmem>>, vector<1x256xf32>
    %cst_66 = arith.constant dense<0.000000e+00> : vector<8xf32>
    %176 = vector.multi_reduction <add>, %173, %cst_66 [1] : vector<8x256xf32> to vector<8xf32>
    %177 = vector.shape_cast %176 : vector<8xf32> to vector<8x1xf32>
    %cst_67 = arith.constant 2.560000e+02 : f32
    %178 = vector.broadcast %cst_67 : f32 to vector<8x1xf32>
    %179 = arith.divf %177, %178 : vector<8x1xf32>
    %180 = vector.broadcast %179 : vector<8x1xf32> to vector<8x256xf32>
    %181 = arith.subf %173, %180 : vector<8x256xf32>
    %182 = arith.mulf %181, %181 : vector<8x256xf32>
    %cst_68 = arith.constant dense<0.000000e+00> : vector<8xf32>
    %183 = vector.multi_reduction <add>, %182, %cst_68 [1] : vector<8x256xf32> to vector<8xf32>
    %184 = vector.shape_cast %183 : vector<8xf32> to vector<8x1xf32>
    %cst_69 = arith.constant 2.560000e+02 : f32
    %185 = vector.broadcast %cst_69 : f32 to vector<8x1xf32>
    %186 = arith.divf %184, %185 : vector<8x1xf32>
    %187 = vector.broadcast %179 : vector<8x1xf32> to vector<8x256xf32>
    %188 = arith.subf %173, %187 : vector<8x256xf32>
    %cst_70 = arith.constant 9.99999974E-6 : f32
    %189 = vector.broadcast %cst_70 : f32 to vector<8x1xf32>
    %190 = arith.addf %186, %189 : vector<8x1xf32>
    %191 = math.rsqrt %190 : vector<8x1xf32>
    %192 = vector.broadcast %191 : vector<8x1xf32> to vector<8x256xf32>
    %193 = arith.mulf %188, %192 : vector<8x256xf32>
    %194 = vector.broadcast %174 : vector<1x256xf32> to vector<8x256xf32>
    %195 = arith.mulf %193, %194 : vector<8x256xf32>
    %196 = vector.broadcast %175 : vector<1x256xf32> to vector<8x256xf32>
    %197 = arith.addf %195, %196 : vector<8x256xf32>
    %198 = arith.truncf %197 : vector<8x256xf32> to vector<8x256xbf16>
    %c0_71 = arith.constant 0 : index
    %c0_72 = arith.constant 0 : index
    %199 = vector.load %arg8[%c0_71, %c0_72] : memref<256x1024xbf16, #tpu.memory_space<vmem>>, vector<256x1024xbf16>
    %cst_73 = arith.constant dense<0.000000e+00> : vector<8x1024xf32>
    %200 = tpu.matmul %198, %199, %cst_73 {dimension_numbers = #tpu.dot_dimension_numbers<[1], [0], [0], [1], [0, 0, 1, 1], [], []>} : vector<8x256xbf16>, vector<256x1024xbf16>, vector<8x1024xf32> -> vector<8x1024xf32>
    %c0_74 = arith.constant 0 : index
    %c0_75 = arith.constant 0 : index
    %201 = vector.load %arg9[%c0_74, %c0_75] : memref<1x1024xf32, #tpu.memory_space<vmem>>, vector<1x1024xf32>
    %202 = vector.broadcast %201 : vector<1x1024xf32> to vector<8x1024xf32>
    %203 = arith.addf %200, %202 : vector<8x1024xf32>
    %cst_76 = arith.constant 0.000000e+00 : f32
    %204 = vector.broadcast %cst_76 : f32 to vector<8x1024xf32>
    %205 = arith.maximumf %203, %204 : vector<8x1024xf32>
    %206 = arith.truncf %205 : vector<8x1024xf32> to vector<8x1024xbf16>
    %c0_77 = arith.constant 0 : index
    %c0_78 = arith.constant 0 : index
    %207 = vector.load %arg10[%c0_77, %c0_78] : memref<1024x256xbf16, #tpu.memory_space<vmem>>, vector<1024x256xbf16>
    %cst_79 = arith.constant dense<0.000000e+00> : vector<8x256xf32>
    %208 = tpu.matmul %206, %207, %cst_79 {dimension_numbers = #tpu.dot_dimension_numbers<[1], [0], [0], [1], [0, 0, 1, 1], [], []>} : vector<8x1024xbf16>, vector<1024x256xbf16>, vector<8x256xf32> -> vector<8x256xf32>
    %c0_80 = arith.constant 0 : index
    %c0_81 = arith.constant 0 : index
    %209 = vector.load %arg11[%c0_80, %c0_81] : memref<1x256xf32, #tpu.memory_space<vmem>>, vector<1x256xf32>
    %210 = vector.broadcast %209 : vector<1x256xf32> to vector<8x256xf32>
    %211 = arith.addf %208, %210 : vector<8x256xf32>
    %212 = arith.addf %197, %211 : vector<8x256xf32>
    %c0_82 = arith.constant 0 : index
    %c0_83 = arith.constant 0 : index
    %213 = vector.load %arg12[%c0_82, %c0_83] : memref<1x256xf32, #tpu.memory_space<vmem>>, vector<1x256xf32>
    %c0_84 = arith.constant 0 : index
    %c0_85 = arith.constant 0 : index
    %214 = vector.load %arg13[%c0_84, %c0_85] : memref<1x256xf32, #tpu.memory_space<vmem>>, vector<1x256xf32>
    %cst_86 = arith.constant dense<0.000000e+00> : vector<8xf32>
    %215 = vector.multi_reduction <add>, %212, %cst_86 [1] : vector<8x256xf32> to vector<8xf32>
    %216 = vector.shape_cast %215 : vector<8xf32> to vector<8x1xf32>
    %cst_87 = arith.constant 2.560000e+02 : f32
    %217 = vector.broadcast %cst_87 : f32 to vector<8x1xf32>
    %218 = arith.divf %216, %217 : vector<8x1xf32>
    %219 = vector.broadcast %218 : vector<8x1xf32> to vector<8x256xf32>
    %220 = arith.subf %212, %219 : vector<8x256xf32>
    %221 = arith.mulf %220, %220 : vector<8x256xf32>
    %cst_88 = arith.constant dense<0.000000e+00> : vector<8xf32>
    %222 = vector.multi_reduction <add>, %221, %cst_88 [1] : vector<8x256xf32> to vector<8xf32>
    %223 = vector.shape_cast %222 : vector<8xf32> to vector<8x1xf32>
    %cst_89 = arith.constant 2.560000e+02 : f32
    %224 = vector.broadcast %cst_89 : f32 to vector<8x1xf32>
    %225 = arith.divf %223, %224 : vector<8x1xf32>
    %226 = vector.broadcast %218 : vector<8x1xf32> to vector<8x256xf32>
    %227 = arith.subf %212, %226 : vector<8x256xf32>
    %cst_90 = arith.constant 9.99999974E-6 : f32
    %228 = vector.broadcast %cst_90 : f32 to vector<8x1xf32>
    %229 = arith.addf %225, %228 : vector<8x1xf32>
    %230 = math.rsqrt %229 : vector<8x1xf32>
    %231 = vector.broadcast %230 : vector<8x1xf32> to vector<8x256xf32>
    %232 = arith.mulf %227, %231 : vector<8x256xf32>
    %233 = vector.broadcast %213 : vector<1x256xf32> to vector<8x256xf32>
    %234 = arith.mulf %232, %233 : vector<8x256xf32>
    %235 = vector.broadcast %214 : vector<1x256xf32> to vector<8x256xf32>
    %236 = arith.addf %234, %235 : vector<8x256xf32>
    %c0_91 = arith.constant 0 : index
    %c0_92 = arith.constant 0 : index
    %c0_93 = arith.constant 0 : index
    %237 = vector.load %arg14[%c0_91, %c0_92, %c0_93] : memref<1x8x256xf32, #tpu.memory_space<vmem>>, vector<1x8x256xf32>
    %238 = vector.shape_cast %237 : vector<1x8x256xf32> to vector<8x256xf32>
    %239 = vector.shape_cast %236 : vector<8x256xf32> to vector<1x8x256xf32>
    tpu.vector_store %arg14[%c0_91, %c0_92, %c0_93], %239 {strides = array<i32>} : memref<1x8x256xf32, #tpu.memory_space<vmem>>, vector<1x8x256xf32>,
    return
  }
  func.func @transform_0(%arg0: i32) -> (i32, i32, i32) {
    %c0_i32 = arith.constant 0 : i32
    %c0_i32_0 = arith.constant 0 : i32
    %c0_i32_1 = arith.constant 0 : i32
    return %arg0, %c0_i32, %c0_i32_0 : i32, i32, i32
  }
  func.func @transform_1(%arg0: i32) -> (i32, i32) {
    %c0_i32 = arith.constant 0 : i32
    %c0_i32_0 = arith.constant 0 : i32
    %c0_i32_1 = arith.constant 0 : i32
    return %c0_i32, %c0_i32_0 : i32, i32
  }
  func.func @transform_2(%arg0: i32) -> (i32, i32) {
    %c0_i32 = arith.constant 0 : i32
    %c0_i32_0 = arith.constant 0 : i32
    %c0_i32_1 = arith.constant 0 : i32
    return %c0_i32, %c0_i32_0 : i32, i32
  }
  func.func @transform_3(%arg0: i32) -> (i32, i32) {
    %c0_i32 = arith.constant 0 : i32
    %c0_i32_0 = arith.constant 0 : i32
    %c0_i32_1 = arith.constant 0 : i32
    return %c0_i32, %c0_i32_0 : i32, i32
  }
  func.func @transform_4(%arg0: i32) -> (i32, i32) {
    %c0_i32 = arith.constant 0 : i32
    %c0_i32_0 = arith.constant 0 : i32
    %c0_i32_1 = arith.constant 0 : i32
    return %c0_i32, %c0_i32_0 : i32, i32
  }
  func.func @transform_5(%arg0: i32) -> (i32, i32) {
    %c0_i32 = arith.constant 0 : i32
    %c0_i32_0 = arith.constant 0 : i32
    %c0_i32_1 = arith.constant 0 : i32
    return %c0_i32, %c0_i32_0 : i32, i32
  }
  func.func @transform_6(%arg0: i32) -> (i32, i32) {
    %c0_i32 = arith.constant 0 : i32
    %c0_i32_0 = arith.constant 0 : i32
    %c0_i32_1 = arith.constant 0 : i32
    return %c0_i32, %c0_i32_0 : i32, i32
  }
  func.func @transform_7(%arg0: i32) -> (i32, i32) {
    %c0_i32 = arith.constant 0 : i32
    %c0_i32_0 = arith.constant 0 : i32
    %c0_i32_1 = arith.constant 0 : i32
    return %c0_i32, %c0_i32_0 : i32, i32
  }
  func.func @transform_8(%arg0: i32) -> (i32, i32) {
    %c0_i32 = arith.constant 0 : i32
    %c0_i32_0 = arith.constant 0 : i32
    %c0_i32_1 = arith.constant 0 : i32
    return %c0_i32, %c0_i32_0 : i32, i32
  }
  func.func @transform_9(%arg0: i32) -> (i32, i32) {
    %c0_i32 = arith.constant 0 : i32
    %c0_i32_0 = arith.constant 0 : i32
    %c0_i32_1 = arith.constant 0 : i32
    return %c0_i32, %c0_i32_0 : i32, i32
  }
  func.func @transform_10(%arg0: i32) -> (i32, i32) {
    %c0_i32 = arith.constant 0 : i32
    %c0_i32_0 = arith.constant 0 : i32
    %c0_i32_1 = arith.constant 0 : i32
    return %c0_i32, %c0_i32_0 : i32, i32
  }
  func.func @transform_11(%arg0: i32) -> (i32, i32) {
    %c0_i32 = arith.constant 0 : i32
    %c0_i32_0 = arith.constant 0 : i32
    %c0_i32_1 = arith.constant 0 : i32
    return %c0_i32, %c0_i32_0 : i32, i32
  }
  func.func @transform_12(%arg0: i32) -> (i32, i32) {
    %c0_i32 = arith.constant 0 : i32
    %c0_i32_0 = arith.constant 0 : i32
    %c0_i32_1 = arith.constant 0 : i32
    return %c0_i32, %c0_i32_0 : i32, i32
  }
  func.func @transform_13(%arg0: i32) -> (i32, i32, i32) {
    %c0_i32 = arith.constant 0 : i32
    %c0_i32_0 = arith.constant 0 : i32
    %c0_i32_1 = arith.constant 0 : i32
    return %arg0, %c0_i32, %c0_i32_0 : i32, i32, i32
  }
}

</mosaic_0001>

<llo_original>
// kernel: transformer_layer.1
$region0: #{transformer_layer.1}
  #allocation0 [shape = 'u32[]', space=smem, size = 0x4, offset = 0x4, fixed_abs, tag = 'smem constant byte address 0x4 - core index']
  #allocation1 [shape = 'u32[144,128]{1,0:T(1,128)}', space=vmem, size = 0x12000, scoped, tag = 'internal scratch']
  #allocation2 [shape = 'f32[8,256]{1,0:T(8,128)}', space=vmem, size = 0x2000, scoped, tag = 'scratch operand']
  %s0 = inlined_call_operand.hbm [shape: f32[2,8,256], index: 0, kind: input, shape index: {}]
  %s1 = inlined_call_operand.hbm [shape: bf16[256,768], index: 1, kind: input, shape index: {}]
  %s2 = inlined_call_operand.vmem [shape: f32[1,768], index: 2, kind: input, shape index: {}]
  %s3 = inlined_call_operand.hbm [shape: bf16[256,256], index: 3, kind: input, shape index: {}]
  %s4 = inlined_call_operand.vmem [shape: f32[1,256], index: 4, kind: input, shape index: {}]
  %s5 = inlined_call_operand.vmem [shape: f32[1,256], index: 5, kind: input, shape index: {}]
  %s6 = inlined_call_operand.hbm [shape: f32[1,256], index: 6, kind: input, shape index: {}]
  %s7 = inlined_call_operand.hbm [shape: bf16[256,1024], index: 7, kind: input, shape index: {}]
  %s8 = inlined_call_operand.hbm [shape: f32[1,1024], index: 8, kind: input, shape index: {}]
  %s9 = inlined_call_operand.hbm [shape: bf16[1024,256], index: 9, kind: input, shape index: {}]
  %s10 = inlined_call_operand.hbm [shape: f32[1,256], index: 10, kind: input, shape index: {}]
  %s11 = inlined_call_operand.vmem [shape: f32[1,256], index: 11, kind: input, shape index: {}]
  %s12 = inlined_call_operand.hbm [shape: f32[1,256], index: 12, kind: input, shape index: {}]
  %s13 = inlined_call_operand.hbm [shape: f32[2,8,256], index: 13, kind: output, shape index: {}]
  %s14 = sld [smem:[#allocation0]]
  $region121: #{transformer_layer.1} parent=0
    _
  %s16 = ssub.s32 1, %s14
  %s17 = scalar_select 0, %s16, %s14
  $region1: #{transformer_layer.1} parent=0
    #allocation3 [shape = 'u8[16384]{0}', space=vmem, size = 0x4000, scoped, tag = 'input window, operand 0']
    #allocation4 [shape = 's32[2]{0}', space=sflag, size = 0x8, scoped, tag = 'scoped memory for transformer_layer.1']
    #allocation5 [shape = 's32[2]{0}', space=sflag, size = 0x8, scoped, tag = 'scoped memory for transformer_layer.1']
    #allocation6 [shape = 'u8[393216]{0}', space=vmem, size = 0x60000, scoped, tag = 'input window, operand 1, single buffered']
    #allocation7 [shape = 's32[1]{0}', space=sflag, size = 0x4, scoped, tag = 'scoped memory for transformer_layer.1']
    #allocation8 [shape = 'u8[131072]{0}', space=vmem, size = 0x20000, scoped, tag = 'input window, operand 3, single buffered']
    #allocation9 [shape = 'u8[1024]{0}', space=vmem, size = 0x400, scoped, tag = 'input window, operand 6, single buffered']
    #allocation10 [shape = 's32[1]{0}', space=sflag, size = 0x4, scoped, tag = 'scoped memory for transformer_layer.1']
    #allocation11 [shape = 'u8[524288]{0}', space=vmem, size = 0x80000, scoped, tag = 'input window, operand 7, single buffered']
    #allocation12 [shape = 'u8[4096]{0}', space=vmem, size = 0x1000, scoped, tag = 'input window, operand 8, single buffered']
    #allocation13 [shape = 's32[1]{0}', space=sflag, size = 0x4, scoped, tag = 'scoped memory for transformer_layer.1']
    #allocation14 [shape = 'u8[524288]{0}', space=vmem, size = 0x80000, scoped, tag = 'input window, operand 9, single buffered']
    #allocation15 [shape = 'u8[1024]{0}', space=vmem, size = 0x400, scoped, tag = 'input window, operand 10, single buffered']
    #allocation16 [shape = 's32[1]{0}', space=sflag, size = 0x4, scoped, tag = 'scoped memory for transformer_layer.1']
    #allocation17 [shape = 'u8[1024]{0}', space=vmem, size = 0x400, scoped, tag = 'input window, operand 12, single buffered']
    #allocation18 [shape = 'u8[16384]{0}', space=vmem, size = 0x4000, scoped, tag = 'output window, operand 0']
    %18 = vsyncpa [#allocation4], 0
    %s19 = scalar_lea.sflag [#allocation4], 1
    %20 = vsyncpa %s19, 0
    %21 = vsyncpa [#allocation7], 0
    %22 = vsyncpa [#allocation10], 0
    %23 = vsyncpa [#allocation13], 0
    %24 = vsyncpa [#allocation16], 0
    %25 = vsyncpa [#allocation5], 0
    %s26 = scalar_lea.sflag [#allocation5], 1
    %27 = vsyncpa %s26, 0
    loop: start=0, step=1, limit=4
    $region2: #{transformer_layer.1} parent=1 // loop_pre_header
      _
    $region3: #{transformer_layer.1} parent=1 // loop_header
      %s29 = sphi 0, %s33
      %p30 = scmp.ge.s32.totalorder %s29, 4
      %s39 = sphi 0, %s41
      %s42 = sphi 0, %s39
      %s43 = sphi 0, %s42
      %s59 = sphi 0, %s43
      %s63 = sphi 0, %s63
      %s65 = sphi 0, %s63
      %s66 = sphi 0, %s65
      %s80 = sphi 0, %s66
      %s84 = sphi 0, %s84
      %s86 = sphi 0, %s84
      %s87 = sphi 0, %s86
      %s101 = sphi 0, %s87
      %s105 = sphi 0, %s105
      %s107 = sphi 0, %s105
      %s108 = sphi 0, %s107
      %s122 = sphi 0, %s108
      %s126 = sphi 0, %s126
      %s128 = sphi 0, %s126
      %s129 = sphi 0, %s128
      %s143 = sphi 0, %s129
      %s147 = sphi 0, %s147
      %s149 = sphi 0, %s147
      %s150 = sphi 0, %s149
      %s164 = sphi 0, %s150
      %s168 = sphi 0, %s168
      %s170 = sphi 0, %s168
      %s171 = sphi 0, %s170
      %s185 = sphi 0, %s171
      %s189 = sphi 0, %s189
      %s191 = sphi 0, %s189
      %s192 = sphi 0, %s191
      %s206 = sphi 0, %s192
      %s210 = sphi 0, %s210
      %s212 = sphi 0, %s210
      %s213 = sphi 0, %s212
      %s227 = sphi 0, %s213
      %s231 = sphi 0, %s231
      %s233 = sphi 0, %s231
      %s234 = sphi 0, %s233
      %s248 = sphi 0, %s234
      %s252 = sphi 0, %s252
      %s254 = sphi 0, %s252
      %s255 = sphi 0, %s254
      %s269 = sphi 0, %s255
      %s273 = sphi 0, %s273
      %s275 = sphi 0, %s273
      %s276 = sphi 0, %s275
      %s290 = sphi 0, %s276
      %s294 = sphi 0, %s294
      %s296 = sphi 0, %s294
      %s297 = sphi 0, %s296
      %s311 = sphi 0, %s297
      %s317 = sphi 0, %s319
      %s320 = sphi 0, %s317
      %s321 = sphi 0, %s320
      %s337 = sphi 0, %s321
    $region4: #{transformer_layer.1} parent=1 // loop_header_branch
      %32 = sbr.rel (%p30) target = $region8
    $region5: #{transformer_layer.1} parent=1 // loop_body
      %s34 = ssub.s32 %s29, 1
      %s35 = ssub.s32 %s29, 2
      %s36 = sadd.s32 %s29, 1
      %s37 = ssub.s32 %s29, %s36
      %p38 = scmp.eq.s32.totalorder %s37, 0
      %s40 = sadd.s32 %s39, 1
      %s41 = scalar_select %p38, %s39, %s40
      %p44 = pneg %p38
      %p45 = scmp.eq.s32.totalorder %s29, 1
      %p46 = por %p44, %p45
      %p47 = scmp.ne.s32.totalorder %s39, %s42
      %p48 = scmp.eq.s32.totalorder %s29, 0
      %p49 = por %p47, %p48
      %p50 = scmp.ne.s32.totalorder %s39, %s42
      %p51 = scmp.eq.s32.totalorder %s34, 1
      %p52 = por %p50, %p51
      %p53 = scmp.ne.s32.totalorder %s42, %s43
      %p54 = scmp.eq.s32.totalorder %s34, 0
      %p55 = por %p53, %p54
      %p56 = scmp.ne.s32.totalorder %s42, %s43
      %p57 = scmp.eq.s32.totalorder %s35, 1
      %p58 = por %p56, %p57
      %p60 = scmp.ne.s32.totalorder %s43, %s59
      %p61 = scmp.eq.s32.totalorder %s35, 0
      %p62 = por %p60, %p61
      %s64 = sadd.s32 %s63, 1
      %p67 = scmp.eq.s32.totalorder %s29, 1
      %p68 = scmp.ne.s32.totalorder %s63, %s65
      %p69 = scmp.eq.s32.totalorder %s29, 0
      %p70 = por %p68, %p69
      %p71 = scmp.ne.s32.totalorder %s63, %s65
      %p72 = scmp.eq.s32.totalorder %s34, 1
      %p73 = por %p71, %p72
      %p74 = scmp.ne.s32.totalorder %s65, %s66
      %p75 = scmp.eq.s32.totalorder %s34, 0
      %p76 = por %p74, %p75
      %p77 = scmp.ne.s32.totalorder %s65, %s66
      %p78 = scmp.eq.s32.totalorder %s35, 1
      %p79 = por %p77, %p78
      %p81 = scmp.ne.s32.totalorder %s66, %s80
      %p82 = scmp.eq.s32.totalorder %s35, 0
      %p83 = por %p81, %p82
      %s85 = sadd.s32 %s84, 1
      %p88 = scmp.eq.s32.totalorder %s29, 1
      %p89 = scmp.ne.s32.totalorder %s84, %s86
      %p90 = scmp.eq.s32.totalorder %s29, 0
      %p91 = por %p89, %p90
      %p92 = scmp.ne.s32.totalorder %s84, %s86
      %p93 = scmp.eq.s32.totalorder %s34, 1
      %p94 = por %p92, %p93
      %p95 = scmp.ne.s32.totalorder %s86, %s87
      %p96 = scmp.eq.s32.totalorder %s34, 0
      %p97 = por %p95, %p96
      %p98 = scmp.ne.s32.totalorder %s86, %s87
      %p99 = scmp.eq.s32.totalorder %s35, 1
      %p100 = por %p98, %p99
      %p102 = scmp.ne.s32.totalorder %s87, %s101
      %p103 = scmp.eq.s32.totalorder %s35, 0
      %p104 = por %p102, %p103
      %s106 = sadd.s32 %s105, 1
      %p109 = scmp.eq.s32.totalorder %s29, 1
      %p110 = scmp.ne.s32.totalorder %s105, %s107
      %p111 = scmp.eq.s32.totalorder %s29, 0
      %p112 = por %p110, %p111
      %p113 = scmp.ne.s32.totalorder %s105, %s107
      %p114 = scmp.eq.s32.totalorder %s34, 1
      %p115 = por %p113, %p114
      %p116 = scmp.ne.s32.totalorder %s107, %s108
      %p117 = scmp.eq.s32.totalorder %s34, 0
      %p118 = por %p116, %p117
      %p119 = scmp.ne.s32.totalorder %s107, %s108
      %p120 = scmp.eq.s32.totalorder %s35, 1
      %p121 = por %p119, %p120
      %p123 = scmp.ne.s32.totalorder %s108, %s122
      %p124 = scmp.eq.s32.totalorder %s35, 0
      %p125 = por %p123, %p124
      %s127 = sadd.s32 %s126, 1
      %p130 = scmp.eq.s32.totalorder %s29, 1
      %p131 = scmp.ne.s32.totalorder %s126, %s128
      %p132 = scmp.eq.s32.totalorder %s29, 0
      %p133 = por %p131, %p132
      %p134 = scmp.ne.s32.totalorder %s126, %s128
      %p135 = scmp.eq.s32.totalorder %s34, 1
      %p136 = por %p134, %p135
      %p137 = scmp.ne.s32.totalorder %s128, %s129
      %p138 = scmp.eq.s32.totalorder %s34, 0
      %p139 = por %p137, %p138
      %p140 = scmp.ne.s32.totalorder %s128, %s129
      %p141 = scmp.eq.s32.totalorder %s35, 1
      %p142 = por %p140, %p141
      %p144 = scmp.ne.s32.totalorder %s129, %s143
      %p145 = scmp.eq.s32.totalorder %s35, 0
      %p146 = por %p144, %p145
      %s148 = sadd.s32 %s147, 1
      %p151 = scmp.eq.s32.totalorder %s29, 1
      %p152 = scmp.ne.s32.totalorder %s147, %s149
      %p153 = scmp.eq.s32.totalorder %s29, 0
      %p154 = por %p152, %p153
      %p155 = scmp.ne.s32.totalorder %s147, %s149
      %p156 = scmp.eq.s32.totalorder %s34, 1
      %p157 = por %p155, %p156
      %p158 = scmp.ne.s32.totalorder %s149, %s150
      %p159 = scmp.eq.s32.totalorder %s34, 0
      %p160 = por %p158, %p159
      %p161 = scmp.ne.s32.totalorder %s149, %s150
      %p162 = scmp.eq.s32.totalorder %s35, 1
      %p163 = por %p161, %p162
      %p165 = scmp.ne.s32.totalorder %s150, %s164
      %p166 = scmp.eq.s32.totalorder %s35, 0
      %p167 = por %p165, %p166
      %s169 = sadd.s32 %s168, 1
      %p172 = scmp.eq.s32.totalorder %s29, 1
      %p173 = scmp.ne.s32.totalorder %s168, %s170
      %p174 = scmp.eq.s32.totalorder %s29, 0
      %p175 = por %p173, %p174
      %p176 = scmp.ne.s32.totalorder %s168, %s170
      %p177 = scmp.eq.s32.totalorder %s34, 1
      %p178 = por %p176, %p177
      %p179 = scmp.ne.s32.totalorder %s170, %s171
      %p180 = scmp.eq.s32.totalorder %s34, 0
      %p181 = por %p179, %p180
      %p182 = scmp.ne.s32.totalorder %s170, %s171
      %p183 = scmp.eq.s32.totalorder %s35, 1
      %p184 = por %p182, %p183
      %p186 = scmp.ne.s32.totalorder %s171, %s185
      %p187 = scmp.eq.s32.totalorder %s35, 0
      %p188 = por %p186, %p187
      %s190 = sadd.s32 %s189, 1
      %p193 = scmp.eq.s32.totalorder %s29, 1
      %p194 = scmp.ne.s32.totalorder %s189, %s191
      %p195 = scmp.eq.s32.totalorder %s29, 0
      %p196 = por %p194, %p195
      %p197 = scmp.ne.s32.totalorder %s189, %s191
      %p198 = scmp.eq.s32.totalorder %s34, 1
      %p199 = por %p197, %p198
      %p200 = scmp.ne.s32.totalorder %s191, %s192
      %p201 = scmp.eq.s32.totalorder %s34, 0
      %p202 = por %p200, %p201
      %p203 = scmp.ne.s32.totalorder %s191, %s192
      %p204 = scmp.eq.s32.totalorder %s35, 1
      %p205 = por %p203, %p204
      %p207 = scmp.ne.s32.totalorder %s192, %s206
      %p208 = scmp.eq.s32.totalorder %s35, 0
      %p209 = por %p207, %p208
      %s211 = sadd.s32 %s210, 1
      %p214 = scmp.eq.s32.totalorder %s29, 1
      %p215 = scmp.ne.s32.totalorder %s210, %s212
      %p216 = scmp.eq.s32.totalorder %s29, 0
      %p217 = por %p215, %p216
      %p218 = scmp.ne.s32.totalorder %s210, %s212
      %p219 = scmp.eq.s32.totalorder %s34, 1
      %p220 = por %p218, %p219
      %p221 = scmp.ne.s32.totalorder %s212, %s213
      %p222 = scmp.eq.s32.totalorder %s34, 0
      %p223 = por %p221, %p222
      %p224 = scmp.ne.s32.totalorder %s212, %s213
      %p225 = scmp.eq.s32.totalorder %s35, 1
      %p226 = por %p224, %p225
      %p228 = scmp.ne.s32.totalorder %s213, %s227
      %p229 = scmp.eq.s32.totalorder %s35, 0
      %p230 = por %p228, %p229
      %s232 = sadd.s32 %s231, 1
      %p235 = scmp.eq.s32.totalorder %s29, 1
      %p236 = scmp.ne.s32.totalorder %s231, %s233
      %p237 = scmp.eq.s32.totalorder %s29, 0
      %p238 = por %p236, %p237
      %p239 = scmp.ne.s32.totalorder %s231, %s233
      %p240 = scmp.eq.s32.totalorder %s34, 1
      %p241 = por %p239, %p240
      %p242 = scmp.ne.s32.totalorder %s233, %s234
      %p243 = scmp.eq.s32.totalorder %s34, 0
      %p244 = por %p242, %p243
      %p245 = scmp.ne.s32.totalorder %s233, %s234
      %p246 = scmp.eq.s32.totalorder %s35, 1
      %p247 = por %p245, %p246
      %p249 = scmp.ne.s32.totalorder %s234, %s248
      %p250 = scmp.eq.s32.totalorder %s35, 0
      %p251 = por %p249, %p250
      %s253 = sadd.s32 %s252, 1
      %p256 = scmp.eq.s32.totalorder %s29, 1
      %p257 = scmp.ne.s32.totalorder %s252, %s254
      %p258 = scmp.eq.s32.totalorder %s29, 0
      %p259 = por %p257, %p258
      %p260 = scmp.ne.s32.totalorder %s252, %s254
      %p261 = scmp.eq.s32.totalorder %s34, 1
      %p262 = por %p260, %p261
      %p263 = scmp.ne.s32.totalorder %s254, %s255
      %p264 = scmp.eq.s32.totalorder %s34, 0
      %p265 = por %p263, %p264
      %p266 = scmp.ne.s32.totalorder %s254, %s255
      %p267 = scmp.eq.s32.totalorder %s35, 1
      %p268 = por %p266, %p267
      %p270 = scmp.ne.s32.totalorder %s255, %s269
      %p271 = scmp.eq.s32.totalorder %s35, 0
      %p272 = por %p270, %p271
      %s274 = sadd.s32 %s273, 1
      %p277 = scmp.eq.s32.totalorder %s29, 1
      %p278 = scmp.ne.s32.totalorder %s273, %s275
      %p279 = scmp.eq.s32.totalorder %s29, 0
      %p280 = por %p278, %p279
      %p281 = scmp.ne.s32.totalorder %s273, %s275
      %p282 = scmp.eq.s32.totalorder %s34, 1
      %p283 = por %p281, %p282
      %p284 = scmp.ne.s32.totalorder %s275, %s276
      %p285 = scmp.eq.s32.totalorder %s34, 0
      %p286 = por %p284, %p285
      %p287 = scmp.ne.s32.totalorder %s275, %s276
      %p288 = scmp.eq.s32.totalorder %s35, 1
      %p289 = por %p287, %p288
      %p291 = scmp.ne.s32.totalorder %s276, %s290
      %p292 = scmp.eq.s32.totalorder %s35, 0
      %p293 = por %p291, %p292
      %s295 = sadd.s32 %s294, 1
      %p298 = scmp.eq.s32.totalorder %s29, 1
      %p299 = scmp.ne.s32.totalorder %s294, %s296
      %p300 = scmp.eq.s32.totalorder %s29, 0
      %p301 = por %p299, %p300
      %p302 = scmp.ne.s32.totalorder %s294, %s296
      %p303 = scmp.eq.s32.totalorder %s34, 1
      %p304 = por %p302, %p303
      %p305 = scmp.ne.s32.totalorder %s296, %s297
      %p306 = scmp.eq.s32.totalorder %s34, 0
      %p307 = por %p305, %p306
      %p308 = scmp.ne.s32.totalorder %s296, %s297
      %p309 = scmp.eq.s32.totalorder %s35, 1
      %p310 = por %p308, %p309
      %p312 = scmp.ne.s32.totalorder %s297, %s311
      %p313 = scmp.eq.s32.totalorder %s35, 0
      %p314 = por %p312, %p313
      %s315 = ssub.s32 %s29, %s36
      %p316 = scmp.eq.s32.totalorder %s315, 0
      %s318 = sadd.s32 %s317, 1
      %s319 = scalar_select %p316, %s317, %s318
      %p322 = pneg %p316
      %p323 = scmp.eq.s32.totalorder %s29, 1
      %p324 = por %p322, %p323
      %p325 = scmp.ne.s32.totalorder %s317, %s320
      %p326 = scmp.eq.s32.totalorder %s29, 0
      %p327 = por %p325, %p326
      %p328 = scmp.ne.s32.totalorder %s317, %s320
      %p329 = scmp.eq.s32.totalorder %s34, 1
      %p330 = por %p328, %p329
      %p331 = scmp.ne.s32.totalorder %s320, %s321
      %p332 = scmp.eq.s32.totalorder %s34, 0
      %p333 = por %p331, %p332
      %p334 = scmp.ne.s32.totalorder %s320, %s321
      %p335 = scmp.eq.s32.totalorder %s35, 1
      %p336 = por %p334, %p335
      %p338 = scmp.ne.s32.totalorder %s321, %s337
      %p339 = scmp.eq.s32.totalorder %s35, 0
      %p340 = por %p338, %p339
      %p341 = scmp.le.s32.totalorder 1, %s29
      %p342 = scmp.lt.s32.totalorder %s29, 3
      %p343 = pnand %p341, %p342
      %p344 = pneg %p343
      // Predicated region
      $region9: #{transformer_layer.1} parent=5 // pred_check
        _
      $region10: #{transformer_layer.1} parent=5 // pred_check_branch
        %346 = sbr.rel (%p343) target = $region12
      $region11: #{transformer_layer.1} parent=5 // pred_region
        %s347 = ssub.s32 %s29, 1
        // Predicated region
        $region13: #{transformer_layer.1} parent=11 // pred_check
          %p348 = pneg %p76
        $region14: #{transformer_layer.1} parent=11 // pred_check_branch
          %350 = sbr.rel (%p348) target = $region16
        $region15: #{transformer_layer.1} parent=11 // pred_region
          %s352 = ssub.s32 12288, 12288
          %353 = vsyncadd [#allocation7], %s352
          %s354 = sshll.u32 [#allocation6], 4
          %s355 = int_to_ptr.vmem [resolvable:$true] %s354
          %360 = dma.hbm_to_vmem [thread:$0]  %s1, 12288, %s355, [#allocation7], 384, 384, 24
        $region16: #{transformer_layer.1} parent=11 // pred_fallthru
          _
        // Predicated region
        $region17: #{transformer_layer.1} parent=11 // pred_check
          %p361 = pneg %p97
        $region18: #{transformer_layer.1} parent=11 // pred_check_branch
          %363 = sbr.rel (%p361) target = $region20
        $region19: #{transformer_layer.1} parent=11 // pred_region
          _
        $region20: #{transformer_layer.1} parent=11 // pred_fallthru
          _
        // Predicated region
        $region21: #{transformer_layer.1} parent=11 // pred_check
          %p364 = pneg %p118
        $region22: #{transformer_layer.1} parent=11 // pred_check_branch
          %366 = sbr.rel (%p364) target = $region24
        $region23: #{transformer_layer.1} parent=11 // pred_region
          %s368 = ssub.s32 4096, 4096
          %369 = vsyncadd [#allocation7], %s368
          %s370 = sshll.u32 [#allocation8], 4
          %s371 = int_to_ptr.vmem [resolvable:$true] %s370
          %376 = dma.hbm_to_vmem [thread:$0]  %s3, 4096, %s371, [#allocation7], 128, 128, 8
        $region24: #{transformer_layer.1} parent=11 // pred_fallthru
          _
        // Predicated region
        $region25: #{transformer_layer.1} parent=11 // pred_check
          %p377 = pneg %p139
        $region26: #{transformer_layer.1} parent=11 // pred_check_branch
          %379 = sbr.rel (%p377) target = $region28
        $region27: #{transformer_layer.1} parent=11 // pred_region
          _
        $region28: #{transformer_layer.1} parent=11 // pred_fallthru
          _
        // Predicated region
        $region29: #{transformer_layer.1} parent=11 // pred_check
          %p380 = pneg %p160
        $region30: #{transformer_layer.1} parent=11 // pred_check_branch
          %382 = sbr.rel (%p380) target = $region32
        $region31: #{transformer_layer.1} parent=11 // pred_region
          _
        $region32: #{transformer_layer.1} parent=11 // pred_fallthru
          _
        // Predicated region
        $region33: #{transformer_layer.1} parent=11 // pred_check
          %p383 = pneg %p181
        $region34: #{transformer_layer.1} parent=11 // pred_check_branch
          %385 = sbr.rel (%p383) target = $region36
        $region35: #{transformer_layer.1} parent=11 // pred_region
          %s387 = ssub.s32 32, 32
          %388 = vsyncadd [#allocation10], %s387
          %s390 = sshll.u32 [#allocation9], 4
          %s391 = int_to_ptr.vmem [resolvable:$true] %s390
          %393 = dma.hbm_to_vmem [thread:$0]  %s6, 32, %s391, [#allocation10]
        $region36: #{transformer_layer.1} parent=11 // pred_fallthru
          _
        // Predicated region
        $region37: #{transformer_layer.1} parent=11 // pred_check
          %p394 = pneg %p202
        $region38: #{transformer_layer.1} parent=11 // pred_check_branch
          %396 = sbr.rel (%p394) target = $region40
        $region39: #{transformer_layer.1} parent=11 // pred_region
          %s398 = ssub.s32 16384, 16384
          %399 = vsyncadd [#allocation10], %s398
          %s400 = sshll.u32 [#allocation11], 4
          %s401 = int_to_ptr.vmem [resolvable:$true] %s400
          %406 = dma.hbm_to_vmem [thread:$0]  %s7, 16384, %s401, [#allocation10], 512, 512, 32
        $region40: #{transformer_layer.1} parent=11 // pred_fallthru
          _
        // Predicated region
        $region41: #{transformer_layer.1} parent=11 // pred_check
          %p407 = pneg %p223
        $region42: #{transformer_layer.1} parent=11 // pred_check_branch
          %409 = sbr.rel (%p407) target = $region44
        $region43: #{transformer_layer.1} parent=11 // pred_region
          %s411 = ssub.s32 128, 128
          %412 = vsyncadd [#allocation13], %s411
          %s414 = sshll.u32 [#allocation12], 4
          %s415 = int_to_ptr.vmem [resolvable:$true] %s414
          %417 = dma.hbm_to_vmem [thread:$0]  %s8, 128, %s415, [#allocation13]
        $region44: #{transformer_layer.1} parent=11 // pred_fallthru
          _
        // Predicated region
        $region45: #{transformer_layer.1} parent=11 // pred_check
          %p418 = pneg %p244
        $region46: #{transformer_layer.1} parent=11 // pred_check_branch
          %420 = sbr.rel (%p418) target = $region48
        $region47: #{transformer_layer.1} parent=11 // pred_region
          %s422 = ssub.s32 16384, 16384
          %423 = vsyncadd [#allocation13], %s422
          %s424 = sshll.u32 [#allocation14], 4
          %s425 = int_to_ptr.vmem [resolvable:$true] %s424
          %430 = dma.hbm_to_vmem [thread:$0]  %s9, 16384, %s425, [#allocation13], 128, 128, 8
        $region48: #{transformer_layer.1} parent=11 // pred_fallthru
          _
        // Predicated region
        $region49: #{transformer_layer.1} parent=11 // pred_check
          %p431 = pneg %p265
        $region50: #{transformer_layer.1} parent=11 // pred_check_branch
          %433 = sbr.rel (%p431) target = $region52
        $region51: #{transformer_layer.1} parent=11 // pred_region
          %s435 = ssub.s32 32, 32
          %436 = vsyncadd [#allocation16], %s435
          %s438 = sshll.u32 [#allocation15], 4
          %s439 = int_to_ptr.vmem [resolvable:$true] %s438
          %441 = dma.hbm_to_vmem [thread:$0]  %s10, 32, %s439, [#allocation16]
        $region52: #{transformer_layer.1} parent=11 // pred_fallthru
          _
        // Predicated region
        $region53: #{transformer_layer.1} parent=11 // pred_check
          %p442 = pneg %p286
        $region54: #{transformer_layer.1} parent=11 // pred_check_branch
          %444 = sbr.rel (%p442) target = $region56
        $region55: #{transformer_layer.1} parent=11 // pred_region
          _
        $region56: #{transformer_layer.1} parent=11 // pred_fallthru
          _
        // Predicated region
        $region57: #{transformer_layer.1} parent=11 // pred_check
          %p445 = pneg %p307
        $region58: #{transformer_layer.1} parent=11 // pred_check_branch
          %447 = sbr.rel (%p445) target = $region60
        $region59: #{transformer_layer.1} parent=11 // pred_region
          %s449 = ssub.s32 32, 32
          %450 = vsyncadd [#allocation16], %s449
          %s452 = sshll.u32 [#allocation17], 4
          %s453 = int_to_ptr.vmem [resolvable:$true] %s452
          %455 = dma.hbm_to_vmem [thread:$0]  %s12, 32, %s453, [#allocation16]
        $region60: #{transformer_layer.1} parent=11 // pred_fallthru
          _
      $region12: #{transformer_layer.1} parent=5 // pred_fallthru
        _
      %p456 = scmp.lt.s32.totalorder %s29, 2
      // Predicated region
      $region61: #{transformer_layer.1} parent=5 // pred_check
        %p457 = pneg %p456
      $region62: #{transformer_layer.1} parent=5 // pred_check_branch
        %459 = sbr.rel (%p457) target = $region64
      $region63: #{transformer_layer.1} parent=5 // pred_region
        // Predicated region
        $region65: #{transformer_layer.1} parent=63 // pred_check
          %p460 = pneg %p49
        $region66: #{transformer_layer.1} parent=63 // pred_check_branch
          %462 = sbr.rel (%p460) target = $region68
        $region67: #{transformer_layer.1} parent=63 // pred_region
          %s463 = sand.u32 %s39, 1
          %s464 = scalar_lea.sflag [#allocation4], %s463
          %s465 = sand.u32 %s39, 1
          %s466 = smul.addr %s465, 16
          %s467 = scalar_lea.vmem [#allocation3], %s466
          %s469 = ssub.s32 256, 256
          %470 = vsyncadd %s464, %s469
          %s471 = smul.addr %s29, 2
          %s472 = smul.addr %s471, 128
          %s473 = scalar_lea.hbm %s0, %s472
          %s475 = sshll.u32 %s467, 4
          %s476 = int_to_ptr.vmem [resolvable:$true] %s475
          %478 = dma.hbm_to_vmem [thread:$0]  %s473, 256, %s476, %s464
        $region68: #{transformer_layer.1} parent=63 // pred_fallthru
          _
      $region64: #{transformer_layer.1} parent=5 // pred_fallthru
        _
      %p479 = scmp.le.s32.totalorder 1, %s29
      %p480 = scmp.lt.s32.totalorder %s29, 3
      %p481 = pnand %p479, %p480
      %p482 = pneg %p481
      // Predicated region
      $region69: #{transformer_layer.1} parent=5 // pred_check
        _
      $region70: #{transformer_layer.1} parent=5 // pred_check_branch
        %484 = sbr.rel (%p481) target = $region72
      $region71: #{transformer_layer.1} parent=5 // pred_region
        %s485 = ssub.s32 %s29, 1
        %s486 = sand.u32 %s42, 1
        %s487 = scalar_lea.sflag [#allocation4], %s486
        %s488 = sand.u32 %s42, 1
        %s489 = smul.addr %s488, 16
        %s490 = scalar_lea.vmem [#allocation3], %s489
        // Predicated region
        $region73: #{transformer_layer.1} parent=71 // pred_check
          %p491 = pneg %p55
        $region74: #{transformer_layer.1} parent=71 // pred_check_branch
          %493 = sbr.rel (%p491) target = $region76
        $region75: #{transformer_layer.1} parent=71 // pred_region
          %494 = dma.done %s487, 256
        $region76: #{transformer_layer.1} parent=71 // pred_fallthru
          _
        // Predicated region
        $region77: #{transformer_layer.1} parent=71 // pred_check
          %p495 = pneg %p76
        $region78: #{transformer_layer.1} parent=71 // pred_check_branch
          %497 = sbr.rel (%p495) target = $region80
        $region79: #{transformer_layer.1} parent=71 // pred_region
          %498 = dma.done [#allocation7], 12288
        $region80: #{transformer_layer.1} parent=71 // pred_fallthru
          _
        // Predicated region
        $region81: #{transformer_layer.1} parent=71 // pred_check
          %p499 = pneg %p118
        $region82: #{transformer_layer.1} parent=71 // pred_check_branch
          %501 = sbr.rel (%p499) target = $region84
        $region83: #{transformer_layer.1} parent=71 // pred_region
          %502 = dma.done [#allocation7], 4096
        $region84: #{transformer_layer.1} parent=71 // pred_fallthru
          _
        // Predicated region
        $region85: #{transformer_layer.1} parent=71 // pred_check
          %p503 = pneg %p181
        $region86: #{transformer_layer.1} parent=71 // pred_check_branch
          %505 = sbr.rel (%p503) target = $region88
        $region87: #{transformer_layer.1} parent=71 // pred_region
          %506 = dma.done [#allocation10], 32
        $region88: #{transformer_layer.1} parent=71 // pred_fallthru
          _
        // Predicated region
        $region89: #{transformer_layer.1} parent=71 // pred_check
          %p507 = pneg %p202
        $region90: #{transformer_layer.1} parent=71 // pred_check_branch
          %509 = sbr.rel (%p507) target = $region92
        $region91: #{transformer_layer.1} parent=71 // pred_region
          %510 = dma.done [#allocation10], 16384
        $region92: #{transformer_layer.1} parent=71 // pred_fallthru
          _
        // Predicated region
        $region93: #{transformer_layer.1} parent=71 // pred_check
          %p511 = pneg %p223
        $region94: #{transformer_layer.1} parent=71 // pred_check_branch
          %513 = sbr.rel (%p511) target = $region96
        $region95: #{transformer_layer.1} parent=71 // pred_region
          %514 = dma.done [#allocation13], 128
        $region96: #{transformer_layer.1} parent=71 // pred_fallthru
          _
        // Predicated region
        $region97: #{transformer_layer.1} parent=71 // pred_check
          %p515 = pneg %p244
        $region98: #{transformer_layer.1} parent=71 // pred_check_branch
          %517 = sbr.rel (%p515) target = $region100
        $region99: #{transformer_layer.1} parent=71 // pred_region
          %518 = dma.done [#allocation13], 16384
        $region100: #{transformer_layer.1} parent=71 // pred_fallthru
          _
        // Predicated region
        $region101: #{transformer_layer.1} parent=71 // pred_check
          %p519 = pneg %p265
        $region102: #{transformer_layer.1} parent=71 // pred_check_branch
          %521 = sbr.rel (%p519) target = $region104
        $region103: #{transformer_layer.1} parent=71 // pred_region
          %522 = dma.done [#allocation16], 32
        $region104: #{transformer_layer.1} parent=71 // pred_fallthru
          _
        // Predicated region
        $region105: #{transformer_layer.1} parent=71 // pred_check
          %p523 = pneg %p307
        $region106: #{transformer_layer.1} parent=71 // pred_check_branch
          %525 = sbr.rel (%p523) target = $region108
        $region107: #{transformer_layer.1} parent=71 // pred_region
          %526 = dma.done [#allocation16], 32
        $region108: #{transformer_layer.1} parent=71 // pred_fallthru
          _
        %s527 = sand.u32 %s42, 1
        %s528 = scalar_lea.sflag [#allocation4], %s527
        %s529 = sand.u32 %s42, 1
        %s530 = smul.addr %s529, 16
        %s531 = scalar_lea.vmem [#allocation3], %s530
        %p532 = pneg %p55
        %p533 = pneg %p52
        %p534 = pneg %p76
        %p535 = pneg %p73
        %p536 = pneg %p97
        %p537 = pneg %p94
        %p538 = pneg %p118
        %p539 = pneg %p115
        %p540 = pneg %p139
        %p541 = pneg %p136
        %p542 = pneg %p160
        %p543 = pneg %p157
        %p544 = pneg %p181
        %p545 = pneg %p178
        %p546 = pneg %p202
        %p547 = pneg %p199
        %p548 = pneg %p223
        %p549 = pneg %p220
        %p550 = pneg %p244
        %p551 = pneg %p241
        %p552 = pneg %p265
        %p553 = pneg %p262
        %p554 = pneg %p286
        %p555 = pneg %p283
        %p556 = pneg %p307
        %p557 = pneg %p304
        %p558 = pneg %p333
        %p559 = pneg %p330
        %s560 = sand.u32 %s320, 1
        %s561 = scalar_lea.sflag [#allocation5], %s560
        %s562 = sand.u32 %s320, 1
        %s563 = smul.addr %s562, 16
        %s564 = scalar_lea.vmem [#allocation18], %s563
        %v566 = vld [vmem:[%s490] sm:$0xff]
        %v567 = vld [vmem:[%s490 + $0x8] sm:$0xff]
        %v568 = vpack.c.bf16 %v566, %v566
        %v569 = vpack.c.bf16 %v567, %v567
        %v570 = vld [vmem:[#allocation6] sm:$0xff]
        %v571 = vld [vmem:[#allocation6 + $0x8] sm:$0xff]
        %v572 = vld [vmem:[#allocation6 + $0x10] sm:$0xff]
        %v573 = vld [vmem:[#allocation6 + $0x18] sm:$0xff]
        %v574 = vld [vmem:[#allocation6 + $0x20] sm:$0xff]
        %v575 = vld [vmem:[#allocation6 + $0x28] sm:$0xff]
        %v576 = vld [vmem:[#allocation6 + $0x30] sm:$0xff]
        %v577 = vld [vmem:[#allocation6 + $0x38] sm:$0xff]
        %v578 = vld [vmem:[#allocation6 + $0x40] sm:$0xff]
        %v579 = vld [vmem:[#allocation6 + $0x48] sm:$0xff]
        %v580 = vld [vmem:[#allocation6 + $0x50] sm:$0xff]
        %v581 = vld [vmem:[#allocation6 + $0x58] sm:$0xff]
        %v582 = vld [vmem:[#allocation6 + $0x60] sm:$0xff]
        %v583 = vld [vmem:[#allocation6 + $0x68] sm:$0xff]
        %v584 = vld [vmem:[#allocation6 + $0x70] sm:$0xff]
        %v585 = vld [vmem:[#allocation6 + $0x78] sm:$0xff]
        %v586 = vld [vmem:[#allocation6 + $0x80] sm:$0xff]
        %v587 = vld [vmem:[#allocation6 + $0x88] sm:$0xff]
        %v588 = vld [vmem:[#allocation6 + $0x90] sm:$0xff]
        %v589 = vld [vmem:[#allocation6 + $0x98] sm:$0xff]
        %v590 = vld [vmem:[#allocation6 + $0xa0] sm:$0xff]
        %v591 = vld [vmem:[#allocation6 + $0xa8] sm:$0xff]
        %v592 = vld [vmem:[#allocation6 + $0xb0] sm:$0xff]
        %v593 = vld [vmem:[#allocation6 + $0xb8] sm:$0xff]
        %v594 = vld [vmem:[#allocation6 + $0xc0] sm:$0xff]
        %v595 = vld [vmem:[#allocation6 + $0xc8] sm:$0xff]
        %v596 = vld [vmem:[#allocation6 + $0xd0] sm:$0xff]
        %v597 = vld [vmem:[#allocation6 + $0xd8] sm:$0xff]
        %v598 = vld [vmem:[#allocation6 + $0xe0] sm:$0xff]
        %v599 = vld [vmem:[#allocation6 + $0xe8] sm:$0xff]
        %v600 = vld [vmem:[#allocation6 + $0xf0] sm:$0xff]
        %v601 = vld [vmem:[#allocation6 + $0xf8] sm:$0xff]
        %v602 = vld [vmem:[#allocation6 + $0x100] sm:$0xff]
        %v603 = vld [vmem:[#allocation6 + $0x108] sm:$0xff]
        %v604 = vld [vmem:[#allocation6 + $0x110] sm:$0xff]
        %v605 = vld [vmem:[#allocation6 + $0x118] sm:$0xff]
        %v606 = vld [vmem:[#allocation6 + $0x120] sm:$0xff]
        %v607 = vld [vmem:[#allocation6 + $0x128] sm:$0xff]
        %v608 = vld [vmem:[#allocation6 + $0x130] sm:$0xff]
        %v609 = vld [vmem:[#allocation6 + $0x138] sm:$0xff]
        %v610 = vld [vmem:[#allocation6 + $0x140] sm:$0xff]
        %v611 = vld [vmem:[#allocation6 + $0x148] sm:$0xff]
        %v612 = vld [vmem:[#allocation6 + $0x150] sm:$0xff]
        %v613 = vld [vmem:[#allocation6 + $0x158] sm:$0xff]
        %v614 = vld [vmem:[#allocation6 + $0x160] sm:$0xff]
        %v615 = vld [vmem:[#allocation6 + $0x168] sm:$0xff]
        %v616 = vld [vmem:[#allocation6 + $0x170] sm:$0xff]
        %v617 = vld [vmem:[#allocation6 + $0x178] sm:$0xff]
        %v618 = vld [vmem:[#allocation6 + $0x180] sm:$0xff]
        %v619 = vld [vmem:[#allocation6 + $0x188] sm:$0xff]
        %v620 = vld [vmem:[#allocation6 + $0x190] sm:$0xff]
        %v621 = vld [vmem:[#allocation6 + $0x198] sm:$0xff]
        %v622 = vld [vmem:[#allocation6 + $0x1a0] sm:$0xff]
        %v623 = vld [vmem:[#allocation6 + $0x1a8] sm:$0xff]
        %v624 = vld [vmem:[#allocation6 + $0x1b0] sm:$0xff]
        %v625 = vld [vmem:[#allocation6 + $0x1b8] sm:$0xff]
        %v626 = vld [vmem:[#allocation6 + $0x1c0] sm:$0xff]
        %v627 = vld [vmem:[#allocation6 + $0x1c8] sm:$0xff]
        %v628 = vld [vmem:[#allocation6 + $0x1d0] sm:$0xff]
        %v629 = vld [vmem:[#allocation6 + $0x1d8] sm:$0xff]
        %v630 = vld [vmem:[#allocation6 + $0x1e0] sm:$0xff]
        %v631 = vld [vmem:[#allocation6 + $0x1e8] sm:$0xff]
        %v632 = vld [vmem:[#allocation6 + $0x1f0] sm:$0xff]
        %v633 = vld [vmem:[#allocation6 + $0x1f8] sm:$0xff]
        %v634 = vld [vmem:[#allocation6 + $0x200] sm:$0xff]
        %v635 = vld [vmem:[#allocation6 + $0x208] sm:$0xff]
        %v636 = vld [vmem:[#allocation6 + $0x210] sm:$0xff]
        %v637 = vld [vmem:[#allocation6 + $0x218] sm:$0xff]
        %v638 = vld [vmem:[#allocation6 + $0x220] sm:$0xff]
        %v639 = vld [vmem:[#allocation6 + $0x228] sm:$0xff]
        %v640 = vld [vmem:[#allocation6 + $0x230] sm:$0xff]
        %v641 = vld [vmem:[#allocation6 + $0x238] sm:$0xff]
        %v642 = vld [vmem:[#allocation6 + $0x240] sm:$0xff]
        %v643 = vld [vmem:[#allocation6 + $0x248] sm:$0xff]
        %v644 = vld [vmem:[#allocation6 + $0x250] sm:$0xff]
        %v645 = vld [vmem:[#allocation6 + $0x258] sm:$0xff]
        %v646 = vld [vmem:[#allocation6 + $0x260] sm:$0xff]
        %v647 = vld [vmem:[#allocation6 + $0x268] sm:$0xff]
        %v648 = vld [vmem:[#allocation6 + $0x270] sm:$0xff]
        %v649 = vld [vmem:[#allocation6 + $0x278] sm:$0xff]
        %v650 = vld [vmem:[#allocation6 + $0x280] sm:$0xff]
        %v651 = vld [vmem:[#allocation6 + $0x288] sm:$0xff]
        %v652 = vld [vmem:[#allocation6 + $0x290] sm:$0xff]
        %v653 = vld [vmem:[#allocation6 + $0x298] sm:$0xff]
        %v654 = vld [vmem:[#allocation6 + $0x2a0] sm:$0xff]
        %v655 = vld [vmem:[#allocation6 + $0x2a8] sm:$0xff]
        %v656 = vld [vmem:[#allocation6 + $0x2b0] sm:$0xff]
        %v657 = vld [vmem:[#allocation6 + $0x2b8] sm:$0xff]
        %v658 = vld [vmem:[#allocation6 + $0x2c0] sm:$0xff]
        %v659 = vld [vmem:[#allocation6 + $0x2c8] sm:$0xff]
        %v660 = vld [vmem:[#allocation6 + $0x2d0] sm:$0xff]
        %v661 = vld [vmem:[#allocation6 + $0x2d8] sm:$0xff]
        %v662 = vld [vmem:[#allocation6 + $0x2e0] sm:$0xff]
        %v663 = vld [vmem:[#allocation6 + $0x2e8] sm:$0xff]
        %v664 = vld [vmem:[#allocation6 + $0x2f0] sm:$0xff]
        %v665 = vld [vmem:[#allocation6 + $0x2f8] sm:$0xff]
        %v666 = vld [vmem:[%s2] sm:$0x3f]
        %v668 = vlaneseq
        %v669 = vshrl.u32 %v668, 7
        %v670 = vsub.s32 0, %v669
        %v671 = vrot.slane %v666, %v670
        %v672 = vlaneseq
        %v673 = vshrl.u32 %v672, 7
        %v674 = vsub.s32 1, %v673
        %v675 = vrot.slane %v666, %v674
        %v676 = vlaneseq
        %v677 = vshrl.u32 %v676, 7
        %v678 = vsub.s32 2, %v677
        %v679 = vrot.slane %v666, %v678
        %v680 = vlaneseq
        %v681 = vshrl.u32 %v680, 7
        %v682 = vsub.s32 3, %v681
        %v683 = vrot.slane %v666, %v682
        %v684 = vlaneseq
        %v685 = vshrl.u32 %v684, 7
        %v686 = vsub.s32 4, %v685
        %v687 = vrot.slane %v666, %v686
        %v688 = vlaneseq
        %v689 = vshrl.u32 %v688, 7
        %v690 = vsub.s32 5, %v689
        %v691 = vrot.slane %v666, %v690
        %v794 = vunpack.c.l.b16 %v570
        %v795 = vunpack.c.h.b16 %v570
        %v796 = vunpack.c.l.b16 %v571
        %v797 = vunpack.c.h.b16 %v571
        %v798 = vunpack.c.l.b16 %v572
        %v799 = vunpack.c.h.b16 %v572
        %v800 = vunpack.c.l.b16 %v573
        %v801 = vunpack.c.h.b16 %v573
        %v802 = vunpack.c.l.b16 %v574
        %v803 = vunpack.c.h.b16 %v574
        %v804 = vunpack.c.l.b16 %v575
        %v805 = vunpack.c.h.b16 %v575
        %v806 = vunpack.c.l.b16 %v576
        %v807 = vunpack.c.h.b16 %v576
        %v808 = vunpack.c.l.b16 %v577
        %v809 = vunpack.c.h.b16 %v577
        %v810 = vunpack.c.l.b16 %v578
        %v811 = vunpack.c.h.b16 %v578
        %v812 = vunpack.c.l.b16 %v579
        %v813 = vunpack.c.h.b16 %v579
        %v814 = vunpack.c.l.b16 %v580
        %v815 = vunpack.c.h.b16 %v580
        %v816 = vunpack.c.l.b16 %v581
        %v817 = vunpack.c.h.b16 %v581
        %v818 = vunpack.c.l.b16 %v582
        %v819 = vunpack.c.h.b16 %v582
        %v820 = vunpack.c.l.b16 %v583
        %v821 = vunpack.c.h.b16 %v583
        %v822 = vunpack.c.l.b16 %v584
        %v823 = vunpack.c.h.b16 %v584
        %v824 = vunpack.c.l.b16 %v585
        %v825 = vunpack.c.h.b16 %v585
        %v826 = vunpack.c.l.b16 %v586
        %v827 = vunpack.c.h.b16 %v586
        %v828 = vunpack.c.l.b16 %v587
        %v829 = vunpack.c.h.b16 %v587
        %v830 = vunpack.c.l.b16 %v588
        %v831 = vunpack.c.h.b16 %v588
        %v832 = vunpack.c.l.b16 %v589
        %v833 = vunpack.c.h.b16 %v589
        %v834 = vunpack.c.l.b16 %v590
        %v835 = vunpack.c.h.b16 %v590
        %v836 = vunpack.c.l.b16 %v591
        %v837 = vunpack.c.h.b16 %v591
        %v838 = vunpack.c.l.b16 %v592
        %v839 = vunpack.c.h.b16 %v592
        %v840 = vunpack.c.l.b16 %v593
        %v841 = vunpack.c.h.b16 %v593
        %v842 = vunpack.c.l.b16 %v594
        %v843 = vunpack.c.h.b16 %v594
        %v844 = vunpack.c.l.b16 %v595
        %v845 = vunpack.c.h.b16 %v595
        %v846 = vunpack.c.l.b16 %v596
        %v847 = vunpack.c.h.b16 %v596
        %v848 = vunpack.c.l.b16 %v597
        %v849 = vunpack.c.h.b16 %v597
        %v850 = vunpack.c.l.b16 %v598
        %v851 = vunpack.c.h.b16 %v598
        %v852 = vunpack.c.l.b16 %v599
        %v853 = vunpack.c.h.b16 %v599
        %v854 = vunpack.c.l.b16 %v600
        %v855 = vunpack.c.h.b16 %v600
        %v856 = vunpack.c.l.b16 %v601
        %v857 = vunpack.c.h.b16 %v601
        %v858 = vunpack.c.l.b16 %v602
        %v859 = vunpack.c.h.b16 %v602
        %v860 = vunpack.c.l.b16 %v603
        %v861 = vunpack.c.h.b16 %v603
        %v862 = vunpack.c.l.b16 %v604
        %v863 = vunpack.c.h.b16 %v604
        %v864 = vunpack.c.l.b16 %v605
        %v865 = vunpack.c.h.b16 %v605
        %v866 = vunpack.c.l.b16 %v606
        %v867 = vunpack.c.h.b16 %v606
        %v868 = vunpack.c.l.b16 %v607
        %v869 = vunpack.c.h.b16 %v607
        %v870 = vunpack.c.l.b16 %v608
        %v871 = vunpack.c.h.b16 %v608
        %v872 = vunpack.c.l.b16 %v609
        %v873 = vunpack.c.h.b16 %v609
        %v874 = vunpack.c.l.b16 %v610
        %v875 = vunpack.c.h.b16 %v610
        %v876 = vunpack.c.l.b16 %v611
        %v877 = vunpack.c.h.b16 %v611
        %v878 = vunpack.c.l.b16 %v612
        %v879 = vunpack.c.h.b16 %v612
        %v880 = vunpack.c.l.b16 %v613
        %v881 = vunpack.c.h.b16 %v613
        %v882 = vunpack.c.l.b16 %v614
        %v883 = vunpack.c.h.b16 %v614
        %v884 = vunpack.c.l.b16 %v615
        %v885 = vunpack.c.h.b16 %v615
        %v886 = vunpack.c.l.b16 %v616
        %v887 = vunpack.c.h.b16 %v616
        %v888 = vunpack.c.l.b16 %v617
        %v889 = vunpack.c.h.b16 %v617
        %v890 = vunpack.c.l.b16 %v618
        %v891 = vunpack.c.h.b16 %v618
        %v892 = vunpack.c.l.b16 %v619
        %v893 = vunpack.c.h.b16 %v619
        %v894 = vunpack.c.l.b16 %v620
        %v895 = vunpack.c.h.b16 %v620
        %v896 = vunpack.c.l.b16 %v621
        %v897 = vunpack.c.h.b16 %v621
        %v898 = vunpack.c.l.b16 %v622
        %v899 = vunpack.c.h.b16 %v622
        %v900 = vunpack.c.l.b16 %v623
        %v901 = vunpack.c.h.b16 %v623
        %v902 = vunpack.c.l.b16 %v624
        %v903 = vunpack.c.h.b16 %v624
        %v904 = vunpack.c.l.b16 %v625
        %v905 = vunpack.c.h.b16 %v625
        %v906 = vunpack.c.l.b16 %v626
        %v907 = vunpack.c.h.b16 %v626
        %v908 = vunpack.c.l.b16 %v627
        %v909 = vunpack.c.h.b16 %v627
        %v910 = vunpack.c.l.b16 %v628
        %v911 = vunpack.c.h.b16 %v628
        %v912 = vunpack.c.l.b16 %v629
        %v913 = vunpack.c.h.b16 %v629
        %v914 = vunpack.c.l.b16 %v630
        %v915 = vunpack.c.h.b16 %v630
        %v916 = vunpack.c.l.b16 %v631
        %v917 = vunpack.c.h.b16 %v631
        %v918 = vunpack.c.l.b16 %v632
        %v919 = vunpack.c.h.b16 %v632
        %v920 = vunpack.c.l.b16 %v633
        %v921 = vunpack.c.h.b16 %v633
        %v922 = vunpack.c.l.b16 %v634
        %v923 = vunpack.c.h.b16 %v634
        %v924 = vunpack.c.l.b16 %v635
        %v925 = vunpack.c.h.b16 %v635
        %v926 = vunpack.c.l.b16 %v636
        %v927 = vunpack.c.h.b16 %v636
        %v928 = vunpack.c.l.b16 %v637
        %v929 = vunpack.c.h.b16 %v637
        %v930 = vunpack.c.l.b16 %v638
        %v931 = vunpack.c.h.b16 %v638
        %v932 = vunpack.c.l.b16 %v639
        %v933 = vunpack.c.h.b16 %v639
        %v934 = vunpack.c.l.b16 %v640
        %v935 = vunpack.c.h.b16 %v640
        %v936 = vunpack.c.l.b16 %v641
        %v937 = vunpack.c.h.b16 %v641
        %v938 = vunpack.c.l.b16 %v642
        %v939 = vunpack.c.h.b16 %v642
        %v940 = vunpack.c.l.b16 %v643
        %v941 = vunpack.c.h.b16 %v643
        %v942 = vunpack.c.l.b16 %v644
        %v943 = vunpack.c.h.b16 %v644
        %v944 = vunpack.c.l.b16 %v645
        %v945 = vunpack.c.h.b16 %v645
        %v946 = vunpack.c.l.b16 %v646
        %v947 = vunpack.c.h.b16 %v646
        %v948 = vunpack.c.l.b16 %v647
        %v949 = vunpack.c.h.b16 %v647
        %v950 = vunpack.c.l.b16 %v648
        %v951 = vunpack.c.h.b16 %v648
        %v952 = vunpack.c.l.b16 %v649
        %v953 = vunpack.c.h.b16 %v649
        %v954 = vunpack.c.l.b16 %v650
        %v955 = vunpack.c.h.b16 %v650
        %v956 = vunpack.c.l.b16 %v651
        %v957 = vunpack.c.h.b16 %v651
        %v958 = vunpack.c.l.b16 %v652
        %v959 = vunpack.c.h.b16 %v652
        %v960 = vunpack.c.l.b16 %v653
        %v961 = vunpack.c.h.b16 %v653
        %v962 = vunpack.c.l.b16 %v654
        %v963 = vunpack.c.h.b16 %v654
        %v964 = vunpack.c.l.b16 %v655
        %v965 = vunpack.c.h.b16 %v655
        %v966 = vunpack.c.l.b16 %v656
        %v967 = vunpack.c.h.b16 %v656
        %v968 = vunpack.c.l.b16 %v657
        %v969 = vunpack.c.h.b16 %v657
        %v970 = vunpack.c.l.b16 %v658
        %v971 = vunpack.c.h.b16 %v658
        %v972 = vunpack.c.l.b16 %v659
        %v973 = vunpack.c.h.b16 %v659
        %v974 = vunpack.c.l.b16 %v660
        %v975 = vunpack.c.h.b16 %v660
        %v976 = vunpack.c.l.b16 %v661
        %v977 = vunpack.c.h.b16 %v661
        %v978 = vunpack.c.l.b16 %v662
        %v979 = vunpack.c.h.b16 %v662
        %v980 = vunpack.c.l.b16 %v663
        %v981 = vunpack.c.h.b16 %v663
        %v982 = vunpack.c.l.b16 %v664
        %v983 = vunpack.c.h.b16 %v664
        %v984 = vunpack.c.l.b16 %v665
        %v985 = vunpack.c.h.b16 %v665
        %v986 = vpack.c.b16 %v800, %v794
        %v987 = vpack.c.b16 %v801, %v795
        %v988 = vpack.c.b16 %v802, %v796
        %v989 = vpack.c.b16 %v803, %v797
        %v990 = vpack.c.b16 %v804, %v798
        %v991 = vpack.c.b16 %v805, %v799
        %v992 = vpack.c.b16 %v812, %v806
        %v993 = vpack.c.b16 %v813, %v807
        %v994 = vpack.c.b16 %v814, %v808
        %v995 = vpack.c.b16 %v815, %v809
        %v996 = vpack.c.b16 %v816, %v810
        %v997 = vpack.c.b16 %v817, %v811
        %v998 = vpack.c.b16 %v824, %v818
        %v999 = vpack.c.b16 %v825, %v819
        %v1000 = vpack.c.b16 %v826, %v820
        %v1001 = vpack.c.b16 %v827, %v821
        %v1002 = vpack.c.b16 %v828, %v822
        %v1003 = vpack.c.b16 %v829, %v823
        %v1004 = vpack.c.b16 %v836, %v830
        %v1005 = vpack.c.b16 %v837, %v831
        %v1006 = vpack.c.b16 %v838, %v832
        %v1007 = vpack.c.b16 %v839, %v833
        %v1008 = vpack.c.b16 %v840, %v834
        %v1009 = vpack.c.b16 %v841, %v835
        %v1010 = vpack.c.b16 %v848, %v842
        %v1011 = vpack.c.b16 %v849, %v843
        %v1012 = vpack.c.b16 %v850, %v844
        %v1013 = vpack.c.b16 %v851, %v845
        %v1014 = vpack.c.b16 %v852, %v846
        %v1015 = vpack.c.b16 %v853, %v847
        %v1016 = vpack.c.b16 %v860, %v854
        %v1017 = vpack.c.b16 %v861, %v855
        %v1018 = vpack.c.b16 %v862, %v856
        %v1019 = vpack.c.b16 %v863, %v857
        %v1020 = vpack.c.b16 %v864, %v858
        %v1021 = vpack.c.b16 %v865, %v859
        %v1022 = vpack.c.b16 %v872, %v866
        %v1023 = vpack.c.b16 %v873, %v867
        %v1024 = vpack.c.b16 %v874, %v868
        %v1025 = vpack.c.b16 %v875, %v869
        %v1026 = vpack.c.b16 %v876, %v870
        %v1027 = vpack.c.b16 %v877, %v871
        %v1028 = vpack.c.b16 %v884, %v878
        %v1029 = vpack.c.b16 %v885, %v879
        %v1030 = vpack.c.b16 %v886, %v880
        %v1031 = vpack.c.b16 %v887, %v881
        %v1032 = vpack.c.b16 %v888, %v882
        %v1033 = vpack.c.b16 %v889, %v883
        %v1034 = vpack.c.b16 %v896, %v890
        %v1035 = vpack.c.b16 %v897, %v891
        %v1036 = vpack.c.b16 %v898, %v892
        %v1037 = vpack.c.b16 %v899, %v893
        %v1038 = vpack.c.b16 %v900, %v894
        %v1039 = vpack.c.b16 %v901, %v895
        %v1040 = vpack.c.b16 %v908, %v902
        %v1041 = vpack.c.b16 %v909, %v903
        %v1042 = vpack.c.b16 %v910, %v904
        %v1043 = vpack.c.b16 %v911, %v905
        %v1044 = vpack.c.b16 %v912, %v906
        %v1045 = vpack.c.b16 %v913, %v907
        %v1046 = vpack.c.b16 %v920, %v914
        %v1047 = vpack.c.b16 %v921, %v915
        %v1048 = vpack.c.b16 %v922, %v916
        %v1049 = vpack.c.b16 %v923, %v917
        %v1050 = vpack.c.b16 %v924, %v918
        %v1051 = vpack.c.b16 %v925, %v919
        %v1052 = vpack.c.b16 %v932, %v926
        %v1053 = vpack.c.b16 %v933, %v927
        %v1054 = vpack.c.b16 %v934, %v928
        %v1055 = vpack.c.b16 %v935, %v929
        %v1056 = vpack.c.b16 %v936, %v930
        %v1057 = vpack.c.b16 %v937, %v931
        %v1058 = vpack.c.b16 %v944, %v938
        %v1059 = vpack.c.b16 %v945, %v939
        %v1060 = vpack.c.b16 %v946, %v940
        %v1061 = vpack.c.b16 %v947, %v941
        %v1062 = vpack.c.b16 %v948, %v942
        %v1063 = vpack.c.b16 %v949, %v943
        %v1064 = vpack.c.b16 %v956, %v950
        %v1065 = vpack.c.b16 %v957, %v951
        %v1066 = vpack.c.b16 %v958, %v952
        %v1067 = vpack.c.b16 %v959, %v953
        %v1068 = vpack.c.b16 %v960, %v954
        %v1069 = vpack.c.b16 %v961, %v955
        %v1070 = vpack.c.b16 %v968, %v962
        %v1071 = vpack.c.b16 %v969, %v963
        %v1072 = vpack.c.b16 %v970, %v964
        %v1073 = vpack.c.b16 %v971, %v965
        %v1074 = vpack.c.b16 %v972, %v966
        %v1075 = vpack.c.b16 %v973, %v967
        %v1076 = vpack.c.b16 %v980, %v974
        %v1077 = vpack.c.b16 %v981, %v975
        %v1078 = vpack.c.b16 %v982, %v976
        %v1079 = vpack.c.b16 %v983, %v977
        %v1080 = vpack.c.b16 %v984, %v978
        %v1081 = vpack.c.b16 %v985, %v979
        %1178 = vmatprep.subr.bf16.mxu0 %v1029
        %1179 = vmatpush1.bf16.msra.mxu0 %v1028
        %1180 = vmatprep.subr.bf16.mxu0 %v1023
        %1181 = vmatpush1.bf16.msra.mxu0 %v1022
        %1182 = vmatprep.subr.bf16.mxu0 %v1017
        %1183 = vmatpush1.bf16.msra.mxu0 %v1016
        %1184 = vmatprep.subr.bf16.mxu0 %v1011
        %1185 = vmatpush1.bf16.msra.mxu0 %v1010
        %1186 = vmatprep.subr.bf16.mxu0 %v1005
        %1187 = vmatpush1.bf16.msra.mxu0 %v1004
        %1188 = vmatprep.subr.bf16.mxu0 %v999
        %1189 = vmatpush1.bf16.msra.mxu0 %v998
        %1190 = vmatprep.subr.bf16.mxu0 %v993
        %1191 = vmatpush1.bf16.msra.mxu0 %v992
        %1192 = vmatprep.subr.bf16.mxu0 %v987
        %1193 = vmatpush1.bf16.msra.mxu0 %v986
        %1194 = vmatprep.subr.bf16.mxu0 %v1077
        %1195 = vmatpush2.bf16.msra.mxu0 %v1076
        %1196 = vmatprep.subr.bf16.mxu0 %v1071
        %1197 = vmatpush2.bf16.msra.mxu0 %v1070
        %1198 = vmatprep.subr.bf16.mxu0 %v1065
        %1199 = vmatpush2.bf16.msra.mxu0 %v1064
        %1200 = vmatprep.subr.bf16.mxu0 %v1059
        %1201 = vmatpush2.bf16.msra.mxu0 %v1058
        %1202 = vmatprep.subr.bf16.mxu0 %v1053
        %1203 = vmatpush2.bf16.msra.mxu0 %v1052
        %1204 = vmatprep.subr.bf16.mxu0 %v1047
        %1205 = vmatpush2.bf16.msra.mxu0 %v1046
        %1206 = vmatprep.subr.bf16.mxu0 %v1041
        %1207 = vmatpush2.bf16.msra.mxu0 %v1040
        %1208 = vmatprep.subr.bf16.mxu0 %v1035
        %1209 = vmatpush2.bf16.msra.mxu0 %v1034
        %1210 = vmatprep.mubr.bf16.mxu0 %v569
        %1211 = vmatmul.mubr.bf16.gmra.mxu0 %v568
        %v1212 = vpop.f32.mrf.mxu0
        %v1213 = vadd.f32 %v671, %v1212
        %v1214 = vpop.f32.mrf.mxu0
        %v1215 = vadd.f32 %v675, %v1214
        %v1216 = vpop.f32.mrf.mxu0
        %v1217 = vpop.f32.mrf.mxu0
        %1218 = vdwg.mxu0
        %1219 = vmatprep.subr.bf16.mxu0 %v1031
        %1220 = vmatpush1.bf16.msra.mxu0 %v1030
        %1221 = vmatprep.subr.bf16.mxu0 %v1025
        %1222 = vmatpush1.bf16.msra.mxu0 %v1024
        %1223 = vmatprep.subr.bf16.mxu0 %v1019
        %1224 = vmatpush1.bf16.msra.mxu0 %v1018
        %1225 = vmatprep.subr.bf16.mxu0 %v1013
        %1226 = vmatpush1.bf16.msra.mxu0 %v1012
        %1227 = vmatprep.subr.bf16.mxu0 %v1007
        %1228 = vmatpush1.bf16.msra.mxu0 %v1006
        %1229 = vmatprep.subr.bf16.mxu0 %v1001
        %1230 = vmatpush1.bf16.msra.mxu0 %v1000
        %1231 = vmatprep.subr.bf16.mxu0 %v995
        %1232 = vmatpush1.bf16.msra.mxu0 %v994
        %1233 = vmatprep.subr.bf16.mxu0 %v989
        %1234 = vmatpush1.bf16.msra.mxu0 %v988
        %1235 = vmatprep.subr.bf16.mxu0 %v1079
        %1236 = vmatpush2.bf16.msra.mxu0 %v1078
        %1237 = vmatprep.subr.bf16.mxu0 %v1073
        %1238 = vmatpush2.bf16.msra.mxu0 %v1072
        %1239 = vmatprep.subr.bf16.mxu0 %v1067
        %1240 = vmatpush2.bf16.msra.mxu0 %v1066
        %1241 = vmatprep.subr.bf16.mxu0 %v1061
        %1242 = vmatpush2.bf16.msra.mxu0 %v1060
        %1243 = vmatprep.subr.bf16.mxu0 %v1055
        %1244 = vmatpush2.bf16.msra.mxu0 %v1054
        %1245 = vmatprep.subr.bf16.mxu0 %v1049
        %1246 = vmatpush2.bf16.msra.mxu0 %v1048
        %1247 = vmatprep.subr.bf16.mxu0 %v1043
        %1248 = vmatpush2.bf16.msra.mxu0 %v1042
        %1249 = vmatprep.subr.bf16.mxu0 %v1037
        %1250 = vmatpush2.bf16.msra.mxu0 %v1036
        %1251 = vmatprep.mubr.bf16.mxu0 %v569
        %1252 = vmatmul.mubr.bf16.gmra.mxu0 %v568
        %v1253 = vpop.f32.mrf.mxu0
        %v1254 = vadd.f32 %v679, %v1253
        %v1255 = vpop.f32.mrf.mxu0
        %v1256 = vadd.f32 %v683, %v1255
        %v1257 = vpop.f32.mrf.mxu0
        %v1258 = vpop.f32.mrf.mxu0
        %1259 = vdwg.mxu0
        %1260 = vmatprep.subr.bf16.mxu0 %v1033
        %1261 = vmatpush1.bf16.msra.mxu0 %v1032
        %1262 = vmatprep.subr.bf16.mxu0 %v1027
        %1263 = vmatpush1.bf16.msra.mxu0 %v1026
        %1264 = vmatprep.subr.bf16.mxu0 %v1021
        %1265 = vmatpush1.bf16.msra.mxu0 %v1020
        %1266 = vmatprep.subr.bf16.mxu0 %v1015
        %1267 = vmatpush1.bf16.msra.mxu0 %v1014
        %1268 = vmatprep.subr.bf16.mxu0 %v1009
        %1269 = vmatpush1.bf16.msra.mxu0 %v1008
        %1270 = vmatprep.subr.bf16.mxu0 %v1003
        %1271 = vmatpush1.bf16.msra.mxu0 %v1002
        %1272 = vmatprep.subr.bf16.mxu0 %v997
        %1273 = vmatpush1.bf16.msra.mxu0 %v996
        %1274 = vmatprep.subr.bf16.mxu0 %v991
        %1275 = vmatpush1.bf16.msra.mxu0 %v990
        %1276 = vmatprep.subr.bf16.mxu0 %v1081
        %1277 = vmatpush2.bf16.msra.mxu0 %v1080
        %1278 = vmatprep.subr.bf16.mxu0 %v1075
        %1279 = vmatpush2.bf16.msra.mxu0 %v1074
        %1280 = vmatprep.subr.bf16.mxu0 %v1069
        %1281 = vmatpush2.bf16.msra.mxu0 %v1068
        %1282 = vmatprep.subr.bf16.mxu0 %v1063
        %1283 = vmatpush2.bf16.msra.mxu0 %v1062
        %1284 = vmatprep.subr.bf16.mxu0 %v1057
        %1285 = vmatpush2.bf16.msra.mxu0 %v1056
        %1286 = vmatprep.subr.bf16.mxu0 %v1051
        %1287 = vmatpush2.bf16.msra.mxu0 %v1050
        %1288 = vmatprep.subr.bf16.mxu0 %v1045
        %1289 = vmatpush2.bf16.msra.mxu0 %v1044
        %1290 = vmatprep.subr.bf16.mxu0 %v1039
        %1291 = vmatpush2.bf16.msra.mxu0 %v1038
        %1292 = vmatprep.mubr.bf16.mxu0 %v569
        %1293 = vmatmul.mubr.bf16.gmra.mxu0 %v568
        %v1294 = vpop.f32.mrf.mxu0
        %v1295 = vadd.f32 %v687, %v1294
        %v1296 = vpop.f32.mrf.mxu0
        %v1297 = vadd.f32 %v691, %v1296
        %v1298 = vpop.f32.mrf.mxu0
        %v1299 = vpop.f32.mrf.mxu0
        %1300 = vdwg.mxu0
        %v1301 = vpack.c.bf16 %v1213, %v1213
        %v1302 = vpack.c.bf16 %v1215, %v1215
        %v1303 = vpack.c.bf16 %v1254, %v1254
        %v1304 = vpack.c.bf16 %v1256, %v1256
        %v1305 = vpack.c.bf16 %v1295, %v1295
        %v1306 = vpack.c.bf16 %v1297, %v1297
        %vm1307 = vcmask 261120
        %v1309 = vsel %vm1307, %v1301, 0
        %v1312 = vsel %vm1307, %v1303, 0
        %1314 = vmatprep.subr.bf16.mxu0 0
        %1315 = vmatpush1.bf16.xpose.msra.mxu0 0
        %1316 = vmatprep.subr.bf16.mxu0 0
        %1317 = vmatpush1.bf16.xpose.msra.mxu0 0
        %1318 = vmatprep.subr.bf16.mxu0 0
        %1319 = vmatpush1.bf16.xpose.msra.mxu0 0
        %1320 = vmatprep.subr.bf16.mxu0 0
        %1321 = vmatpush1.bf16.xpose.msra.mxu0 0
        %1322 = vmatprep.subr.bf16.mxu0 0
        %1323 = vmatpush1.bf16.xpose.msra.mxu0 0
        %1324 = vmatprep.subr.bf16.mxu0 0
        %1325 = vmatpush1.bf16.xpose.msra.mxu0 0
        %1326 = vmatprep.subr.bf16.mxu0 0
        %1327 = vmatpush1.bf16.xpose.msra.mxu0 0
        %1328 = vmatprep.subr.bf16.mxu0 0
        %1329 = vmatpush1.bf16.xpose.msra.mxu0 %v1312
        %1330 = vmatprep.subr.bf16.mxu0 0
        %1331 = vmatpush2.bf16.xpose.msra.mxu0 0
        %1332 = vmatprep.subr.bf16.mxu0 0
        %1333 = vmatpush2.bf16.xpose.msra.mxu0 0
        %1334 = vmatprep.subr.bf16.mxu0 0
        %1335 = vmatpush2.bf16.xpose.msra.mxu0 0
        %1336 = vmatprep.subr.bf16.mxu0 0
        %1337 = vmatpush2.bf16.xpose.msra.mxu0 0
        %1338 = vmatprep.subr.bf16.mxu0 0
        %1339 = vmatpush2.bf16.xpose.msra.mxu0 0
        %1340 = vmatprep.subr.bf16.mxu0 0
        %1341 = vmatpush2.bf16.xpose.msra.mxu0 0
        %1342 = vmatprep.subr.bf16.mxu0 0
        %1343 = vmatpush2.bf16.xpose.msra.mxu0 0
        %1344 = vmatprep.subr.bf16.mxu0 0
        %1345 = vmatpush2.bf16.xpose.msra.mxu0 0
        %1346 = vmatprep.mubr.bf16.mxu0 0
        %1347 = vmatmul.mubr.bf16.gmra.mxu0 %v1309
        %v1348 = vpop.f32.mrf.mxu0
        %v1349 = vadd.f32 0.0, %v1348
        %v1350 = vpop.f32.mrf.mxu0
        %v1351 = vpop.f32.mrf.mxu0
        %v1352 = vpop.f32.mrf.mxu0
        %1353 = vdwg.mxu0
        %v1354 = vmul.f32 %v1349, 0.17677669
        %vm1355 = vcmask 64512
        %v1356 = vsel %vm1355, %v1354, -inf
        %1357 = vmax.xlane.f32.xlu0 %v1356
        %v1358 = vpop.xlane.xlu0 %1357
        %v1359 = vsub.f32 %v1354, %v1358
        %v1360 = vmul.f32 %v1359, 1.442695
        %v1361 = vpow.pop %v1360
        %v1362 = vsel %vm1355, %v1361, 0.0
        %1363 = vadd.xlane.f32.xlu0 %v1362
        %v1364 = vpop.xlane.xlu0 %1363
        %v1365 = vrcp.pop %v1364
        %v1366 = vmul.f32 %v1361, %v1365
        %v1367 = vpack.c.bf16 %v1366, %v1366
        %v1369 = vsel %vm1355, %v1367, 0
        %vm1371 = vcmask 1043456
        %v1373 = vsel %vm1371, %v1305, 0
        %1375 = vmatprep.subr.bf16.mxu0 0
        %1376 = vmatpush1.bf16.msra.mxu0 0
        %1377 = vmatprep.subr.bf16.mxu0 0
        %1378 = vmatpush1.bf16.msra.mxu0 0
        %1379 = vmatprep.subr.bf16.mxu0 0
        %1380 = vmatpush1.bf16.msra.mxu0 0
        %1381 = vmatprep.subr.bf16.mxu0 0
        %1382 = vmatpush1.bf16.msra.mxu0 0
        %1383 = vmatprep.subr.bf16.mxu0 0
        %1384 = vmatpush1.bf16.msra.mxu0 0
        %1385 = vmatprep.subr.bf16.mxu0 0
        %1386 = vmatpush1.bf16.msra.mxu0 0
        %1387 = vmatprep.subr.bf16.mxu0 0
        %1388 = vmatpush1.bf16.msra.mxu0 0
        %1389 = vmatprep.subr.bf16.mxu0 0
        %1390 = vmatpush1.bf16.msra.mxu0 %v1373
        %1391 = vmatprep.subr.bf16.mxu0 0
        %1392 = vmatpush2.bf16.msra.mxu0 0
        %1393 = vmatprep.subr.bf16.mxu0 0
        %1394 = vmatpush2.bf16.msra.mxu0 0
        %1395 = vmatprep.subr.bf16.mxu0 0
        %1396 = vmatpush2.bf16.msra.mxu0 0
        %1397 = vmatprep.subr.bf16.mxu0 0
        %1398 = vmatpush2.bf16.msra.mxu0 0
        %1399 = vmatprep.subr.bf16.mxu0 0
        %1400 = vmatpush2.bf16.msra.mxu0 0
        %1401 = vmatprep.subr.bf16.mxu0 0
        %1402 = vmatpush2.bf16.msra.mxu0 0
        %1403 = vmatprep.subr.bf16.mxu0 0
        %1404 = vmatpush2.bf16.msra.mxu0 0
        %1405 = vmatprep.subr.bf16.mxu0 0
        %1406 = vmatpush2.bf16.msra.mxu0 0
        %1407 = vmatprep.mubr.bf16.mxu0 0
        %1408 = vmatmul.mubr.bf16.gmra.mxu0 %v1369
        %v1409 = vpop.f32.mrf.mxu0
        %v1410 = vadd.f32 0.0, %v1409
        %v1411 = vpop.f32.mrf.mxu0
        %v1412 = vpop.f32.mrf.mxu0
        %v1413 = vpop.f32.mrf.mxu0
        %1414 = vdwg.mxu0
        %1415 = vst.msk [vmem:[#allocation2] sm:$0xff] %vm1307, %v1410
        %1417 = vrot.lane.b32.xlu0 %v1301, 96
        %v1418 = vpop.permute.xlu0 %1417
        %1420 = vrot.lane.b32.xlu0 %v1303, 96
        %v1421 = vpop.permute.xlu0 %1420
        %v1423 = vsel %vm1307, %v1418, 0
        %v1426 = vsel %vm1307, %v1421, 0
        %1428 = vmatprep.subr.bf16.mxu0 0
        %1429 = vmatpush1.bf16.xpose.msra.mxu0 0
        %1430 = vmatprep.subr.bf16.mxu0 0
        %1431 = vmatpush1.bf16.xpose.msra.mxu0 0
        %1432 = vmatprep.subr.bf16.mxu0 0
        %1433 = vmatpush1.bf16.xpose.msra.mxu0 0
        %1434 = vmatprep.subr.bf16.mxu0 0
        %1435 = vmatpush1.bf16.xpose.msra.mxu0 0
        %1436 = vmatprep.subr.bf16.mxu0 0
        %1437 = vmatpush1.bf16.xpose.msra.mxu0 0
        %1438 = vmatprep.subr.bf16.mxu0 0
        %1439 = vmatpush1.bf16.xpose.msra.mxu0 0
        %1440 = vmatprep.subr.bf16.mxu0 0
        %1441 = vmatpush1.bf16.xpose.msra.mxu0 0
        %1442 = vmatprep.subr.bf16.mxu0 0
        %1443 = vmatpush1.bf16.xpose.msra.mxu0 %v1426
        %1444 = vmatprep.subr.bf16.mxu0 0
        %1445 = vmatpush2.bf16.xpose.msra.mxu0 0
        %1446 = vmatprep.subr.bf16.mxu0 0
        %1447 = vmatpush2.bf16.xpose.msra.mxu0 0
        %1448 = vmatprep.subr.bf16.mxu0 0
        %1449 = vmatpush2.bf16.xpose.msra.mxu0 0
        %1450 = vmatprep.subr.bf16.mxu0 0
        %1451 = vmatpush2.bf16.xpose.msra.mxu0 0
        %1452 = vmatprep.subr.bf16.mxu0 0
        %1453 = vmatpush2.bf16.xpose.msra.mxu0 0
        %1454 = vmatprep.subr.bf16.mxu0 0
        %1455 = vmatpush2.bf16.xpose.msra.mxu0 0
        %1456 = vmatprep.subr.bf16.mxu0 0
        %1457 = vmatpush2.bf16.xpose.msra.mxu0 0
        %1458 = vmatprep.subr.bf16.mxu0 0
        %1459 = vmatpush2.bf16.xpose.msra.mxu0 0
        %1460 = vmatprep.mubr.bf16.mxu0 0
        %1461 = vmatmul.mubr.bf16.gmra.mxu0 %v1423
        %v1462 = vpop.f32.mrf.mxu0
        %v1463 = vadd.f32 0.0, %v1462
        %v1464 = vpop.f32.mrf.mxu0
        %v1465 = vpop.f32.mrf.mxu0
        %v1466 = vpop.f32.mrf.mxu0
        %1467 = vdwg.mxu0
        %v1468 = vmul.f32 %v1463, 0.17677669
        %v1469 = vsel %vm1355, %v1468, -inf
        %1470 = vmax.xlane.f32.xlu0 %v1469
        %v1471 = vpop.xlane.xlu0 %1470
        %v1472 = vsub.f32 %v1468, %v1471
        %v1473 = vmul.f32 %v1472, 1.442695
        %v1474 = vpow.pop %v1473
        %v1475 = vsel %vm1355, %v1474, 0.0
        %1476 = vadd.xlane.f32.xlu0 %v1475
        %v1477 = vpop.xlane.xlu0 %1476
        %v1478 = vrcp.pop %v1477
        %v1479 = vmul.f32 %v1474, %v1478
        %v1480 = vpack.c.bf16 %v1479, %v1479
        %1482 = vrot.lane.b32.xlu0 %v1305, 96
        %v1483 = vpop.permute.xlu0 %1482
        %v1485 = vsel %vm1355, %v1480, 0
        %v1488 = vsel %vm1371, %v1483, 0
        %1490 = vmatprep.subr.bf16.mxu0 0
        %1491 = vmatpush1.bf16.msra.mxu0 0
        %1492 = vmatprep.subr.bf16.mxu0 0
        %1493 = vmatpush1.bf16.msra.mxu0 0
        %1494 = vmatprep.subr.bf16.mxu0 0
        %1495 = vmatpush1.bf16.msra.mxu0 0
        %1496 = vmatprep.subr.bf16.mxu0 0
        %1497 = vmatpush1.bf16.msra.mxu0 0
        %1498 = vmatprep.subr.bf16.mxu0 0
        %1499 = vmatpush1.bf16.msra.mxu0 0
        %1500 = vmatprep.subr.bf16.mxu0 0
        %1501 = vmatpush1.bf16.msra.mxu0 0
        %1502 = vmatprep.subr.bf16.mxu0 0
        %1503 = vmatpush1.bf16.msra.mxu0 0
        %1504 = vmatprep.subr.bf16.mxu0 0
        %1505 = vmatpush1.bf16.msra.mxu0 %v1488
        %1506 = vmatprep.subr.bf16.mxu0 0
        %1507 = vmatpush2.bf16.msra.mxu0 0
        %1508 = vmatprep.subr.bf16.mxu0 0
        %1509 = vmatpush2.bf16.msra.mxu0 0
        %1510 = vmatprep.subr.bf16.mxu0 0
        %1511 = vmatpush2.bf16.msra.mxu0 0
        %1512 = vmatprep.subr.bf16.mxu0 0
        %1513 = vmatpush2.bf16.msra.mxu0 0
        %1514 = vmatprep.subr.bf16.mxu0 0
        %1515 = vmatpush2.bf16.msra.mxu0 0
        %1516 = vmatprep.subr.bf16.mxu0 0
        %1517 = vmatpush2.bf16.msra.mxu0 0
        %1518 = vmatprep.subr.bf16.mxu0 0
        %1519 = vmatpush2.bf16.msra.mxu0 0
        %1520 = vmatprep.subr.bf16.mxu0 0
        %1521 = vmatpush2.bf16.msra.mxu0 0
        %1522 = vmatprep.mubr.bf16.mxu0 0
        %1523 = vmatmul.mubr.bf16.gmra.mxu0 %v1485
        %v1524 = vpop.f32.mrf.mxu0
        %v1525 = vadd.f32 0.0, %v1524
        %v1526 = vpop.f32.mrf.mxu0
        %v1527 = vpop.f32.mrf.mxu0
        %v1528 = vpop.f32.mrf.mxu0
        %1529 = vdwg.mxu0
        %1531 = vrot.lane.b32.xlu0 %v1525, 32
        %v1532 = vpop.permute.xlu0 %1531
        %vm1534 = vcmask 523520
        %1535 = vst.msk [vmem:[#allocation2] sm:$0xff] %vm1534, %v1532
        %1536 = vrot.lane.b32.xlu0 %v1301, 64
        %v1537 = vpop.permute.xlu0 %1536
        %1538 = vrot.lane.b32.xlu0 %v1303, 64
        %v1539 = vpop.permute.xlu0 %1538
        %v1541 = vsel %vm1307, %v1537, 0
        %v1544 = vsel %vm1307, %v1539, 0
        %1546 = vmatprep.subr.bf16.mxu0 0
        %1547 = vmatpush1.bf16.xpose.msra.mxu0 0
        %1548 = vmatprep.subr.bf16.mxu0 0
        %1549 = vmatpush1.bf16.xpose.msra.mxu0 0
        %1550 = vmatprep.subr.bf16.mxu0 0
        %1551 = vmatpush1.bf16.xpose.msra.mxu0 0
        %1552 = vmatprep.subr.bf16.mxu0 0
        %1553 = vmatpush1.bf16.xpose.msra.mxu0 0
        %1554 = vmatprep.subr.bf16.mxu0 0
        %1555 = vmatpush1.bf16.xpose.msra.mxu0 0
        %1556 = vmatprep.subr.bf16.mxu0 0
        %1557 = vmatpush1.bf16.xpose.msra.mxu0 0
        %1558 = vmatprep.subr.bf16.mxu0 0
        %1559 = vmatpush1.bf16.xpose.msra.mxu0 0
        %1560 = vmatprep.subr.bf16.mxu0 0
        %1561 = vmatpush1.bf16.xpose.msra.mxu0 %v1544
        %1562 = vmatprep.subr.bf16.mxu0 0
        %1563 = vmatpush2.bf16.xpose.msra.mxu0 0
        %1564 = vmatprep.subr.bf16.mxu0 0
        %1565 = vmatpush2.bf16.xpose.msra.mxu0 0
        %1566 = vmatprep.subr.bf16.mxu0 0
        %1567 = vmatpush2.bf16.xpose.msra.mxu0 0
        %1568 = vmatprep.subr.bf16.mxu0 0
        %1569 = vmatpush2.bf16.xpose.msra.mxu0 0
        %1570 = vmatprep.subr.bf16.mxu0 0
        %1571 = vmatpush2.bf16.xpose.msra.mxu0 0
        %1572 = vmatprep.subr.bf16.mxu0 0
        %1573 = vmatpush2.bf16.xpose.msra.mxu0 0
        %1574 = vmatprep.subr.bf16.mxu0 0
        %1575 = vmatpush2.bf16.xpose.msra.mxu0 0
        %1576 = vmatprep.subr.bf16.mxu0 0
        %1577 = vmatpush2.bf16.xpose.msra.mxu0 0
        %1578 = vmatprep.mubr.bf16.mxu0 0
        %1579 = vmatmul.mubr.bf16.gmra.mxu0 %v1541
        %v1580 = vpop.f32.mrf.mxu0
        %v1581 = vadd.f32 0.0, %v1580
        %v1582 = vpop.f32.mrf.mxu0
        %v1583 = vpop.f32.mrf.mxu0
        %v1584 = vpop.f32.mrf.mxu0
        %1585 = vdwg.mxu0
        %v1586 = vmul.f32 %v1581, 0.17677669
        %v1587 = vsel %vm1355, %v1586, -inf
        %1588 = vmax.xlane.f32.xlu0 %v1587
        %v1589 = vpop.xlane.xlu0 %1588
        %v1590 = vsub.f32 %v1586, %v1589
        %v1591 = vmul.f32 %v1590, 1.442695
        %v1592 = vpow.pop %v1591
        %v1593 = vsel %vm1355, %v1592, 0.0
        %1594 = vadd.xlane.f32.xlu0 %v1593
        %v1595 = vpop.xlane.xlu0 %1594
        %v1596 = vrcp.pop %v1595
        %v1597 = vmul.f32 %v1592, %v1596
        %v1598 = vpack.c.bf16 %v1597, %v1597
        %1599 = vrot.lane.b32.xlu0 %v1305, 64
        %v1600 = vpop.permute.xlu0 %1599
        %v1602 = vsel %vm1355, %v1598, 0
        %v1605 = vsel %vm1371, %v1600, 0
        %1607 = vmatprep.subr.bf16.mxu0 0
        %1608 = vmatpush1.bf16.msra.mxu0 0
        %1609 = vmatprep.subr.bf16.mxu0 0
        %1610 = vmatpush1.bf16.msra.mxu0 0
        %1611 = vmatprep.subr.bf16.mxu0 0
        %1612 = vmatpush1.bf16.msra.mxu0 0
        %1613 = vmatprep.subr.bf16.mxu0 0
        %1614 = vmatpush1.bf16.msra.mxu0 0
        %1615 = vmatprep.subr.bf16.mxu0 0
        %1616 = vmatpush1.bf16.msra.mxu0 0
        %1617 = vmatprep.subr.bf16.mxu0 0
        %1618 = vmatpush1.bf16.msra.mxu0 0
        %1619 = vmatprep.subr.bf16.mxu0 0
        %1620 = vmatpush1.bf16.msra.mxu0 0
        %1621 = vmatprep.subr.bf16.mxu0 0
        %1622 = vmatpush1.bf16.msra.mxu0 %v1605
        %1623 = vmatprep.subr.bf16.mxu0 0
        %1624 = vmatpush2.bf16.msra.mxu0 0
        %1625 = vmatprep.subr.bf16.mxu0 0
        %1626 = vmatpush2.bf16.msra.mxu0 0
        %1627 = vmatprep.subr.bf16.mxu0 0
        %1628 = vmatpush2.bf16.msra.mxu0 0
        %1629 = vmatprep.subr.bf16.mxu0 0
        %1630 = vmatpush2.bf16.msra.mxu0 0
        %1631 = vmatprep.subr.bf16.mxu0 0
        %1632 = vmatpush2.bf16.msra.mxu0 0
        %1633 = vmatprep.subr.bf16.mxu0 0
        %1634 = vmatpush2.bf16.msra.mxu0 0
        %1635 = vmatprep.subr.bf16.mxu0 0
        %1636 = vmatpush2.bf16.msra.mxu0 0
        %1637 = vmatprep.subr.bf16.mxu0 0
        %1638 = vmatpush2.bf16.msra.mxu0 0
        %1639 = vmatprep.mubr.bf16.mxu0 0
        %1640 = vmatmul.mubr.bf16.gmra.mxu0 %v1602
        %v1641 = vpop.f32.mrf.mxu0
        %v1642 = vadd.f32 0.0, %v1641
        %v1643 = vpop.f32.mrf.mxu0
        %v1644 = vpop.f32.mrf.mxu0
        %v1645 = vpop.f32.mrf.mxu0
        %1646 = vdwg.mxu0
        %1648 = vrot.lane.b32.xlu0 %v1642, 64
        %v1649 = vpop.permute.xlu0 %1648
        %vm1651 = vcmask 785920
        %1652 = vst.msk [vmem:[#allocation2] sm:$0xff] %vm1651, %v1649
        %1653 = vrot.lane.b32.xlu0 %v1301, 32
        %v1654 = vpop.permute.xlu0 %1653
        %1655 = vrot.lane.b32.xlu0 %v1303, 32
        %v1656 = vpop.permute.xlu0 %1655
        %v1658 = vsel %vm1307, %v1654, 0
        %v1661 = vsel %vm1307, %v1656, 0
        %1663 = vmatprep.subr.bf16.mxu0 0
        %1664 = vmatpush1.bf16.xpose.msra.mxu0 0
        %1665 = vmatprep.subr.bf16.mxu0 0
        %1666 = vmatpush1.bf16.xpose.msra.mxu0 0
        %1667 = vmatprep.subr.bf16.mxu0 0
        %1668 = vmatpush1.bf16.xpose.msra.mxu0 0
        %1669 = vmatprep.subr.bf16.mxu0 0
        %1670 = vmatpush1.bf16.xpose.msra.mxu0 0
        %1671 = vmatprep.subr.bf16.mxu0 0
        %1672 = vmatpush1.bf16.xpose.msra.mxu0 0
        %1673 = vmatprep.subr.bf16.mxu0 0
        %1674 = vmatpush1.bf16.xpose.msra.mxu0 0
        %1675 = vmatprep.subr.bf16.mxu0 0
        %1676 = vmatpush1.bf16.xpose.msra.mxu0 0
        %1677 = vmatprep.subr.bf16.mxu0 0
        %1678 = vmatpush1.bf16.xpose.msra.mxu0 %v1661
        %1679 = vmatprep.subr.bf16.mxu0 0
        %1680 = vmatpush2.bf16.xpose.msra.mxu0 0
        %1681 = vmatprep.subr.bf16.mxu0 0
        %1682 = vmatpush2.bf16.xpose.msra.mxu0 0
        %1683 = vmatprep.subr.bf16.mxu0 0
        %1684 = vmatpush2.bf16.xpose.msra.mxu0 0
        %1685 = vmatprep.subr.bf16.mxu0 0
        %1686 = vmatpush2.bf16.xpose.msra.mxu0 0
        %1687 = vmatprep.subr.bf16.mxu0 0
        %1688 = vmatpush2.bf16.xpose.msra.mxu0 0
        %1689 = vmatprep.subr.bf16.mxu0 0
        %1690 = vmatpush2.bf16.xpose.msra.mxu0 0
        %1691 = vmatprep.subr.bf16.mxu0 0
        %1692 = vmatpush2.bf16.xpose.msra.mxu0 0
        %1693 = vmatprep.subr.bf16.mxu0 0
        %1694 = vmatpush2.bf16.xpose.msra.mxu0 0
        %1695 = vmatprep.mubr.bf16.mxu0 0
        %1696 = vmatmul.mubr.bf16.gmra.mxu0 %v1658
        %v1697 = vpop.f32.mrf.mxu0
        %v1698 = vadd.f32 0.0, %v1697
        %v1699 = vpop.f32.mrf.mxu0
        %v1700 = vpop.f32.mrf.mxu0
        %v1701 = vpop.f32.mrf.mxu0
        %1702 = vdwg.mxu0
        %v1703 = vmul.f32 %v1698, 0.17677669
        %v1704 = vsel %vm1355, %v1703, -inf
        %1705 = vmax.xlane.f32.xlu0 %v1704
        %v1706 = vpop.xlane.xlu0 %1705
        %v1707 = vsub.f32 %v1703, %v1706
        %v1708 = vmul.f32 %v1707, 1.442695
        %v1709 = vpow.pop %v1708
        %v1710 = vsel %vm1355, %v1709, 0.0
        %1711 = vadd.xlane.f32.xlu0 %v1710
        %v1712 = vpop.xlane.xlu0 %1711
        %v1713 = vrcp.pop %v1712
        %v1714 = vmul.f32 %v1709, %v1713
        %v1715 = vpack.c.bf16 %v1714, %v1714
        %1716 = vrot.lane.b32.xlu0 %v1305, 32
        %v1717 = vpop.permute.xlu0 %1716
        %v1719 = vsel %vm1355, %v1715, 0
        %v1722 = vsel %vm1371, %v1717, 0
        %1724 = vmatprep.subr.bf16.mxu0 0
        %1725 = vmatpush1.bf16.msra.mxu0 0
        %1726 = vmatprep.subr.bf16.mxu0 0
        %1727 = vmatpush1.bf16.msra.mxu0 0
        %1728 = vmatprep.subr.bf16.mxu0 0
        %1729 = vmatpush1.bf16.msra.mxu0 0
        %1730 = vmatprep.subr.bf16.mxu0 0
        %1731 = vmatpush1.bf16.msra.mxu0 0
        %1732 = vmatprep.subr.bf16.mxu0 0
        %1733 = vmatpush1.bf16.msra.mxu0 0
        %1734 = vmatprep.subr.bf16.mxu0 0
        %1735 = vmatpush1.bf16.msra.mxu0 0
        %1736 = vmatprep.subr.bf16.mxu0 0
        %1737 = vmatpush1.bf16.msra.mxu0 0
        %1738 = vmatprep.subr.bf16.mxu0 0
        %1739 = vmatpush1.bf16.msra.mxu0 %v1722
        %1740 = vmatprep.subr.bf16.mxu0 0
        %1741 = vmatpush2.bf16.msra.mxu0 0
        %1742 = vmatprep.subr.bf16.mxu0 0
        %1743 = vmatpush2.bf16.msra.mxu0 0
        %1744 = vmatprep.subr.bf16.mxu0 0
        %1745 = vmatpush2.bf16.msra.mxu0 0
        %1746 = vmatprep.subr.bf16.mxu0 0
        %1747 = vmatpush2.bf16.msra.mxu0 0
        %1748 = vmatprep.subr.bf16.mxu0 0
        %1749 = vmatpush2.bf16.msra.mxu0 0
        %1750 = vmatprep.subr.bf16.mxu0 0
        %1751 = vmatpush2.bf16.msra.mxu0 0
        %1752 = vmatprep.subr.bf16.mxu0 0
        %1753 = vmatpush2.bf16.msra.mxu0 0
        %1754 = vmatprep.subr.bf16.mxu0 0
        %1755 = vmatpush2.bf16.msra.mxu0 0
        %1756 = vmatprep.mubr.bf16.mxu0 0
        %1757 = vmatmul.mubr.bf16.gmra.mxu0 %v1719
        %v1758 = vpop.f32.mrf.mxu0
        %v1759 = vadd.f32 0.0, %v1758
        %v1760 = vpop.f32.mrf.mxu0
        %v1761 = vpop.f32.mrf.mxu0
        %v1762 = vpop.f32.mrf.mxu0
        %1763 = vdwg.mxu0
        %1765 = vrot.lane.b32.xlu0 %v1759, 96
        %v1766 = vpop.permute.xlu0 %1765
        %vm1768 = vcmask 1048320
        %1769 = vst.msk [vmem:[#allocation2] sm:$0xff] %vm1768, %v1766
        %v1771 = vsel %vm1307, %v1302, 0
        %v1774 = vsel %vm1307, %v1304, 0
        %1776 = vmatprep.subr.bf16.mxu0 0
        %1777 = vmatpush1.bf16.xpose.msra.mxu0 0
        %1778 = vmatprep.subr.bf16.mxu0 0
        %1779 = vmatpush1.bf16.xpose.msra.mxu0 0
        %1780 = vmatprep.subr.bf16.mxu0 0
        %1781 = vmatpush1.bf16.xpose.msra.mxu0 0
        %1782 = vmatprep.subr.bf16.mxu0 0
        %1783 = vmatpush1.bf16.xpose.msra.mxu0 0
        %1784 = vmatprep.subr.bf16.mxu0 0
        %1785 = vmatpush1.bf16.xpose.msra.mxu0 0
        %1786 = vmatprep.subr.bf16.mxu0 0
        %1787 = vmatpush1.bf16.xpose.msra.mxu0 0
        %1788 = vmatprep.subr.bf16.mxu0 0
        %1789 = vmatpush1.bf16.xpose.msra.mxu0 0
        %1790 = vmatprep.subr.bf16.mxu0 0
        %1791 = vmatpush1.bf16.xpose.msra.mxu0 %v1774
        %1792 = vmatprep.subr.bf16.mxu0 0
        %1793 = vmatpush2.bf16.xpose.msra.mxu0 0
        %1794 = vmatprep.subr.bf16.mxu0 0
        %1795 = vmatpush2.bf16.xpose.msra.mxu0 0
        %1796 = vmatprep.subr.bf16.mxu0 0
        %1797 = vmatpush2.bf16.xpose.msra.mxu0 0
        %1798 = vmatprep.subr.bf16.mxu0 0
        %1799 = vmatpush2.bf16.xpose.msra.mxu0 0
        %1800 = vmatprep.subr.bf16.mxu0 0
        %1801 = vmatpush2.bf16.xpose.msra.mxu0 0
        %1802 = vmatprep.subr.bf16.mxu0 0
        %1803 = vmatpush2.bf16.xpose.msra.mxu0 0
        %1804 = vmatprep.subr.bf16.mxu0 0
        %1805 = vmatpush2.bf16.xpose.msra.mxu0 0
        %1806 = vmatprep.subr.bf16.mxu0 0
        %1807 = vmatpush2.bf16.xpose.msra.mxu0 0
        %1808 = vmatprep.mubr.bf16.mxu0 0
        %1809 = vmatmul.mubr.bf16.gmra.mxu0 %v1771
        %v1810 = vpop.f32.mrf.mxu0
        %v1811 = vadd.f32 0.0, %v1810
        %v1812 = vpop.f32.mrf.mxu0
        %v1813 = vpop.f32.mrf.mxu0
        %v1814 = vpop.f32.mrf.mxu0
        %1815 = vdwg.mxu0
        %v1816 = vmul.f32 %v1811, 0.17677669
        %v1817 = vsel %vm1355, %v1816, -inf
        %1818 = vmax.xlane.f32.xlu0 %v1817
        %v1819 = vpop.xlane.xlu0 %1818
        %v1820 = vsub.f32 %v1816, %v1819
        %v1821 = vmul.f32 %v1820, 1.442695
        %v1822 = vpow.pop %v1821
        %v1823 = vsel %vm1355, %v1822, 0.0
        %1824 = vadd.xlane.f32.xlu0 %v1823
        %v1825 = vpop.xlane.xlu0 %1824
        %v1826 = vrcp.pop %v1825
        %v1827 = vmul.f32 %v1822, %v1826
        %v1828 = vpack.c.bf16 %v1827, %v1827
        %v1830 = vsel %vm1355, %v1828, 0
        %v1833 = vsel %vm1371, %v1306, 0
        %1835 = vmatprep.subr.bf16.mxu0 0
        %1836 = vmatpush1.bf16.msra.mxu0 0
        %1837 = vmatprep.subr.bf16.mxu0 0
        %1838 = vmatpush1.bf16.msra.mxu0 0
        %1839 = vmatprep.subr.bf16.mxu0 0
        %1840 = vmatpush1.bf16.msra.mxu0 0
        %1841 = vmatprep.subr.bf16.mxu0 0
        %1842 = vmatpush1.bf16.msra.mxu0 0
        %1843 = vmatprep.subr.bf16.mxu0 0
        %1844 = vmatpush1.bf16.msra.mxu0 0
        %1845 = vmatprep.subr.bf16.mxu0 0
        %1846 = vmatpush1.bf16.msra.mxu0 0
        %1847 = vmatprep.subr.bf16.mxu0 0
        %1848 = vmatpush1.bf16.msra.mxu0 0
        %1849 = vmatprep.subr.bf16.mxu0 0
        %1850 = vmatpush1.bf16.msra.mxu0 %v1833
        %1851 = vmatprep.subr.bf16.mxu0 0
        %1852 = vmatpush2.bf16.msra.mxu0 0
        %1853 = vmatprep.subr.bf16.mxu0 0
        %1854 = vmatpush2.bf16.msra.mxu0 0
        %1855 = vmatprep.subr.bf16.mxu0 0
        %1856 = vmatpush2.bf16.msra.mxu0 0
        %1857 = vmatprep.subr.bf16.mxu0 0
        %1858 = vmatpush2.bf16.msra.mxu0 0
        %1859 = vmatprep.subr.bf16.mxu0 0
        %1860 = vmatpush2.bf16.msra.mxu0 0
        %1861 = vmatprep.subr.bf16.mxu0 0
        %1862 = vmatpush2.bf16.msra.mxu0 0
        %1863 = vmatprep.subr.bf16.mxu0 0
        %1864 = vmatpush2.bf16.msra.mxu0 0
        %1865 = vmatprep.subr.bf16.mxu0 0
        %1866 = vmatpush2.bf16.msra.mxu0 0
        %1867 = vmatprep.mubr.bf16.mxu0 0
        %1868 = vmatmul.mubr.bf16.gmra.mxu0 %v1830
        %v1869 = vpop.f32.mrf.mxu0
        %v1870 = vadd.f32 0.0, %v1869
        %v1871 = vpop.f32.mrf.mxu0
        %v1872 = vpop.f32.mrf.mxu0
        %v1873 = vpop.f32.mrf.mxu0
        %1874 = vdwg.mxu0
        %1875 = vst.msk [vmem:[#allocation2 + $0x8] sm:$0xff] %vm1307, %v1870
        %1877 = vrot.lane.b32.xlu0 %v1302, 96
        %v1878 = vpop.permute.xlu0 %1877
        %1880 = vrot.lane.b32.xlu0 %v1304, 96
        %v1881 = vpop.permute.xlu0 %1880
        %v1883 = vsel %vm1307, %v1878, 0
        %v1886 = vsel %vm1307, %v1881, 0
        %1888 = vmatprep.subr.bf16.mxu0 0
        %1889 = vmatpush1.bf16.xpose.msra.mxu0 0
        %1890 = vmatprep.subr.bf16.mxu0 0
        %1891 = vmatpush1.bf16.xpose.msra.mxu0 0
        %1892 = vmatprep.subr.bf16.mxu0 0
        %1893 = vmatpush1.bf16.xpose.msra.mxu0 0
        %1894 = vmatprep.subr.bf16.mxu0 0
        %1895 = vmatpush1.bf16.xpose.msra.mxu0 0
        %1896 = vmatprep.subr.bf16.mxu0 0
        %1897 = vmatpush1.bf16.xpose.msra.mxu0 0
        %1898 = vmatprep.subr.bf16.mxu0 0
        %1899 = vmatpush1.bf16.xpose.msra.mxu0 0
        %1900 = vmatprep.subr.bf16.mxu0 0
        %1901 = vmatpush1.bf16.xpose.msra.mxu0 0
        %1902 = vmatprep.subr.bf16.mxu0 0
        %1903 = vmatpush1.bf16.xpose.msra.mxu0 %v1886
        %1904 = vmatprep.subr.bf16.mxu0 0
        %1905 = vmatpush2.bf16.xpose.msra.mxu0 0
        %1906 = vmatprep.subr.bf16.mxu0 0
        %1907 = vmatpush2.bf16.xpose.msra.mxu0 0
        %1908 = vmatprep.subr.bf16.mxu0 0
        %1909 = vmatpush2.bf16.xpose.msra.mxu0 0
        %1910 = vmatprep.subr.bf16.mxu0 0
        %1911 = vmatpush2.bf16.xpose.msra.mxu0 0
        %1912 = vmatprep.subr.bf16.mxu0 0
        %1913 = vmatpush2.bf16.xpose.msra.mxu0 0
        %1914 = vmatprep.subr.bf16.mxu0 0
        %1915 = vmatpush2.bf16.xpose.msra.mxu0 0
        %1916 = vmatprep.subr.bf16.mxu0 0
        %1917 = vmatpush2.bf16.xpose.msra.mxu0 0
        %1918 = vmatprep.subr.bf16.mxu0 0
        %1919 = vmatpush2.bf16.xpose.msra.mxu0 0
        %1920 = vmatprep.mubr.bf16.mxu0 0
        %1921 = vmatmul.mubr.bf16.gmra.mxu0 %v1883
        %v1922 = vpop.f32.mrf.mxu0
        %v1923 = vadd.f32 0.0, %v1922
        %v1924 = vpop.f32.mrf.mxu0
        %v1925 = vpop.f32.mrf.mxu0
        %v1926 = vpop.f32.mrf.mxu0
        %1927 = vdwg.mxu0
        %v1928 = vmul.f32 %v1923, 0.17677669
        %v1929 = vsel %vm1355, %v1928, -inf
        %1930 = vmax.xlane.f32.xlu0 %v1929
        %v1931 = vpop.xlane.xlu0 %1930
        %v1932 = vsub.f32 %v1928, %v1931
        %v1933 = vmul.f32 %v1932, 1.442695
        %v1934 = vpow.pop %v1933
        %v1935 = vsel %vm1355, %v1934, 0.0
        %1936 = vadd.xlane.f32.xlu0 %v1935
        %v1937 = vpop.xlane.xlu0 %1936
        %v1938 = vrcp.pop %v1937
        %v1939 = vmul.f32 %v1934, %v1938
        %v1940 = vpack.c.bf16 %v1939, %v1939
        %1942 = vrot.lane.b32.xlu0 %v1306, 96
        %v1943 = vpop.permute.xlu0 %1942
        %v1945 = vsel %vm1355, %v1940, 0
        %v1948 = vsel %vm1371, %v1943, 0
        %1950 = vmatprep.subr.bf16.mxu0 0
        %1951 = vmatpush1.bf16.msra.mxu0 0
        %1952 = vmatprep.subr.bf16.mxu0 0
        %1953 = vmatpush1.bf16.msra.mxu0 0
        %1954 = vmatprep.subr.bf16.mxu0 0
        %1955 = vmatpush1.bf16.msra.mxu0 0
        %1956 = vmatprep.subr.bf16.mxu0 0
        %1957 = vmatpush1.bf16.msra.mxu0 0
        %1958 = vmatprep.subr.bf16.mxu0 0
        %1959 = vmatpush1.bf16.msra.mxu0 0
        %1960 = vmatprep.subr.bf16.mxu0 0
        %1961 = vmatpush1.bf16.msra.mxu0 0
        %1962 = vmatprep.subr.bf16.mxu0 0
        %1963 = vmatpush1.bf16.msra.mxu0 0
        %1964 = vmatprep.subr.bf16.mxu0 0
        %1965 = vmatpush1.bf16.msra.mxu0 %v1948
        %1966 = vmatprep.subr.bf16.mxu0 0
        %1967 = vmatpush2.bf16.msra.mxu0 0
        %1968 = vmatprep.subr.bf16.mxu0 0
        %1969 = vmatpush2.bf16.msra.mxu0 0
        %1970 = vmatprep.subr.bf16.mxu0 0
        %1971 = vmatpush2.bf16.msra.mxu0 0
        %1972 = vmatprep.subr.bf16.mxu0 0
        %1973 = vmatpush2.bf16.msra.mxu0 0
        %1974 = vmatprep.subr.bf16.mxu0 0
        %1975 = vmatpush2.bf16.msra.mxu0 0
        %1976 = vmatprep.subr.bf16.mxu0 0
        %1977 = vmatpush2.bf16.msra.mxu0 0
        %1978 = vmatprep.subr.bf16.mxu0 0
        %1979 = vmatpush2.bf16.msra.mxu0 0
        %1980 = vmatprep.subr.bf16.mxu0 0
        %1981 = vmatpush2.bf16.msra.mxu0 0
        %1982 = vmatprep.mubr.bf16.mxu0 0
        %1983 = vmatmul.mubr.bf16.gmra.mxu0 %v1945
        %v1984 = vpop.f32.mrf.mxu0
        %v1985 = vadd.f32 0.0, %v1984
        %v1986 = vpop.f32.mrf.mxu0
        %v1987 = vpop.f32.mrf.mxu0
        %v1988 = vpop.f32.mrf.mxu0
        %1989 = vdwg.mxu0
        %1991 = vrot.lane.b32.xlu0 %v1985, 32
        %v1992 = vpop.permute.xlu0 %1991
        %1994 = vst.msk [vmem:[#allocation2 + $0x8] sm:$0xff] %vm1534, %v1992
        %1995 = vrot.lane.b32.xlu0 %v1302, 64
        %v1996 = vpop.permute.xlu0 %1995
        %1997 = vrot.lane.b32.xlu0 %v1304, 64
        %v1998 = vpop.permute.xlu0 %1997
        %v2000 = vsel %vm1307, %v1996, 0
        %v2003 = vsel %vm1307, %v1998, 0
        %2005 = vmatprep.subr.bf16.mxu0 0
        %2006 = vmatpush1.bf16.xpose.msra.mxu0 0
        %2007 = vmatprep.subr.bf16.mxu0 0
        %2008 = vmatpush1.bf16.xpose.msra.mxu0 0
        %2009 = vmatprep.subr.bf16.mxu0 0
        %2010 = vmatpush1.bf16.xpose.msra.mxu0 0
        %2011 = vmatprep.subr.bf16.mxu0 0
        %2012 = vmatpush1.bf16.xpose.msra.mxu0 0
        %2013 = vmatprep.subr.bf16.mxu0 0
        %2014 = vmatpush1.bf16.xpose.msra.mxu0 0
        %2015 = vmatprep.subr.bf16.mxu0 0
        %2016 = vmatpush1.bf16.xpose.msra.mxu0 0
        %2017 = vmatprep.subr.bf16.mxu0 0
        %2018 = vmatpush1.bf16.xpose.msra.mxu0 0
        %2019 = vmatprep.subr.bf16.mxu0 0
        %2020 = vmatpush1.bf16.xpose.msra.mxu0 %v2003
        %2021 = vmatprep.subr.bf16.mxu0 0
        %2022 = vmatpush2.bf16.xpose.msra.mxu0 0
        %2023 = vmatprep.subr.bf16.mxu0 0
        %2024 = vmatpush2.bf16.xpose.msra.mxu0 0
        %2025 = vmatprep.subr.bf16.mxu0 0
        %2026 = vmatpush2.bf16.xpose.msra.mxu0 0
        %2027 = vmatprep.subr.bf16.mxu0 0
        %2028 = vmatpush2.bf16.xpose.msra.mxu0 0
        %2029 = vmatprep.subr.bf16.mxu0 0
        %2030 = vmatpush2.bf16.xpose.msra.mxu0 0
        %2031 = vmatprep.subr.bf16.mxu0 0
        %2032 = vmatpush2.bf16.xpose.msra.mxu0 0
        %2033 = vmatprep.subr.bf16.mxu0 0
        %2034 = vmatpush2.bf16.xpose.msra.mxu0 0
        %2035 = vmatprep.subr.bf16.mxu0 0
        %2036 = vmatpush2.bf16.xpose.msra.mxu0 0
        %2037 = vmatprep.mubr.bf16.mxu0 0
        %2038 = vmatmul.mubr.bf16.gmra.mxu0 %v2000
        %v2039 = vpop.f32.mrf.mxu0
        %v2040 = vadd.f32 0.0, %v2039
        %v2041 = vpop.f32.mrf.mxu0
        %v2042 = vpop.f32.mrf.mxu0
        %v2043 = vpop.f32.mrf.mxu0
        %2044 = vdwg.mxu0
        %v2045 = vmul.f32 %v2040, 0.17677669
        %v2046 = vsel %vm1355, %v2045, -inf
        %2047 = vmax.xlane.f32.xlu0 %v2046
        %v2048 = vpop.xlane.xlu0 %2047
        %v2049 = vsub.f32 %v2045, %v2048
        %v2050 = vmul.f32 %v2049, 1.442695
        %v2051 = vpow.pop %v2050
        %v2052 = vsel %vm1355, %v2051, 0.0
        %2053 = vadd.xlane.f32.xlu0 %v2052
        %v2054 = vpop.xlane.xlu0 %2053
        %v2055 = vrcp.pop %v2054
        %v2056 = vmul.f32 %v2051, %v2055
        %v2057 = vpack.c.bf16 %v2056, %v2056
        %2058 = vrot.lane.b32.xlu0 %v1306, 64
        %v2059 = vpop.permute.xlu0 %2058
        %v2061 = vsel %vm1355, %v2057, 0
        %v2064 = vsel %vm1371, %v2059, 0
        %2066 = vmatprep.subr.bf16.mxu0 0
        %2067 = vmatpush1.bf16.msra.mxu0 0
        %2068 = vmatprep.subr.bf16.mxu0 0
        %2069 = vmatpush1.bf16.msra.mxu0 0
        %2070 = vmatprep.subr.bf16.mxu0 0
        %2071 = vmatpush1.bf16.msra.mxu0 0
        %2072 = vmatprep.subr.bf16.mxu0 0
        %2073 = vmatpush1.bf16.msra.mxu0 0
        %2074 = vmatprep.subr.bf16.mxu0 0
        %2075 = vmatpush1.bf16.msra.mxu0 0
        %2076 = vmatprep.subr.bf16.mxu0 0
        %2077 = vmatpush1.bf16.msra.mxu0 0
        %2078 = vmatprep.subr.bf16.mxu0 0
        %2079 = vmatpush1.bf16.msra.mxu0 0
        %2080 = vmatprep.subr.bf16.mxu0 0
        %2081 = vmatpush1.bf16.msra.mxu0 %v2064
        %2082 = vmatprep.subr.bf16.mxu0 0
        %2083 = vmatpush2.bf16.msra.mxu0 0
        %2084 = vmatprep.subr.bf16.mxu0 0
        %2085 = vmatpush2.bf16.msra.mxu0 0
        %2086 = vmatprep.subr.bf16.mxu0 0
        %2087 = vmatpush2.bf16.msra.mxu0 0
        %2088 = vmatprep.subr.bf16.mxu0 0
        %2089 = vmatpush2.bf16.msra.mxu0 0
        %2090 = vmatprep.subr.bf16.mxu0 0
        %2091 = vmatpush2.bf16.msra.mxu0 0
        %2092 = vmatprep.subr.bf16.mxu0 0
        %2093 = vmatpush2.bf16.msra.mxu0 0
        %2094 = vmatprep.subr.bf16.mxu0 0
        %2095 = vmatpush2.bf16.msra.mxu0 0
        %2096 = vmatprep.subr.bf16.mxu0 0
        %2097 = vmatpush2.bf16.msra.mxu0 0
        %2098 = vmatprep.mubr.bf16.mxu0 0
        %2099 = vmatmul.mubr.bf16.gmra.mxu0 %v2061
        %v2100 = vpop.f32.mrf.mxu0
        %v2101 = vadd.f32 0.0, %v2100
        %v2102 = vpop.f32.mrf.mxu0
        %v2103 = vpop.f32.mrf.mxu0
        %v2104 = vpop.f32.mrf.mxu0
        %2105 = vdwg.mxu0
        %2107 = vrot.lane.b32.xlu0 %v2101, 64
        %v2108 = vpop.permute.xlu0 %2107
        %2110 = vst.msk [vmem:[#allocation2 + $0x8] sm:$0xff] %vm1651, %v2108
        %2111 = vrot.lane.b32.xlu0 %v1302, 32
        %v2112 = vpop.permute.xlu0 %2111
        %2113 = vrot.lane.b32.xlu0 %v1304, 32
        %v2114 = vpop.permute.xlu0 %2113
        %v2116 = vsel %vm1307, %v2112, 0
        %v2119 = vsel %vm1307, %v2114, 0
        %2121 = vmatprep.subr.bf16.mxu0 0
        %2122 = vmatpush1.bf16.xpose.msra.mxu0 0
        %2123 = vmatprep.subr.bf16.mxu0 0
        %2124 = vmatpush1.bf16.xpose.msra.mxu0 0
        %2125 = vmatprep.subr.bf16.mxu0 0
        %2126 = vmatpush1.bf16.xpose.msra.mxu0 0
        %2127 = vmatprep.subr.bf16.mxu0 0
        %2128 = vmatpush1.bf16.xpose.msra.mxu0 0
        %2129 = vmatprep.subr.bf16.mxu0 0
        %2130 = vmatpush1.bf16.xpose.msra.mxu0 0
        %2131 = vmatprep.subr.bf16.mxu0 0
        %2132 = vmatpush1.bf16.xpose.msra.mxu0 0
        %2133 = vmatprep.subr.bf16.mxu0 0
        %2134 = vmatpush1.bf16.xpose.msra.mxu0 0
        %2135 = vmatprep.subr.bf16.mxu0 0
        %2136 = vmatpush1.bf16.xpose.msra.mxu0 %v2119
        %2137 = vmatprep.subr.bf16.mxu0 0
        %2138 = vmatpush2.bf16.xpose.msra.mxu0 0
        %2139 = vmatprep.subr.bf16.mxu0 0
        %2140 = vmatpush2.bf16.xpose.msra.mxu0 0
        %2141 = vmatprep.subr.bf16.mxu0 0
        %2142 = vmatpush2.bf16.xpose.msra.mxu0 0
        %2143 = vmatprep.subr.bf16.mxu0 0
        %2144 = vmatpush2.bf16.xpose.msra.mxu0 0
        %2145 = vmatprep.subr.bf16.mxu0 0
        %2146 = vmatpush2.bf16.xpose.msra.mxu0 0
        %2147 = vmatprep.subr.bf16.mxu0 0
        %2148 = vmatpush2.bf16.xpose.msra.mxu0 0
        %2149 = vmatprep.subr.bf16.mxu0 0
        %2150 = vmatpush2.bf16.xpose.msra.mxu0 0
        %2151 = vmatprep.subr.bf16.mxu0 0
        %2152 = vmatpush2.bf16.xpose.msra.mxu0 0
        %2153 = vmatprep.mubr.bf16.mxu0 0
        %2154 = vmatmul.mubr.bf16.gmra.mxu0 %v2116
        %v2155 = vpop.f32.mrf.mxu0
        %v2156 = vadd.f32 0.0, %v2155
        %v2157 = vpop.f32.mrf.mxu0
        %v2158 = vpop.f32.mrf.mxu0
        %v2159 = vpop.f32.mrf.mxu0
        %2160 = vdwg.mxu0
        %v2161 = vmul.f32 %v2156, 0.17677669
        %v2162 = vsel %vm1355, %v2161, -inf
        %2163 = vmax.xlane.f32.xlu0 %v2162
        %v2164 = vpop.xlane.xlu0 %2163
        %v2165 = vsub.f32 %v2161, %v2164
        %v2166 = vmul.f32 %v2165, 1.442695
        %v2167 = vpow.pop %v2166
        %v2168 = vsel %vm1355, %v2167, 0.0
        %2169 = vadd.xlane.f32.xlu0 %v2168
        %v2170 = vpop.xlane.xlu0 %2169
        %v2171 = vrcp.pop %v2170
        %v2172 = vmul.f32 %v2167, %v2171
        %v2173 = vpack.c.bf16 %v2172, %v2172
        %2174 = vrot.lane.b32.xlu0 %v1306, 32
        %v2175 = vpop.permute.xlu0 %2174
        %v2177 = vsel %vm1355, %v2173, 0
        %v2180 = vsel %vm1371, %v2175, 0
        %2182 = vmatprep.subr.bf16.mxu0 0
        %2183 = vmatpush1.bf16.msra.mxu0 0
        %2184 = vmatprep.subr.bf16.mxu0 0
        %2185 = vmatpush1.bf16.msra.mxu0 0
        %2186 = vmatprep.subr.bf16.mxu0 0
        %2187 = vmatpush1.bf16.msra.mxu0 0
        %2188 = vmatprep.subr.bf16.mxu0 0
        %2189 = vmatpush1.bf16.msra.mxu0 0
        %2190 = vmatprep.subr.bf16.mxu0 0
        %2191 = vmatpush1.bf16.msra.mxu0 0
        %2192 = vmatprep.subr.bf16.mxu0 0
        %2193 = vmatpush1.bf16.msra.mxu0 0
        %2194 = vmatprep.subr.bf16.mxu0 0
        %2195 = vmatpush1.bf16.msra.mxu0 0
        %2196 = vmatprep.subr.bf16.mxu0 0
        %2197 = vmatpush1.bf16.msra.mxu0 %v2180
        %2198 = vmatprep.subr.bf16.mxu0 0
        %2199 = vmatpush2.bf16.msra.mxu0 0
        %2200 = vmatprep.subr.bf16.mxu0 0
        %2201 = vmatpush2.bf16.msra.mxu0 0
        %2202 = vmatprep.subr.bf16.mxu0 0
        %2203 = vmatpush2.bf16.msra.mxu0 0
        %2204 = vmatprep.subr.bf16.mxu0 0
        %2205 = vmatpush2.bf16.msra.mxu0 0
        %2206 = vmatprep.subr.bf16.mxu0 0
        %2207 = vmatpush2.bf16.msra.mxu0 0
        %2208 = vmatprep.subr.bf16.mxu0 0
        %2209 = vmatpush2.bf16.msra.mxu0 0
        %2210 = vmatprep.subr.bf16.mxu0 0
        %2211 = vmatpush2.bf16.msra.mxu0 0
        %2212 = vmatprep.subr.bf16.mxu0 0
        %2213 = vmatpush2.bf16.msra.mxu0 0
        %2214 = vmatprep.mubr.bf16.mxu0 0
        %2215 = vmatmul.mubr.bf16.gmra.mxu0 %v2177
        %v2216 = vpop.f32.mrf.mxu0
        %v2217 = vadd.f32 0.0, %v2216
        %v2218 = vpop.f32.mrf.mxu0
        %v2219 = vpop.f32.mrf.mxu0
        %v2220 = vpop.f32.mrf.mxu0
        %2221 = vdwg.mxu0
        %2223 = vrot.lane.b32.xlu0 %v2217, 96
        %v2224 = vpop.permute.xlu0 %2223
        %2226 = vst.msk [vmem:[#allocation2 + $0x8] sm:$0xff] %vm1768, %v2224
        %v2227 = vld [vmem:[#allocation2] sm:$0xff]
        %v2228 = vld [vmem:[#allocation2 + $0x8] sm:$0xff]
        %v2229 = vpack.c.bf16 %v2227, %v2227
        %v2230 = vpack.c.bf16 %v2228, %v2228
        %v2231 = vld [vmem:[#allocation8] sm:$0xff]
        %v2232 = vld [vmem:[#allocation8 + $0x8] sm:$0xff]
        %v2233 = vld [vmem:[#allocation8 + $0x10] sm:$0xff]
        %v2234 = vld [vmem:[#allocation8 + $0x18] sm:$0xff]
        %v2235 = vld [vmem:[#allocation8 + $0x20] sm:$0xff]
        %v2236 = vld [vmem:[#allocation8 + $0x28] sm:$0xff]
        %v2237 = vld [vmem:[#allocation8 + $0x30] sm:$0xff]
        %v2238 = vld [vmem:[#allocation8 + $0x38] sm:$0xff]
        %v2239 = vld [vmem:[#allocation8 + $0x40] sm:$0xff]
        %v2240 = vld [vmem:[#allocation8 + $0x48] sm:$0xff]
        %v2241 = vld [vmem:[#allocation8 + $0x50] sm:$0xff]
        %v2242 = vld [vmem:[#allocation8 + $0x58] sm:$0xff]
        %v2243 = vld [vmem:[#allocation8 + $0x60] sm:$0xff]
        %v2244 = vld [vmem:[#allocation8 + $0x68] sm:$0xff]
        %v2245 = vld [vmem:[#allocation8 + $0x70] sm:$0xff]
        %v2246 = vld [vmem:[#allocation8 + $0x78] sm:$0xff]
        %v2247 = vld [vmem:[#allocation8 + $0x80] sm:$0xff]
        %v2248 = vld [vmem:[#allocation8 + $0x88] sm:$0xff]
        %v2249 = vld [vmem:[#allocation8 + $0x90] sm:$0xff]
        %v2250 = vld [vmem:[#allocation8 + $0x98] sm:$0xff]
        %v2251 = vld [vmem:[#allocation8 + $0xa0] sm:$0xff]
        %v2252 = vld [vmem:[#allocation8 + $0xa8] sm:$0xff]
        %v2253 = vld [vmem:[#allocation8 + $0xb0] sm:$0xff]
        %v2254 = vld [vmem:[#allocation8 + $0xb8] sm:$0xff]
        %v2255 = vld [vmem:[#allocation8 + $0xc0] sm:$0xff]
        %v2256 = vld [vmem:[#allocation8 + $0xc8] sm:$0xff]
        %v2257 = vld [vmem:[#allocation8 + $0xd0] sm:$0xff]
        %v2258 = vld [vmem:[#allocation8 + $0xd8] sm:$0xff]
        %v2259 = vld [vmem:[#allocation8 + $0xe0] sm:$0xff]
        %v2260 = vld [vmem:[#allocation8 + $0xe8] sm:$0xff]
        %v2261 = vld [vmem:[#allocation8 + $0xf0] sm:$0xff]
        %v2262 = vld [vmem:[#allocation8 + $0xf8] sm:$0xff]
        %v2263 = vld [vmem:[%s4] sm:$0x3]
        %v2265 = vlaneseq
        %v2266 = vshrl.u32 %v2265, 7
        %v2267 = vsub.s32 0, %v2266
        %v2268 = vrot.slane %v2263, %v2267
        %v2269 = vlaneseq
        %v2270 = vshrl.u32 %v2269, 7
        %v2271 = vsub.s32 1, %v2270
        %v2272 = vrot.slane %v2263, %v2271
        %v2307 = vunpack.c.l.b16 %v2231
        %v2308 = vunpack.c.h.b16 %v2231
        %v2309 = vunpack.c.l.b16 %v2232
        %v2310 = vunpack.c.h.b16 %v2232
        %v2311 = vunpack.c.l.b16 %v2233
        %v2312 = vunpack.c.h.b16 %v2233
        %v2313 = vunpack.c.l.b16 %v2234
        %v2314 = vunpack.c.h.b16 %v2234
        %v2315 = vunpack.c.l.b16 %v2235
        %v2316 = vunpack.c.h.b16 %v2235
        %v2317 = vunpack.c.l.b16 %v2236
        %v2318 = vunpack.c.h.b16 %v2236
        %v2319 = vunpack.c.l.b16 %v2237
        %v2320 = vunpack.c.h.b16 %v2237
        %v2321 = vunpack.c.l.b16 %v2238
        %v2322 = vunpack.c.h.b16 %v2238
        %v2323 = vunpack.c.l.b16 %v2239
        %v2324 = vunpack.c.h.b16 %v2239
        %v2325 = vunpack.c.l.b16 %v2240
        %v2326 = vunpack.c.h.b16 %v2240
        %v2327 = vunpack.c.l.b16 %v2241
        %v2328 = vunpack.c.h.b16 %v2241
        %v2329 = vunpack.c.l.b16 %v2242
        %v2330 = vunpack.c.h.b16 %v2242
        %v2331 = vunpack.c.l.b16 %v2243
        %v2332 = vunpack.c.h.b16 %v2243
        %v2333 = vunpack.c.l.b16 %v2244
        %v2334 = vunpack.c.h.b16 %v2244
        %v2335 = vunpack.c.l.b16 %v2245
        %v2336 = vunpack.c.h.b16 %v2245
        %v2337 = vunpack.c.l.b16 %v2246
        %v2338 = vunpack.c.h.b16 %v2246
        %v2339 = vunpack.c.l.b16 %v2247
        %v2340 = vunpack.c.h.b16 %v2247
        %v2341 = vunpack.c.l.b16 %v2248
        %v2342 = vunpack.c.h.b16 %v2248
        %v2343 = vunpack.c.l.b16 %v2249
        %v2344 = vunpack.c.h.b16 %v2249
        %v2345 = vunpack.c.l.b16 %v2250
        %v2346 = vunpack.c.h.b16 %v2250
        %v2347 = vunpack.c.l.b16 %v2251
        %v2348 = vunpack.c.h.b16 %v2251
        %v2349 = vunpack.c.l.b16 %v2252
        %v2350 = vunpack.c.h.b16 %v2252
        %v2351 = vunpack.c.l.b16 %v2253
        %v2352 = vunpack.c.h.b16 %v2253
        %v2353 = vunpack.c.l.b16 %v2254
        %v2354 = vunpack.c.h.b16 %v2254
        %v2355 = vunpack.c.l.b16 %v2255
        %v2356 = vunpack.c.h.b16 %v2255
        %v2357 = vunpack.c.l.b16 %v2256
        %v2358 = vunpack.c.h.b16 %v2256
        %v2359 = vunpack.c.l.b16 %v2257
        %v2360 = vunpack.c.h.b16 %v2257
        %v2361 = vunpack.c.l.b16 %v2258
        %v2362 = vunpack.c.h.b16 %v2258
        %v2363 = vunpack.c.l.b16 %v2259
        %v2364 = vunpack.c.h.b16 %v2259
        %v2365 = vunpack.c.l.b16 %v2260
        %v2366 = vunpack.c.h.b16 %v2260
        %v2367 = vunpack.c.l.b16 %v2261
        %v2368 = vunpack.c.h.b16 %v2261
        %v2369 = vunpack.c.l.b16 %v2262
        %v2370 = vunpack.c.h.b16 %v2262
        %v2371 = vpack.c.b16 %v2309, %v2307
        %v2372 = vpack.c.b16 %v2310, %v2308
        %v2373 = vpack.c.b16 %v2313, %v2311
        %v2374 = vpack.c.b16 %v2314, %v2312
        %v2375 = vpack.c.b16 %v2317, %v2315
        %v2376 = vpack.c.b16 %v2318, %v2316
        %v2377 = vpack.c.b16 %v2321, %v2319
        %v2378 = vpack.c.b16 %v2322, %v2320
        %v2379 = vpack.c.b16 %v2325, %v2323
        %v2380 = vpack.c.b16 %v2326, %v2324
        %v2381 = vpack.c.b16 %v2329, %v2327
        %v2382 = vpack.c.b16 %v2330, %v2328
        %v2383 = vpack.c.b16 %v2333, %v2331
        %v2384 = vpack.c.b16 %v2334, %v2332
        %v2385 = vpack.c.b16 %v2337, %v2335
        %v2386 = vpack.c.b16 %v2338, %v2336
        %v2387 = vpack.c.b16 %v2341, %v2339
        %v2388 = vpack.c.b16 %v2342, %v2340
        %v2389 = vpack.c.b16 %v2345, %v2343
        %v2390 = vpack.c.b16 %v2346, %v2344
        %v2391 = vpack.c.b16 %v2349, %v2347
        %v2392 = vpack.c.b16 %v2350, %v2348
        %v2393 = vpack.c.b16 %v2353, %v2351
        %v2394 = vpack.c.b16 %v2354, %v2352
        %v2395 = vpack.c.b16 %v2357, %v2355
        %v2396 = vpack.c.b16 %v2358, %v2356
        %v2397 = vpack.c.b16 %v2361, %v2359
        %v2398 = vpack.c.b16 %v2362, %v2360
        %v2399 = vpack.c.b16 %v2365, %v2363
        %v2400 = vpack.c.b16 %v2366, %v2364
        %v2401 = vpack.c.b16 %v2369, %v2367
        %v2402 = vpack.c.b16 %v2370, %v2368
        %2435 = vmatprep.subr.bf16.mxu0 %v2386
        %2436 = vmatpush1.bf16.msra.mxu0 %v2385
        %2437 = vmatprep.subr.bf16.mxu0 %v2384
        %2438 = vmatpush1.bf16.msra.mxu0 %v2383
        %2439 = vmatprep.subr.bf16.mxu0 %v2382
        %2440 = vmatpush1.bf16.msra.mxu0 %v2381
        %2441 = vmatprep.subr.bf16.mxu0 %v2380
        %2442 = vmatpush1.bf16.msra.mxu0 %v2379
        %2443 = vmatprep.subr.bf16.mxu0 %v2378
        %2444 = vmatpush1.bf16.msra.mxu0 %v2377
        %2445 = vmatprep.subr.bf16.mxu0 %v2376
        %2446 = vmatpush1.bf16.msra.mxu0 %v2375
        %2447 = vmatprep.subr.bf16.mxu0 %v2374
        %2448 = vmatpush1.bf16.msra.mxu0 %v2373
        %2449 = vmatprep.subr.bf16.mxu0 %v2372
        %2450 = vmatpush1.bf16.msra.mxu0 %v2371
        %2451 = vmatprep.subr.bf16.mxu0 %v2402
        %2452 = vmatpush2.bf16.msra.mxu0 %v2401
        %2453 = vmatprep.subr.bf16.mxu0 %v2400
        %2454 = vmatpush2.bf16.msra.mxu0 %v2399
        %2455 = vmatprep.subr.bf16.mxu0 %v2398
        %2456 = vmatpush2.bf16.msra.mxu0 %v2397
        %2457 = vmatprep.subr.bf16.mxu0 %v2396
        %2458 = vmatpush2.bf16.msra.mxu0 %v2395
        %2459 = vmatprep.subr.bf16.mxu0 %v2394
        %2460 = vmatpush2.bf16.msra.mxu0 %v2393
        %2461 = vmatprep.subr.bf16.mxu0 %v2392
        %2462 = vmatpush2.bf16.msra.mxu0 %v2391
        %2463 = vmatprep.subr.bf16.mxu0 %v2390
        %2464 = vmatpush2.bf16.msra.mxu0 %v2389
        %2465 = vmatprep.subr.bf16.mxu0 %v2388
        %2466 = vmatpush2.bf16.msra.mxu0 %v2387
        %2467 = vmatprep.mubr.bf16.mxu0 %v2230
        %2468 = vmatmul.mubr.bf16.gmra.mxu0 %v2229
        %v2469 = vpop.f32.mrf.mxu0
        %v2470 = vadd.f32 %v2268, %v2469
        %v2471 = vpop.f32.mrf.mxu0
        %v2472 = vadd.f32 %v2272, %v2471
        %v2473 = vpop.f32.mrf.mxu0
        %v2474 = vpop.f32.mrf.mxu0
        %2475 = vdwg.mxu0
        %v2476 = vadd.f32 %v566, %v2470
        %v2477 = vadd.f32 %v567, %v2472
        %v2478 = vld [vmem:[%s5] sm:$0x3]
        %v2479 = vld [vmem:[#allocation9] sm:$0x3]
        %v2480 = vadd.f32 %v2476, %v2477
        %2481 = vadd.xlane.f32.xlu0 %v2480
        %v2482 = vpop.xlane.xlu0 %2481
        %v2483 = vrcp.pop 256.0
        %v2484 = vmul.f32 %v2482, %v2483
        %v2485 = vsub.f32 %v2476, %v2484
        %v2486 = vsub.f32 %v2477, %v2484
        %v2487 = vmul.f32 %v2485, %v2485
        %v2488 = vmul.f32 %v2486, %v2486
        %v2489 = vadd.f32 %v2487, %v2488
        %2490 = vadd.xlane.f32.xlu0 %v2489
        %v2491 = vpop.xlane.xlu0 %2490
        %v2492 = vmul.f32 %v2491, %v2483
        %v2493 = vadd.f32 %v2492, 1e-05
        %v2494 = vrsqrt.pop %v2493
        %v2495 = vmul.f32 %v2485, %v2494
        %v2496 = vmul.f32 %v2486, %v2494
        %v2498 = vlaneseq
        %v2499 = vshrl.u32 %v2498, 7
        %v2500 = vsub.s32 0, %v2499
        %v2501 = vrot.slane %v2478, %v2500
        %v2502 = vlaneseq
        %v2503 = vshrl.u32 %v2502, 7
        %v2504 = vsub.s32 1, %v2503
        %v2505 = vrot.slane %v2478, %v2504
        %v2508 = vmul.f32 %v2495, %v2501
        %v2509 = vmul.f32 %v2496, %v2505
        %v2511 = vlaneseq
        %v2512 = vshrl.u32 %v2511, 7
        %v2513 = vsub.s32 0, %v2512
        %v2514 = vrot.slane %v2479, %v2513
        %v2515 = vlaneseq
        %v2516 = vshrl.u32 %v2515, 7
        %v2517 = vsub.s32 1, %v2516
        %v2518 = vrot.slane %v2479, %v2517
        %v2521 = vadd.f32 %v2508, %v2514
        %v2522 = vadd.f32 %v2509, %v2518
        %v2523 = vpack.c.bf16 %v2521, %v2521
        %v2524 = vpack.c.bf16 %v2522, %v2522
        %v2525 = vld [vmem:[#allocation11] sm:$0xff]
        %v2526 = vld [vmem:[#allocation11 + $0x8] sm:$0xff]
        %v2527 = vld [vmem:[#allocation11 + $0x10] sm:$0xff]
        %v2528 = vld [vmem:[#allocation11 + $0x18] sm:$0xff]
        %v2529 = vld [vmem:[#allocation11 + $0x20] sm:$0xff]
        %v2530 = vld [vmem:[#allocation11 + $0x28] sm:$0xff]
        %v2531 = vld [vmem:[#allocation11 + $0x30] sm:$0xff]
        %v2532 = vld [vmem:[#allocation11 + $0x38] sm:$0xff]
        %v2533 = vld [vmem:[#allocation11 + $0x40] sm:$0xff]
        %v2534 = vld [vmem:[#allocation11 + $0x48] sm:$0xff]
        %v2535 = vld [vmem:[#allocation11 + $0x50] sm:$0xff]
        %v2536 = vld [vmem:[#allocation11 + $0x58] sm:$0xff]
        %v2537 = vld [vmem:[#allocation11 + $0x60] sm:$0xff]
        %v2538 = vld [vmem:[#allocation11 + $0x68] sm:$0xff]
        %v2539 = vld [vmem:[#allocation11 + $0x70] sm:$0xff]
        %v2540 = vld [vmem:[#allocation11 + $0x78] sm:$0xff]
        %v2541 = vld [vmem:[#allocation11 + $0x80] sm:$0xff]
        %v2542 = vld [vmem:[#allocation11 + $0x88] sm:$0xff]
        %v2543 = vld [vmem:[#allocation11 + $0x90] sm:$0xff]
        %v2544 = vld [vmem:[#allocation11 + $0x98] sm:$0xff]
        %v2545 = vld [vmem:[#allocation11 + $0xa0] sm:$0xff]
        %v2546 = vld [vmem:[#allocation11 + $0xa8] sm:$0xff]
        %v2547 = vld [vmem:[#allocation11 + $0xb0] sm:$0xff]
        %v2548 = vld [vmem:[#allocation11 + $0xb8] sm:$0xff]
        %v2549 = vld [vmem:[#allocation11 + $0xc0] sm:$0xff]
        %v2550 = vld [vmem:[#allocation11 + $0xc8] sm:$0xff]
        %v2551 = vld [vmem:[#allocation11 + $0xd0] sm:$0xff]
        %v2552 = vld [vmem:[#allocation11 + $0xd8] sm:$0xff]
        %v2553 = vld [vmem:[#allocation11 + $0xe0] sm:$0xff]
        %v2554 = vld [vmem:[#allocation11 + $0xe8] sm:$0xff]
        %v2555 = vld [vmem:[#allocation11 + $0xf0] sm:$0xff]
        %v2556 = vld [vmem:[#allocation11 + $0xf8] sm:$0xff]
        %v2557 = vld [vmem:[#allocation11 + $0x100] sm:$0xff]
        %v2558 = vld [vmem:[#allocation11 + $0x108] sm:$0xff]
        %v2559 = vld [vmem:[#allocation11 + $0x110] sm:$0xff]
        %v2560 = vld [vmem:[#allocation11 + $0x118] sm:$0xff]
        %v2561 = vld [vmem:[#allocation11 + $0x120] sm:$0xff]
        %v2562 = vld [vmem:[#allocation11 + $0x128] sm:$0xff]
        %v2563 = vld [vmem:[#allocation11 + $0x130] sm:$0xff]
        %v2564 = vld [vmem:[#allocation11 + $0x138] sm:$0xff]
        %v2565 = vld [vmem:[#allocation11 + $0x140] sm:$0xff]
        %v2566 = vld [vmem:[#allocation11 + $0x148] sm:$0xff]
        %v2567 = vld [vmem:[#allocation11 + $0x150] sm:$0xff]
        %v2568 = vld [vmem:[#allocation11 + $0x158] sm:$0xff]
        %v2569 = vld [vmem:[#allocation11 + $0x160] sm:$0xff]
        %v2570 = vld [vmem:[#allocation11 + $0x168] sm:$0xff]
        %v2571 = vld [vmem:[#allocation11 + $0x170] sm:$0xff]
        %v2572 = vld [vmem:[#allocation11 + $0x178] sm:$0xff]
        %v2573 = vld [vmem:[#allocation11 + $0x180] sm:$0xff]
        %v2574 = vld [vmem:[#allocation11 + $0x188] sm:$0xff]
        %v2575 = vld [vmem:[#allocation11 + $0x190] sm:$0xff]
        %v2576 = vld [vmem:[#allocation11 + $0x198] sm:$0xff]
        %v2577 = vld [vmem:[#allocation11 + $0x1a0] sm:$0xff]
        %v2578 = vld [vmem:[#allocation11 + $0x1a8] sm:$0xff]
        %v2579 = vld [vmem:[#allocation11 + $0x1b0] sm:$0xff]
        %v2580 = vld [vmem:[#allocation11 + $0x1b8] sm:$0xff]
        %v2581 = vld [vmem:[#allocation11 + $0x1c0] sm:$0xff]
        %v2582 = vld [vmem:[#allocation11 + $0x1c8] sm:$0xff]
        %v2583 = vld [vmem:[#allocation11 + $0x1d0] sm:$0xff]
        %v2584 = vld [vmem:[#allocation11 + $0x1d8] sm:$0xff]
        %v2585 = vld [vmem:[#allocation11 + $0x1e0] sm:$0xff]
        %v2586 = vld [vmem:[#allocation11 + $0x1e8] sm:$0xff]
        %v2587 = vld [vmem:[#allocation11 + $0x1f0] sm:$0xff]
        %v2588 = vld [vmem:[#allocation11 + $0x1f8] sm:$0xff]
        %v2589 = vld [vmem:[#allocation11 + $0x200] sm:$0xff]
        %v2590 = vld [vmem:[#allocation11 + $0x208] sm:$0xff]
        %v2591 = vld [vmem:[#allocation11 + $0x210] sm:$0xff]
        %v2592 = vld [vmem:[#allocation11 + $0x218] sm:$0xff]
        %v2593 = vld [vmem:[#allocation11 + $0x220] sm:$0xff]
        %v2594 = vld [vmem:[#allocation11 + $0x228] sm:$0xff]
        %v2595 = vld [vmem:[#allocation11 + $0x230] sm:$0xff]
        %v2596 = vld [vmem:[#allocation11 + $0x238] sm:$0xff]
        %v2597 = vld [vmem:[#allocation11 + $0x240] sm:$0xff]
        %v2598 = vld [vmem:[#allocation11 + $0x248] sm:$0xff]
        %v2599 = vld [vmem:[#allocation11 + $0x250] sm:$0xff]
        %v2600 = vld [vmem:[#allocation11 + $0x258] sm:$0xff]
        %v2601 = vld [vmem:[#allocation11 + $0x260] sm:$0xff]
        %v2602 = vld [vmem:[#allocation11 + $0x268] sm:$0xff]
        %v2603 = vld [vmem:[#allocation11 + $0x270] sm:$0xff]
        %v2604 = vld [vmem:[#allocation11 + $0x278] sm:$0xff]
        %v2605 = vld [vmem:[#allocation11 + $0x280] sm:$0xff]
        %v2606 = vld [vmem:[#allocation11 + $0x288] sm:$0xff]
        %v2607 = vld [vmem:[#allocation11 + $0x290] sm:$0xff]
        %v2608 = vld [vmem:[#allocation11 + $0x298] sm:$0xff]
        %v2609 = vld [vmem:[#allocation11 + $0x2a0] sm:$0xff]
        %v2610 = vld [vmem:[#allocation11 + $0x2a8] sm:$0xff]
        %v2611 = vld [vmem:[#allocation11 + $0x2b0] sm:$0xff]
        %v2612 = vld [vmem:[#allocation11 + $0x2b8] sm:$0xff]
        %v2613 = vld [vmem:[#allocation11 + $0x2c0] sm:$0xff]
        %v2614 = vld [vmem:[#allocation11 + $0x2c8] sm:$0xff]
        %v2615 = vld [vmem:[#allocation11 + $0x2d0] sm:$0xff]
        %v2616 = vld [vmem:[#allocation11 + $0x2d8] sm:$0xff]
        %v2617 = vld [vmem:[#allocation11 + $0x2e0] sm:$0xff]
        %v2618 = vld [vmem:[#allocation11 + $0x2e8] sm:$0xff]
        %v2619 = vld [vmem:[#allocation11 + $0x2f0] sm:$0xff]
        %v2620 = vld [vmem:[#allocation11 + $0x2f8] sm:$0xff]
        %v2621 = vld [vmem:[#allocation11 + $0x300] sm:$0xff]
        %v2622 = vld [vmem:[#allocation11 + $0x308] sm:$0xff]
        %v2623 = vld [vmem:[#allocation11 + $0x310] sm:$0xff]
        %v2624 = vld [vmem:[#allocation11 + $0x318] sm:$0xff]
        %v2625 = vld [vmem:[#allocation11 + $0x320] sm:$0xff]
        %v2626 = vld [vmem:[#allocation11 + $0x328] sm:$0xff]
        %v2627 = vld [vmem:[#allocation11 + $0x330] sm:$0xff]
        %v2628 = vld [vmem:[#allocation11 + $0x338] sm:$0xff]
        %v2629 = vld [vmem:[#allocation11 + $0x340] sm:$0xff]
        %v2630 = vld [vmem:[#allocation11 + $0x348] sm:$0xff]
        %v2631 = vld [vmem:[#allocation11 + $0x350] sm:$0xff]
        %v2632 = vld [vmem:[#allocation11 + $0x358] sm:$0xff]
        %v2633 = vld [vmem:[#allocation11 + $0x360] sm:$0xff]
        %v2634 = vld [vmem:[#allocation11 + $0x368] sm:$0xff]
        %v2635 = vld [vmem:[#allocation11 + $0x370] sm:$0xff]
        %v2636 = vld [vmem:[#allocation11 + $0x378] sm:$0xff]
        %v2637 = vld [vmem:[#allocation11 + $0x380] sm:$0xff]
        %v2638 = vld [vmem:[#allocation11 + $0x388] sm:$0xff]
        %v2639 = vld [vmem:[#allocation11 + $0x390] sm:$0xff]
        %v2640 = vld [vmem:[#allocation11 + $0x398] sm:$0xff]
        %v2641 = vld [vmem:[#allocation11 + $0x3a0] sm:$0xff]
        %v2642 = vld [vmem:[#allocation11 + $0x3a8] sm:$0xff]
        %v2643 = vld [vmem:[#allocation11 + $0x3b0] sm:$0xff]
        %v2644 = vld [vmem:[#allocation11 + $0x3b8] sm:$0xff]
        %v2645 = vld [vmem:[#allocation11 + $0x3c0] sm:$0xff]
        %v2646 = vld [vmem:[#allocation11 + $0x3c8] sm:$0xff]
        %v2647 = vld [vmem:[#allocation11 + $0x3d0] sm:$0xff]
        %v2648 = vld [vmem:[#allocation11 + $0x3d8] sm:$0xff]
        %v2649 = vld [vmem:[#allocation11 + $0x3e0] sm:$0xff]
        %v2650 = vld [vmem:[#allocation11 + $0x3e8] sm:$0xff]
        %v2651 = vld [vmem:[#allocation11 + $0x3f0] sm:$0xff]
        %v2652 = vld [vmem:[#allocation11 + $0x3f8] sm:$0xff]
        %v2653 = vld [vmem:[#allocation12] sm:$0xff]
        %v2655 = vlaneseq
        %v2656 = vshrl.u32 %v2655, 7
        %v2657 = vsub.s32 0, %v2656
        %v2658 = vrot.slane %v2653, %v2657
        %v2659 = vlaneseq
        %v2660 = vshrl.u32 %v2659, 7
        %v2661 = vsub.s32 1, %v2660
        %v2662 = vrot.slane %v2653, %v2661
        %v2663 = vlaneseq
        %v2664 = vshrl.u32 %v2663, 7
        %v2665 = vsub.s32 2, %v2664
        %v2666 = vrot.slane %v2653, %v2665
        %v2667 = vlaneseq
        %v2668 = vshrl.u32 %v2667, 7
        %v2669 = vsub.s32 3, %v2668
        %v2670 = vrot.slane %v2653, %v2669
        %v2671 = vlaneseq
        %v2672 = vshrl.u32 %v2671, 7
        %v2673 = vsub.s32 4, %v2672
        %v2674 = vrot.slane %v2653, %v2673
        %v2675 = vlaneseq
        %v2676 = vshrl.u32 %v2675, 7
        %v2677 = vsub.s32 5, %v2676
        %v2678 = vrot.slane %v2653, %v2677
        %v2679 = vlaneseq
        %v2680 = vshrl.u32 %v2679, 7
        %v2681 = vsub.s32 6, %v2680
        %v2682 = vrot.slane %v2653, %v2681
        %v2683 = vlaneseq
        %v2684 = vshrl.u32 %v2683, 7
        %v2685 = vsub.s32 7, %v2684
        %v2686 = vrot.slane %v2653, %v2685
        %v2823 = vunpack.c.l.b16 %v2525
        %v2824 = vunpack.c.h.b16 %v2525
        %v2825 = vunpack.c.l.b16 %v2526
        %v2826 = vunpack.c.h.b16 %v2526
        %v2827 = vunpack.c.l.b16 %v2527
        %v2828 = vunpack.c.h.b16 %v2527
        %v2829 = vunpack.c.l.b16 %v2528
        %v2830 = vunpack.c.h.b16 %v2528
        %v2831 = vunpack.c.l.b16 %v2529
        %v2832 = vunpack.c.h.b16 %v2529
        %v2833 = vunpack.c.l.b16 %v2530
        %v2834 = vunpack.c.h.b16 %v2530
        %v2835 = vunpack.c.l.b16 %v2531
        %v2836 = vunpack.c.h.b16 %v2531
        %v2837 = vunpack.c.l.b16 %v2532
        %v2838 = vunpack.c.h.b16 %v2532
        %v2839 = vunpack.c.l.b16 %v2533
        %v2840 = vunpack.c.h.b16 %v2533
        %v2841 = vunpack.c.l.b16 %v2534
        %v2842 = vunpack.c.h.b16 %v2534
        %v2843 = vunpack.c.l.b16 %v2535
        %v2844 = vunpack.c.h.b16 %v2535
        %v2845 = vunpack.c.l.b16 %v2536
        %v2846 = vunpack.c.h.b16 %v2536
        %v2847 = vunpack.c.l.b16 %v2537
        %v2848 = vunpack.c.h.b16 %v2537
        %v2849 = vunpack.c.l.b16 %v2538
        %v2850 = vunpack.c.h.b16 %v2538
        %v2851 = vunpack.c.l.b16 %v2539
        %v2852 = vunpack.c.h.b16 %v2539
        %v2853 = vunpack.c.l.b16 %v2540
        %v2854 = vunpack.c.h.b16 %v2540
        %v2855 = vunpack.c.l.b16 %v2541
        %v2856 = vunpack.c.h.b16 %v2541
        %v2857 = vunpack.c.l.b16 %v2542
        %v2858 = vunpack.c.h.b16 %v2542
        %v2859 = vunpack.c.l.b16 %v2543
        %v2860 = vunpack.c.h.b16 %v2543
        %v2861 = vunpack.c.l.b16 %v2544
        %v2862 = vunpack.c.h.b16 %v2544
        %v2863 = vunpack.c.l.b16 %v2545
        %v2864 = vunpack.c.h.b16 %v2545
        %v2865 = vunpack.c.l.b16 %v2546
        %v2866 = vunpack.c.h.b16 %v2546
        %v2867 = vunpack.c.l.b16 %v2547
        %v2868 = vunpack.c.h.b16 %v2547
        %v2869 = vunpack.c.l.b16 %v2548
        %v2870 = vunpack.c.h.b16 %v2548
        %v2871 = vunpack.c.l.b16 %v2549
        %v2872 = vunpack.c.h.b16 %v2549
        %v2873 = vunpack.c.l.b16 %v2550
        %v2874 = vunpack.c.h.b16 %v2550
        %v2875 = vunpack.c.l.b16 %v2551
        %v2876 = vunpack.c.h.b16 %v2551
        %v2877 = vunpack.c.l.b16 %v2552
        %v2878 = vunpack.c.h.b16 %v2552
        %v2879 = vunpack.c.l.b16 %v2553
        %v2880 = vunpack.c.h.b16 %v2553
        %v2881 = vunpack.c.l.b16 %v2554
        %v2882 = vunpack.c.h.b16 %v2554
        %v2883 = vunpack.c.l.b16 %v2555
        %v2884 = vunpack.c.h.b16 %v2555
        %v2885 = vunpack.c.l.b16 %v2556
        %v2886 = vunpack.c.h.b16 %v2556
        %v2887 = vunpack.c.l.b16 %v2557
        %v2888 = vunpack.c.h.b16 %v2557
        %v2889 = vunpack.c.l.b16 %v2558
        %v2890 = vunpack.c.h.b16 %v2558
        %v2891 = vunpack.c.l.b16 %v2559
        %v2892 = vunpack.c.h.b16 %v2559
        %v2893 = vunpack.c.l.b16 %v2560
        %v2894 = vunpack.c.h.b16 %v2560
        %v2895 = vunpack.c.l.b16 %v2561
        %v2896 = vunpack.c.h.b16 %v2561
        %v2897 = vunpack.c.l.b16 %v2562
        %v2898 = vunpack.c.h.b16 %v2562
        %v2899 = vunpack.c.l.b16 %v2563
        %v2900 = vunpack.c.h.b16 %v2563
        %v2901 = vunpack.c.l.b16 %v2564
        %v2902 = vunpack.c.h.b16 %v2564
        %v2903 = vunpack.c.l.b16 %v2565
        %v2904 = vunpack.c.h.b16 %v2565
        %v2905 = vunpack.c.l.b16 %v2566
        %v2906 = vunpack.c.h.b16 %v2566
        %v2907 = vunpack.c.l.b16 %v2567
        %v2908 = vunpack.c.h.b16 %v2567
        %v2909 = vunpack.c.l.b16 %v2568
        %v2910 = vunpack.c.h.b16 %v2568
        %v2911 = vunpack.c.l.b16 %v2569
        %v2912 = vunpack.c.h.b16 %v2569
        %v2913 = vunpack.c.l.b16 %v2570
        %v2914 = vunpack.c.h.b16 %v2570
        %v2915 = vunpack.c.l.b16 %v2571
        %v2916 = vunpack.c.h.b16 %v2571
        %v2917 = vunpack.c.l.b16 %v2572
        %v2918 = vunpack.c.h.b16 %v2572
        %v2919 = vunpack.c.l.b16 %v2573
        %v2920 = vunpack.c.h.b16 %v2573
        %v2921 = vunpack.c.l.b16 %v2574
        %v2922 = vunpack.c.h.b16 %v2574
        %v2923 = vunpack.c.l.b16 %v2575
        %v2924 = vunpack.c.h.b16 %v2575
        %v2925 = vunpack.c.l.b16 %v2576
        %v2926 = vunpack.c.h.b16 %v2576
        %v2927 = vunpack.c.l.b16 %v2577
        %v2928 = vunpack.c.h.b16 %v2577
        %v2929 = vunpack.c.l.b16 %v2578
        %v2930 = vunpack.c.h.b16 %v2578
        %v2931 = vunpack.c.l.b16 %v2579
        %v2932 = vunpack.c.h.b16 %v2579
        %v2933 = vunpack.c.l.b16 %v2580
        %v2934 = vunpack.c.h.b16 %v2580
        %v2935 = vunpack.c.l.b16 %v2581
        %v2936 = vunpack.c.h.b16 %v2581
        %v2937 = vunpack.c.l.b16 %v2582
        %v2938 = vunpack.c.h.b16 %v2582
        %v2939 = vunpack.c.l.b16 %v2583
        %v2940 = vunpack.c.h.b16 %v2583
        %v2941 = vunpack.c.l.b16 %v2584
        %v2942 = vunpack.c.h.b16 %v2584
        %v2943 = vunpack.c.l.b16 %v2585
        %v2944 = vunpack.c.h.b16 %v2585
        %v2945 = vunpack.c.l.b16 %v2586
        %v2946 = vunpack.c.h.b16 %v2586
        %v2947 = vunpack.c.l.b16 %v2587
        %v2948 = vunpack.c.h.b16 %v2587
        %v2949 = vunpack.c.l.b16 %v2588
        %v2950 = vunpack.c.h.b16 %v2588
        %v2951 = vunpack.c.l.b16 %v2589
        %v2952 = vunpack.c.h.b16 %v2589
        %v2953 = vunpack.c.l.b16 %v2590
        %v2954 = vunpack.c.h.b16 %v2590
        %v2955 = vunpack.c.l.b16 %v2591
        %v2956 = vunpack.c.h.b16 %v2591
        %v2957 = vunpack.c.l.b16 %v2592
        %v2958 = vunpack.c.h.b16 %v2592
        %v2959 = vunpack.c.l.b16 %v2593
        %v2960 = vunpack.c.h.b16 %v2593
        %v2961 = vunpack.c.l.b16 %v2594
        %v2962 = vunpack.c.h.b16 %v2594
        %v2963 = vunpack.c.l.b16 %v2595
        %v2964 = vunpack.c.h.b16 %v2595
        %v2965 = vunpack.c.l.b16 %v2596
        %v2966 = vunpack.c.h.b16 %v2596
        %v2967 = vunpack.c.l.b16 %v2597
        %v2968 = vunpack.c.h.b16 %v2597
        %v2969 = vunpack.c.l.b16 %v2598
        %v2970 = vunpack.c.h.b16 %v2598
        %v2971 = vunpack.c.l.b16 %v2599
        %v2972 = vunpack.c.h.b16 %v2599
        %v2973 = vunpack.c.l.b16 %v2600
        %v2974 = vunpack.c.h.b16 %v2600
        %v2975 = vunpack.c.l.b16 %v2601
        %v2976 = vunpack.c.h.b16 %v2601
        %v2977 = vunpack.c.l.b16 %v2602
        %v2978 = vunpack.c.h.b16 %v2602
        %v2979 = vunpack.c.l.b16 %v2603
        %v2980 = vunpack.c.h.b16 %v2603
        %v2981 = vunpack.c.l.b16 %v2604
        %v2982 = vunpack.c.h.b16 %v2604
        %v2983 = vunpack.c.l.b16 %v2605
        %v2984 = vunpack.c.h.b16 %v2605
        %v2985 = vunpack.c.l.b16 %v2606
        %v2986 = vunpack.c.h.b16 %v2606
        %v2987 = vunpack.c.l.b16 %v2607
        %v2988 = vunpack.c.h.b16 %v2607
        %v2989 = vunpack.c.l.b16 %v2608
        %v2990 = vunpack.c.h.b16 %v2608
        %v2991 = vunpack.c.l.b16 %v2609
        %v2992 = vunpack.c.h.b16 %v2609
        %v2993 = vunpack.c.l.b16 %v2610
        %v2994 = vunpack.c.h.b16 %v2610
        %v2995 = vunpack.c.l.b16 %v2611
        %v2996 = vunpack.c.h.b16 %v2611
        %v2997 = vunpack.c.l.b16 %v2612
        %v2998 = vunpack.c.h.b16 %v2612
        %v2999 = vunpack.c.l.b16 %v2613
        %v3000 = vunpack.c.h.b16 %v2613
        %v3001 = vunpack.c.l.b16 %v2614
        %v3002 = vunpack.c.h.b16 %v2614
        %v3003 = vunpack.c.l.b16 %v2615
        %v3004 = vunpack.c.h.b16 %v2615
        %v3005 = vunpack.c.l.b16 %v2616
        %v3006 = vunpack.c.h.b16 %v2616
        %v3007 = vunpack.c.l.b16 %v2617
        %v3008 = vunpack.c.h.b16 %v2617
        %v3009 = vunpack.c.l.b16 %v2618
        %v3010 = vunpack.c.h.b16 %v2618
        %v3011 = vunpack.c.l.b16 %v2619
        %v3012 = vunpack.c.h.b16 %v2619
        %v3013 = vunpack.c.l.b16 %v2620
        %v3014 = vunpack.c.h.b16 %v2620
        %v3015 = vunpack.c.l.b16 %v2621
        %v3016 = vunpack.c.h.b16 %v2621
        %v3017 = vunpack.c.l.b16 %v2622
        %v3018 = vunpack.c.h.b16 %v2622
        %v3019 = vunpack.c.l.b16 %v2623
        %v3020 = vunpack.c.h.b16 %v2623
        %v3021 = vunpack.c.l.b16 %v2624
        %v3022 = vunpack.c.h.b16 %v2624
        %v3023 = vunpack.c.l.b16 %v2625
        %v3024 = vunpack.c.h.b16 %v2625
        %v3025 = vunpack.c.l.b16 %v2626
        %v3026 = vunpack.c.h.b16 %v2626
        %v3027 = vunpack.c.l.b16 %v2627
        %v3028 = vunpack.c.h.b16 %v2627
        %v3029 = vunpack.c.l.b16 %v2628
        %v3030 = vunpack.c.h.b16 %v2628
        %v3031 = vunpack.c.l.b16 %v2629
        %v3032 = vunpack.c.h.b16 %v2629
        %v3033 = vunpack.c.l.b16 %v2630
        %v3034 = vunpack.c.h.b16 %v2630
        %v3035 = vunpack.c.l.b16 %v2631
        %v3036 = vunpack.c.h.b16 %v2631
        %v3037 = vunpack.c.l.b16 %v2632
        %v3038 = vunpack.c.h.b16 %v2632
        %v3039 = vunpack.c.l.b16 %v2633
        %v3040 = vunpack.c.h.b16 %v2633
        %v3041 = vunpack.c.l.b16 %v2634
        %v3042 = vunpack.c.h.b16 %v2634
        %v3043 = vunpack.c.l.b16 %v2635
        %v3044 = vunpack.c.h.b16 %v2635
        %v3045 = vunpack.c.l.b16 %v2636
        %v3046 = vunpack.c.h.b16 %v2636
        %v3047 = vunpack.c.l.b16 %v2637
        %v3048 = vunpack.c.h.b16 %v2637
        %v3049 = vunpack.c.l.b16 %v2638
        %v3050 = vunpack.c.h.b16 %v2638
        %v3051 = vunpack.c.l.b16 %v2639
        %v3052 = vunpack.c.h.b16 %v2639
        %v3053 = vunpack.c.l.b16 %v2640
        %v3054 = vunpack.c.h.b16 %v2640
        %v3055 = vunpack.c.l.b16 %v2641
        %v3056 = vunpack.c.h.b16 %v2641
        %v3057 = vunpack.c.l.b16 %v2642
        %v3058 = vunpack.c.h.b16 %v2642
        %v3059 = vunpack.c.l.b16 %v2643
        %v3060 = vunpack.c.h.b16 %v2643
        %v3061 = vunpack.c.l.b16 %v2644
        %v3062 = vunpack.c.h.b16 %v2644
        %v3063 = vunpack.c.l.b16 %v2645
        %v3064 = vunpack.c.h.b16 %v2645
        %v3065 = vunpack.c.l.b16 %v2646
        %v3066 = vunpack.c.h.b16 %v2646
        %v3067 = vunpack.c.l.b16 %v2647
        %v3068 = vunpack.c.h.b16 %v2647
        %v3069 = vunpack.c.l.b16 %v2648
        %v3070 = vunpack.c.h.b16 %v2648
        %v3071 = vunpack.c.l.b16 %v2649
        %v3072 = vunpack.c.h.b16 %v2649
        %v3073 = vunpack.c.l.b16 %v2650
        %v3074 = vunpack.c.h.b16 %v2650
        %v3075 = vunpack.c.l.b16 %v2651
        %v3076 = vunpack.c.h.b16 %v2651
        %v3077 = vunpack.c.l.b16 %v2652
        %v3078 = vunpack.c.h.b16 %v2652
        %v3079 = vpack.c.b16 %v2831, %v2823
        %v3080 = vpack.c.b16 %v2832, %v2824
        %v3081 = vpack.c.b16 %v2833, %v2825
        %v3082 = vpack.c.b16 %v2834, %v2826
        %v3083 = vpack.c.b16 %v2835, %v2827
        %v3084 = vpack.c.b16 %v2836, %v2828
        %v3085 = vpack.c.b16 %v2837, %v2829
        %v3086 = vpack.c.b16 %v2838, %v2830
        %v3087 = vpack.c.b16 %v2847, %v2839
        %v3088 = vpack.c.b16 %v2848, %v2840
        %v3089 = vpack.c.b16 %v2849, %v2841
        %v3090 = vpack.c.b16 %v2850, %v2842
        %v3091 = vpack.c.b16 %v2851, %v2843
        %v3092 = vpack.c.b16 %v2852, %v2844
        %v3093 = vpack.c.b16 %v2853, %v2845
        %v3094 = vpack.c.b16 %v2854, %v2846
        %v3095 = vpack.c.b16 %v2863, %v2855
        %v3096 = vpack.c.b16 %v2864, %v2856
        %v3097 = vpack.c.b16 %v2865, %v2857
        %v3098 = vpack.c.b16 %v2866, %v2858
        %v3099 = vpack.c.b16 %v2867, %v2859
        %v3100 = vpack.c.b16 %v2868, %v2860
        %v3101 = vpack.c.b16 %v2869, %v2861
        %v3102 = vpack.c.b16 %v2870, %v2862
        %v3103 = vpack.c.b16 %v2879, %v2871
        %v3104 = vpack.c.b16 %v2880, %v2872
        %v3105 = vpack.c.b16 %v2881, %v2873
        %v3106 = vpack.c.b16 %v2882, %v2874
        %v3107 = vpack.c.b16 %v2883, %v2875
        %v3108 = vpack.c.b16 %v2884, %v2876
        %v3109 = vpack.c.b16 %v2885, %v2877
        %v3110 = vpack.c.b16 %v2886, %v2878
        %v3111 = vpack.c.b16 %v2895, %v2887
        %v3112 = vpack.c.b16 %v2896, %v2888
        %v3113 = vpack.c.b16 %v2897, %v2889
        %v3114 = vpack.c.b16 %v2898, %v2890
        %v3115 = vpack.c.b16 %v2899, %v2891
        %v3116 = vpack.c.b16 %v2900, %v2892
        %v3117 = vpack.c.b16 %v2901, %v2893
        %v3118 = vpack.c.b16 %v2902, %v2894
        %v3119 = vpack.c.b16 %v2911, %v2903
        %v3120 = vpack.c.b16 %v2912, %v2904
        %v3121 = vpack.c.b16 %v2913, %v2905
        %v3122 = vpack.c.b16 %v2914, %v2906
        %v3123 = vpack.c.b16 %v2915, %v2907
        %v3124 = vpack.c.b16 %v2916, %v2908
        %v3125 = vpack.c.b16 %v2917, %v2909
        %v3126 = vpack.c.b16 %v2918, %v2910
        %v3127 = vpack.c.b16 %v2927, %v2919
        %v3128 = vpack.c.b16 %v2928, %v2920
        %v3129 = vpack.c.b16 %v2929, %v2921
        %v3130 = vpack.c.b16 %v2930, %v2922
        %v3131 = vpack.c.b16 %v2931, %v2923
        %v3132 = vpack.c.b16 %v2932, %v2924
        %v3133 = vpack.c.b16 %v2933, %v2925
        %v3134 = vpack.c.b16 %v2934, %v2926
        %v3135 = vpack.c.b16 %v2943, %v2935
        %v3136 = vpack.c.b16 %v2944, %v2936
        %v3137 = vpack.c.b16 %v2945, %v2937
        %v3138 = vpack.c.b16 %v2946, %v2938
        %v3139 = vpack.c.b16 %v2947, %v2939
        %v3140 = vpack.c.b16 %v2948, %v2940
        %v3141 = vpack.c.b16 %v2949, %v2941
        %v3142 = vpack.c.b16 %v2950, %v2942
        %v3143 = vpack.c.b16 %v2959, %v2951
        %v3144 = vpack.c.b16 %v2960, %v2952
        %v3145 = vpack.c.b16 %v2961, %v2953
        %v3146 = vpack.c.b16 %v2962, %v2954
        %v3147 = vpack.c.b16 %v2963, %v2955
        %v3148 = vpack.c.b16 %v2964, %v2956
        %v3149 = vpack.c.b16 %v2965, %v2957
        %v3150 = vpack.c.b16 %v2966, %v2958
        %v3151 = vpack.c.b16 %v2975, %v2967
        %v3152 = vpack.c.b16 %v2976, %v2968
        %v3153 = vpack.c.b16 %v2977, %v2969
        %v3154 = vpack.c.b16 %v2978, %v2970
        %v3155 = vpack.c.b16 %v2979, %v2971
        %v3156 = vpack.c.b16 %v2980, %v2972
        %v3157 = vpack.c.b16 %v2981, %v2973
        %v3158 = vpack.c.b16 %v2982, %v2974
        %v3159 = vpack.c.b16 %v2991, %v2983
        %v3160 = vpack.c.b16 %v2992, %v2984
        %v3161 = vpack.c.b16 %v2993, %v2985
        %v3162 = vpack.c.b16 %v2994, %v2986
        %v3163 = vpack.c.b16 %v2995, %v2987
        %v3164 = vpack.c.b16 %v2996, %v2988
        %v3165 = vpack.c.b16 %v2997, %v2989
        %v3166 = vpack.c.b16 %v2998, %v2990
        %v3167 = vpack.c.b16 %v3007, %v2999
        %v3168 = vpack.c.b16 %v3008, %v3000
        %v3169 = vpack.c.b16 %v3009, %v3001
        %v3170 = vpack.c.b16 %v3010, %v3002
        %v3171 = vpack.c.b16 %v3011, %v3003
        %v3172 = vpack.c.b16 %v3012, %v3004
        %v3173 = vpack.c.b16 %v3013, %v3005
        %v3174 = vpack.c.b16 %v3014, %v3006
        %v3175 = vpack.c.b16 %v3023, %v3015
        %v3176 = vpack.c.b16 %v3024, %v3016
        %v3177 = vpack.c.b16 %v3025, %v3017
        %v3178 = vpack.c.b16 %v3026, %v3018
        %v3179 = vpack.c.b16 %v3027, %v3019
        %v3180 = vpack.c.b16 %v3028, %v3020
        %v3181 = vpack.c.b16 %v3029, %v3021
        %v3182 = vpack.c.b16 %v3030, %v3022
        %v3183 = vpack.c.b16 %v3039, %v3031
        %v3184 = vpack.c.b16 %v3040, %v3032
        %v3185 = vpack.c.b16 %v3041, %v3033
        %v3186 = vpack.c.b16 %v3042, %v3034
        %v3187 = vpack.c.b16 %v3043, %v3035
        %v3188 = vpack.c.b16 %v3044, %v3036
        %v3189 = vpack.c.b16 %v3045, %v3037
        %v3190 = vpack.c.b16 %v3046, %v3038
        %v3191 = vpack.c.b16 %v3055, %v3047
        %v3192 = vpack.c.b16 %v3056, %v3048
        %v3193 = vpack.c.b16 %v3057, %v3049
        %v3194 = vpack.c.b16 %v3058, %v3050
        %v3195 = vpack.c.b16 %v3059, %v3051
        %v3196 = vpack.c.b16 %v3060, %v3052
        %v3197 = vpack.c.b16 %v3061, %v3053
        %v3198 = vpack.c.b16 %v3062, %v3054
        %v3199 = vpack.c.b16 %v3071, %v3063
        %v3200 = vpack.c.b16 %v3072, %v3064
        %v3201 = vpack.c.b16 %v3073, %v3065
        %v3202 = vpack.c.b16 %v3074, %v3066
        %v3203 = vpack.c.b16 %v3075, %v3067
        %v3204 = vpack.c.b16 %v3076, %v3068
        %v3205 = vpack.c.b16 %v3077, %v3069
        %v3206 = vpack.c.b16 %v3078, %v3070
        %3335 = vmatprep.subr.bf16.mxu0 %v3136
        %3336 = vmatpush1.bf16.msra.mxu0 %v3135
        %3337 = vmatprep.subr.bf16.mxu0 %v3128
        %3338 = vmatpush1.bf16.msra.mxu0 %v3127
        %3339 = vmatprep.subr.bf16.mxu0 %v3120
        %3340 = vmatpush1.bf16.msra.mxu0 %v3119
        %3341 = vmatprep.subr.bf16.mxu0 %v3112
        %3342 = vmatpush1.bf16.msra.mxu0 %v3111
        %3343 = vmatprep.subr.bf16.mxu0 %v3104
        %3344 = vmatpush1.bf16.msra.mxu0 %v3103
        %3345 = vmatprep.subr.bf16.mxu0 %v3096
        %3346 = vmatpush1.bf16.msra.mxu0 %v3095
        %3347 = vmatprep.subr.bf16.mxu0 %v3088
        %3348 = vmatpush1.bf16.msra.mxu0 %v3087
        %3349 = vmatprep.subr.bf16.mxu0 %v3080
        %3350 = vmatpush1.bf16.msra.mxu0 %v3079
        %3351 = vmatprep.subr.bf16.mxu0 %v3200
        %3352 = vmatpush2.bf16.msra.mxu0 %v3199
        %3353 = vmatprep.subr.bf16.mxu0 %v3192
        %3354 = vmatpush2.bf16.msra.mxu0 %v3191
        %3355 = vmatprep.subr.bf16.mxu0 %v3184
        %3356 = vmatpush2.bf16.msra.mxu0 %v3183
        %3357 = vmatprep.subr.bf16.mxu0 %v3176
        %3358 = vmatpush2.bf16.msra.mxu0 %v3175
        %3359 = vmatprep.subr.bf16.mxu0 %v3168
        %3360 = vmatpush2.bf16.msra.mxu0 %v3167
        %3361 = vmatprep.subr.bf16.mxu0 %v3160
        %3362 = vmatpush2.bf16.msra.mxu0 %v3159
        %3363 = vmatprep.subr.bf16.mxu0 %v3152
        %3364 = vmatpush2.bf16.msra.mxu0 %v3151
        %3365 = vmatprep.subr.bf16.mxu0 %v3144
        %3366 = vmatpush2.bf16.msra.mxu0 %v3143
        %3367 = vmatprep.mubr.bf16.mxu0 %v2524
        %3368 = vmatmul.mubr.bf16.gmra.mxu0 %v2523
        %v3369 = vpop.f32.mrf.mxu0
        %v3370 = vadd.f32 %v2658, %v3369
        %v3371 = vpop.f32.mrf.mxu0
        %v3372 = vadd.f32 %v2662, %v3371
        %v3373 = vpop.f32.mrf.mxu0
        %v3374 = vpop.f32.mrf.mxu0
        %3375 = vdwg.mxu0
        %3376 = vmatprep.subr.bf16.mxu0 %v3138
        %3377 = vmatpush1.bf16.msra.mxu0 %v3137
        %3378 = vmatprep.subr.bf16.mxu0 %v3130
        %3379 = vmatpush1.bf16.msra.mxu0 %v3129
        %3380 = vmatprep.subr.bf16.mxu0 %v3122
        %3381 = vmatpush1.bf16.msra.mxu0 %v3121
        %3382 = vmatprep.subr.bf16.mxu0 %v3114
        %3383 = vmatpush1.bf16.msra.mxu0 %v3113
        %3384 = vmatprep.subr.bf16.mxu0 %v3106
        %3385 = vmatpush1.bf16.msra.mxu0 %v3105
        %3386 = vmatprep.subr.bf16.mxu0 %v3098
        %3387 = vmatpush1.bf16.msra.mxu0 %v3097
        %3388 = vmatprep.subr.bf16.mxu0 %v3090
        %3389 = vmatpush1.bf16.msra.mxu0 %v3089
        %3390 = vmatprep.subr.bf16.mxu0 %v3082
        %3391 = vmatpush1.bf16.msra.mxu0 %v3081
        %3392 = vmatprep.subr.bf16.mxu0 %v3202
        %3393 = vmatpush2.bf16.msra.mxu0 %v3201
        %3394 = vmatprep.subr.bf16.mxu0 %v3194
        %3395 = vmatpush2.bf16.msra.mxu0 %v3193
        %3396 = vmatprep.subr.bf16.mxu0 %v3186
        %3397 = vmatpush2.bf16.msra.mxu0 %v3185
        %3398 = vmatprep.subr.bf16.mxu0 %v3178
        %3399 = vmatpush2.bf16.msra.mxu0 %v3177
        %3400 = vmatprep.subr.bf16.mxu0 %v3170
        %3401 = vmatpush2.bf16.msra.mxu0 %v3169
        %3402 = vmatprep.subr.bf16.mxu0 %v3162
        %3403 = vmatpush2.bf16.msra.mxu0 %v3161
        %3404 = vmatprep.subr.bf16.mxu0 %v3154
        %3405 = vmatpush2.bf16.msra.mxu0 %v3153
        %3406 = vmatprep.subr.bf16.mxu0 %v3146
        %3407 = vmatpush2.bf16.msra.mxu0 %v3145
        %3408 = vmatprep.mubr.bf16.mxu0 %v2524
        %3409 = vmatmul.mubr.bf16.gmra.mxu0 %v2523
        %v3410 = vpop.f32.mrf.mxu0
        %v3411 = vadd.f32 %v2666, %v3410
        %v3412 = vpop.f32.mrf.mxu0
        %v3413 = vadd.f32 %v2670, %v3412
        %v3414 = vpop.f32.mrf.mxu0
        %v3415 = vpop.f32.mrf.mxu0
        %3416 = vdwg.mxu0
        %3417 = vmatprep.subr.bf16.mxu0 %v3140
        %3418 = vmatpush1.bf16.msra.mxu0 %v3139
        %3419 = vmatprep.subr.bf16.mxu0 %v3132
        %3420 = vmatpush1.bf16.msra.mxu0 %v3131
        %3421 = vmatprep.subr.bf16.mxu0 %v3124
        %3422 = vmatpush1.bf16.msra.mxu0 %v3123
        %3423 = vmatprep.subr.bf16.mxu0 %v3116
        %3424 = vmatpush1.bf16.msra.mxu0 %v3115
        %3425 = vmatprep.subr.bf16.mxu0 %v3108
        %3426 = vmatpush1.bf16.msra.mxu0 %v3107
        %3427 = vmatprep.subr.bf16.mxu0 %v3100
        %3428 = vmatpush1.bf16.msra.mxu0 %v3099
        %3429 = vmatprep.subr.bf16.mxu0 %v3092
        %3430 = vmatpush1.bf16.msra.mxu0 %v3091
        %3431 = vmatprep.subr.bf16.mxu0 %v3084
        %3432 = vmatpush1.bf16.msra.mxu0 %v3083
        %3433 = vmatprep.subr.bf16.mxu0 %v3204
        %3434 = vmatpush2.bf16.msra.mxu0 %v3203
        %3435 = vmatprep.subr.bf16.mxu0 %v3196
        %3436 = vmatpush2.bf16.msra.mxu0 %v3195
        %3437 = vmatprep.subr.bf16.mxu0 %v3188
        %3438 = vmatpush2.bf16.msra.mxu0 %v3187
        %3439 = vmatprep.subr.bf16.mxu0 %v3180
        %3440 = vmatpush2.bf16.msra.mxu0 %v3179
        %3441 = vmatprep.subr.bf16.mxu0 %v3172
        %3442 = vmatpush2.bf16.msra.mxu0 %v3171
        %3443 = vmatprep.subr.bf16.mxu0 %v3164
        %3444 = vmatpush2.bf16.msra.mxu0 %v3163
        %3445 = vmatprep.subr.bf16.mxu0 %v3156
        %3446 = vmatpush2.bf16.msra.mxu0 %v3155
        %3447 = vmatprep.subr.bf16.mxu0 %v3148
        %3448 = vmatpush2.bf16.msra.mxu0 %v3147
        %3449 = vmatprep.mubr.bf16.mxu0 %v2524
        %3450 = vmatmul.mubr.bf16.gmra.mxu0 %v2523
        %v3451 = vpop.f32.mrf.mxu0
        %v3452 = vadd.f32 %v2674, %v3451
        %v3453 = vpop.f32.mrf.mxu0
        %v3454 = vadd.f32 %v2678, %v3453
        %v3455 = vpop.f32.mrf.mxu0
        %v3456 = vpop.f32.mrf.mxu0
        %3457 = vdwg.mxu0
        %3458 = vmatprep.subr.bf16.mxu0 %v3142
        %3459 = vmatpush1.bf16.msra.mxu0 %v3141
        %3460 = vmatprep.subr.bf16.mxu0 %v3134
        %3461 = vmatpush1.bf16.msra.mxu0 %v3133
        %3462 = vmatprep.subr.bf16.mxu0 %v3126
        %3463 = vmatpush1.bf16.msra.mxu0 %v3125
        %3464 = vmatprep.subr.bf16.mxu0 %v3118
        %3465 = vmatpush1.bf16.msra.mxu0 %v3117
        %3466 = vmatprep.subr.bf16.mxu0 %v3110
        %3467 = vmatpush1.bf16.msra.mxu0 %v3109
        %3468 = vmatprep.subr.bf16.mxu0 %v3102
        %3469 = vmatpush1.bf16.msra.mxu0 %v3101
        %3470 = vmatprep.subr.bf16.mxu0 %v3094
        %3471 = vmatpush1.bf16.msra.mxu0 %v3093
        %3472 = vmatprep.subr.bf16.mxu0 %v3086
        %3473 = vmatpush1.bf16.msra.mxu0 %v3085
        %3474 = vmatprep.subr.bf16.mxu0 %v3206
        %3475 = vmatpush2.bf16.msra.mxu0 %v3205
        %3476 = vmatprep.subr.bf16.mxu0 %v3198
        %3477 = vmatpush2.bf16.msra.mxu0 %v3197
        %3478 = vmatprep.subr.bf16.mxu0 %v3190
        %3479 = vmatpush2.bf16.msra.mxu0 %v3189
        %3480 = vmatprep.subr.bf16.mxu0 %v3182
        %3481 = vmatpush2.bf16.msra.mxu0 %v3181
        %3482 = vmatprep.subr.bf16.mxu0 %v3174
        %3483 = vmatpush2.bf16.msra.mxu0 %v3173
        %3484 = vmatprep.subr.bf16.mxu0 %v3166
        %3485 = vmatpush2.bf16.msra.mxu0 %v3165
        %3486 = vmatprep.subr.bf16.mxu0 %v3158
        %3487 = vmatpush2.bf16.msra.mxu0 %v3157
        %3488 = vmatprep.subr.bf16.mxu0 %v3150
        %3489 = vmatpush2.bf16.msra.mxu0 %v3149
        %3490 = vmatprep.mubr.bf16.mxu0 %v2524
        %3491 = vmatmul.mubr.bf16.gmra.mxu0 %v2523
        %v3492 = vpop.f32.mrf.mxu0
        %v3493 = vadd.f32 %v2682, %v3492
        %v3494 = vpop.f32.mrf.mxu0
        %v3495 = vadd.f32 %v2686, %v3494
        %v3496 = vpop.f32.mrf.mxu0
        %v3497 = vpop.f32.mrf.mxu0
        %3498 = vdwg.mxu0
        %v3499 = vmax.f32 %v3370, 0.0
        %v3500 = vmax.f32 %v3372, 0.0
        %v3501 = vmax.f32 %v3411, 0.0
        %v3502 = vmax.f32 %v3413, 0.0
        %v3503 = vmax.f32 %v3452, 0.0
        %v3504 = vmax.f32 %v3454, 0.0
        %v3505 = vmax.f32 %v3493, 0.0
        %v3506 = vmax.f32 %v3495, 0.0
        %v3507 = vpack.c.bf16 %v3499, %v3499
        %v3508 = vpack.c.bf16 %v3500, %v3500
        %v3509 = vpack.c.bf16 %v3501, %v3501
        %v3510 = vpack.c.bf16 %v3502, %v3502
        %v3511 = vpack.c.bf16 %v3503, %v3503
        %v3512 = vpack.c.bf16 %v3504, %v3504
        %v3513 = vpack.c.bf16 %v3505, %v3505
        %v3514 = vpack.c.bf16 %v3506, %v3506
        %v3515 = vld [vmem:[#allocation14] sm:$0xff]
        %v3516 = vld [vmem:[#allocation14 + $0x8] sm:$0xff]
        %v3517 = vld [vmem:[#allocation14 + $0x10] sm:$0xff]
        %v3518 = vld [vmem:[#allocation14 + $0x18] sm:$0xff]
        %v3519 = vld [vmem:[#allocation14 + $0x20] sm:$0xff]
        %v3520 = vld [vmem:[#allocation14 + $0x28] sm:$0xff]
        %v3521 = vld [vmem:[#allocation14 + $0x30] sm:$0xff]
        %v3522 = vld [vmem:[#allocation14 + $0x38] sm:$0xff]
        %v3523 = vld [vmem:[#allocation14 + $0x40] sm:$0xff]
        %v3524 = vld [vmem:[#allocation14 + $0x48] sm:$0xff]
        %v3525 = vld [vmem:[#allocation14 + $0x50] sm:$0xff]
        %v3526 = vld [vmem:[#allocation14 + $0x58] sm:$0xff]
        %v3527 = vld [vmem:[#allocation14 + $0x60] sm:$0xff]
        %v3528 = vld [vmem:[#allocation14 + $0x68] sm:$0xff]
        %v3529 = vld [vmem:[#allocation14 + $0x70] sm:$0xff]
        %v3530 = vld [vmem:[#allocation14 + $0x78] sm:$0xff]
        %v3531 = vld [vmem:[#allocation14 + $0x80] sm:$0xff]
        %v3532 = vld [vmem:[#allocation14 + $0x88] sm:$0xff]
        %v3533 = vld [vmem:[#allocation14 + $0x90] sm:$0xff]
        %v3534 = vld [vmem:[#allocation14 + $0x98] sm:$0xff]
        %v3535 = vld [vmem:[#allocation14 + $0xa0] sm:$0xff]
        %v3536 = vld [vmem:[#allocation14 + $0xa8] sm:$0xff]
        %v3537 = vld [vmem:[#allocation14 + $0xb0] sm:$0xff]
        %v3538 = vld [vmem:[#allocation14 + $0xb8] sm:$0xff]
        %v3539 = vld [vmem:[#allocation14 + $0xc0] sm:$0xff]
        %v3540 = vld [vmem:[#allocation14 + $0xc8] sm:$0xff]
        %v3541 = vld [vmem:[#allocation14 + $0xd0] sm:$0xff]
        %v3542 = vld [vmem:[#allocation14 + $0xd8] sm:$0xff]
        %v3543 = vld [vmem:[#allocation14 + $0xe0] sm:$0xff]
        %v3544 = vld [vmem:[#allocation14 + $0xe8] sm:$0xff]
        %v3545 = vld [vmem:[#allocation14 + $0xf0] sm:$0xff]
        %v3546 = vld [vmem:[#allocation14 + $0xf8] sm:$0xff]
        %v3547 = vld [vmem:[#allocation14 + $0x100] sm:$0xff]
        %v3548 = vld [vmem:[#allocation14 + $0x108] sm:$0xff]
        %v3549 = vld [vmem:[#allocation14 + $0x110] sm:$0xff]
        %v3550 = vld [vmem:[#allocation14 + $0x118] sm:$0xff]
        %v3551 = vld [vmem:[#allocation14 + $0x120] sm:$0xff]
        %v3552 = vld [vmem:[#allocation14 + $0x128] sm:$0xff]
        %v3553 = vld [vmem:[#allocation14 + $0x130] sm:$0xff]
        %v3554 = vld [vmem:[#allocation14 + $0x138] sm:$0xff]
        %v3555 = vld [vmem:[#allocation14 + $0x140] sm:$0xff]
        %v3556 = vld [vmem:[#allocation14 + $0x148] sm:$0xff]
        %v3557 = vld [vmem:[#allocation14 + $0x150] sm:$0xff]
        %v3558 = vld [vmem:[#allocation14 + $0x158] sm:$0xff]
        %v3559 = vld [vmem:[#allocation14 + $0x160] sm:$0xff]
        %v3560 = vld [vmem:[#allocation14 + $0x168] sm:$0xff]
        %v3561 = vld [vmem:[#allocation14 + $0x170] sm:$0xff]
        %v3562 = vld [vmem:[#allocation14 + $0x178] sm:$0xff]
        %v3563 = vld [vmem:[#allocation14 + $0x180] sm:$0xff]
        %v3564 = vld [vmem:[#allocation14 + $0x188] sm:$0xff]
        %v3565 = vld [vmem:[#allocation14 + $0x190] sm:$0xff]
        %v3566 = vld [vmem:[#allocation14 + $0x198] sm:$0xff]
        %v3567 = vld [vmem:[#allocation14 + $0x1a0] sm:$0xff]
        %v3568 = vld [vmem:[#allocation14 + $0x1a8] sm:$0xff]
        %v3569 = vld [vmem:[#allocation14 + $0x1b0] sm:$0xff]
        %v3570 = vld [vmem:[#allocation14 + $0x1b8] sm:$0xff]
        %v3571 = vld [vmem:[#allocation14 + $0x1c0] sm:$0xff]
        %v3572 = vld [vmem:[#allocation14 + $0x1c8] sm:$0xff]
        %v3573 = vld [vmem:[#allocation14 + $0x1d0] sm:$0xff]
        %v3574 = vld [vmem:[#allocation14 + $0x1d8] sm:$0xff]
        %v3575 = vld [vmem:[#allocation14 + $0x1e0] sm:$0xff]
        %v3576 = vld [vmem:[#allocation14 + $0x1e8] sm:$0xff]
        %v3577 = vld [vmem:[#allocation14 + $0x1f0] sm:$0xff]
        %v3578 = vld [vmem:[#allocation14 + $0x1f8] sm:$0xff]
        %v3579 = vld [vmem:[#allocation14 + $0x200] sm:$0xff]
        %v3580 = vld [vmem:[#allocation14 + $0x208] sm:$0xff]
        %v3581 = vld [vmem:[#allocation14 + $0x210] sm:$0xff]
        %v3582 = vld [vmem:[#allocation14 + $0x218] sm:$0xff]
        %v3583 = vld [vmem:[#allocation14 + $0x220] sm:$0xff]
        %v3584 = vld [vmem:[#allocation14 + $0x228] sm:$0xff]
        %v3585 = vld [vmem:[#allocation14 + $0x230] sm:$0xff]
        %v3586 = vld [vmem:[#allocation14 + $0x238] sm:$0xff]
        %v3587 = vld [vmem:[#allocation14 + $0x240] sm:$0xff]
        %v3588 = vld [vmem:[#allocation14 + $0x248] sm:$0xff]
        %v3589 = vld [vmem:[#allocation14 + $0x250] sm:$0xff]
        %v3590 = vld [vmem:[#allocation14 + $0x258] sm:$0xff]
        %v3591 = vld [vmem:[#allocation14 + $0x260] sm:$0xff]
        %v3592 = vld [vmem:[#allocation14 + $0x268] sm:$0xff]
        %v3593 = vld [vmem:[#allocation14 + $0x270] sm:$0xff]
        %v3594 = vld [vmem:[#allocation14 + $0x278] sm:$0xff]
        %v3595 = vld [vmem:[#allocation14 + $0x280] sm:$0xff]
        %v3596 = vld [vmem:[#allocation14 + $0x288] sm:$0xff]
        %v3597 = vld [vmem:[#allocation14 + $0x290] sm:$0xff]
        %v3598 = vld [vmem:[#allocation14 + $0x298] sm:$0xff]
        %v3599 = vld [vmem:[#allocation14 + $0x2a0] sm:$0xff]
        %v3600 = vld [vmem:[#allocation14 + $0x2a8] sm:$0xff]
        %v3601 = vld [vmem:[#allocation14 + $0x2b0] sm:$0xff]
        %v3602 = vld [vmem:[#allocation14 + $0x2b8] sm:$0xff]
        %v3603 = vld [vmem:[#allocation14 + $0x2c0] sm:$0xff]
        %v3604 = vld [vmem:[#allocation14 + $0x2c8] sm:$0xff]
        %v3605 = vld [vmem:[#allocation14 + $0x2d0] sm:$0xff]
        %v3606 = vld [vmem:[#allocation14 + $0x2d8] sm:$0xff]
        %v3607 = vld [vmem:[#allocation14 + $0x2e0] sm:$0xff]
        %v3608 = vld [vmem:[#allocation14 + $0x2e8] sm:$0xff]
        %v3609 = vld [vmem:[#allocation14 + $0x2f0] sm:$0xff]
        %v3610 = vld [vmem:[#allocation14 + $0x2f8] sm:$0xff]
        %v3611 = vld [vmem:[#allocation14 + $0x300] sm:$0xff]
        %v3612 = vld [vmem:[#allocation14 + $0x308] sm:$0xff]
        %v3613 = vld [vmem:[#allocation14 + $0x310] sm:$0xff]
        %v3614 = vld [vmem:[#allocation14 + $0x318] sm:$0xff]
        %v3615 = vld [vmem:[#allocation14 + $0x320] sm:$0xff]
        %v3616 = vld [vmem:[#allocation14 + $0x328] sm:$0xff]
        %v3617 = vld [vmem:[#allocation14 + $0x330] sm:$0xff]
        %v3618 = vld [vmem:[#allocation14 + $0x338] sm:$0xff]
        %v3619 = vld [vmem:[#allocation14 + $0x340] sm:$0xff]
        %v3620 = vld [vmem:[#allocation14 + $0x348] sm:$0xff]
        %v3621 = vld [vmem:[#allocation14 + $0x350] sm:$0xff]
        %v3622 = vld [vmem:[#allocation14 + $0x358] sm:$0xff]
        %v3623 = vld [vmem:[#allocation14 + $0x360] sm:$0xff]
        %v3624 = vld [vmem:[#allocation14 + $0x368] sm:$0xff]
        %v3625 = vld [vmem:[#allocation14 + $0x370] sm:$0xff]
        %v3626 = vld [vmem:[#allocation14 + $0x378] sm:$0xff]
        %v3627 = vld [vmem:[#allocation14 + $0x380] sm:$0xff]
        %v3628 = vld [vmem:[#allocation14 + $0x388] sm:$0xff]
        %v3629 = vld [vmem:[#allocation14 + $0x390] sm:$0xff]
        %v3630 = vld [vmem:[#allocation14 + $0x398] sm:$0xff]
        %v3631 = vld [vmem:[#allocation14 + $0x3a0] sm:$0xff]
        %v3632 = vld [vmem:[#allocation14 + $0x3a8] sm:$0xff]
        %v3633 = vld [vmem:[#allocation14 + $0x3b0] sm:$0xff]
        %v3634 = vld [vmem:[#allocation14 + $0x3b8] sm:$0xff]
        %v3635 = vld [vmem:[#allocation14 + $0x3c0] sm:$0xff]
        %v3636 = vld [vmem:[#allocation14 + $0x3c8] sm:$0xff]
        %v3637 = vld [vmem:[#allocation14 + $0x3d0] sm:$0xff]
        %v3638 = vld [vmem:[#allocation14 + $0x3d8] sm:$0xff]
        %v3639 = vld [vmem:[#allocation14 + $0x3e0] sm:$0xff]
        %v3640 = vld [vmem:[#allocation14 + $0x3e8] sm:$0xff]
        %v3641 = vld [vmem:[#allocation14 + $0x3f0] sm:$0xff]
        %v3642 = vld [vmem:[#allocation14 + $0x3f8] sm:$0xff]
        %v3643 = vld [vmem:[#allocation15] sm:$0x3]
        %v3645 = vlaneseq
        %v3646 = vshrl.u32 %v3645, 7
        %v3647 = vsub.s32 0, %v3646
        %v3648 = vrot.slane %v3643, %v3647
        %v3649 = vlaneseq
        %v3650 = vshrl.u32 %v3649, 7
        %v3651 = vsub.s32 1, %v3650
        %v3652 = vrot.slane %v3643, %v3651
        %v3783 = vunpack.c.l.b16 %v3515
        %v3784 = vunpack.c.h.b16 %v3515
        %v3785 = vunpack.c.l.b16 %v3516
        %v3786 = vunpack.c.h.b16 %v3516
        %v3787 = vunpack.c.l.b16 %v3517
        %v3788 = vunpack.c.h.b16 %v3517
        %v3789 = vunpack.c.l.b16 %v3518
        %v3790 = vunpack.c.h.b16 %v3518
        %v3791 = vunpack.c.l.b16 %v3519
        %v3792 = vunpack.c.h.b16 %v3519
        %v3793 = vunpack.c.l.b16 %v3520
        %v3794 = vunpack.c.h.b16 %v3520
        %v3795 = vunpack.c.l.b16 %v3521
        %v3796 = vunpack.c.h.b16 %v3521
        %v3797 = vunpack.c.l.b16 %v3522
        %v3798 = vunpack.c.h.b16 %v3522
        %v3799 = vunpack.c.l.b16 %v3523
        %v3800 = vunpack.c.h.b16 %v3523
        %v3801 = vunpack.c.l.b16 %v3524
        %v3802 = vunpack.c.h.b16 %v3524
        %v3803 = vunpack.c.l.b16 %v3525
        %v3804 = vunpack.c.h.b16 %v3525
        %v3805 = vunpack.c.l.b16 %v3526
        %v3806 = vunpack.c.h.b16 %v3526
        %v3807 = vunpack.c.l.b16 %v3527
        %v3808 = vunpack.c.h.b16 %v3527
        %v3809 = vunpack.c.l.b16 %v3528
        %v3810 = vunpack.c.h.b16 %v3528
        %v3811 = vunpack.c.l.b16 %v3529
        %v3812 = vunpack.c.h.b16 %v3529
        %v3813 = vunpack.c.l.b16 %v3530
        %v3814 = vunpack.c.h.b16 %v3530
        %v3815 = vunpack.c.l.b16 %v3531
        %v3816 = vunpack.c.h.b16 %v3531
        %v3817 = vunpack.c.l.b16 %v3532
        %v3818 = vunpack.c.h.b16 %v3532
        %v3819 = vunpack.c.l.b16 %v3533
        %v3820 = vunpack.c.h.b16 %v3533
        %v3821 = vunpack.c.l.b16 %v3534
        %v3822 = vunpack.c.h.b16 %v3534
        %v3823 = vunpack.c.l.b16 %v3535
        %v3824 = vunpack.c.h.b16 %v3535
        %v3825 = vunpack.c.l.b16 %v3536
        %v3826 = vunpack.c.h.b16 %v3536
        %v3827 = vunpack.c.l.b16 %v3537
        %v3828 = vunpack.c.h.b16 %v3537
        %v3829 = vunpack.c.l.b16 %v3538
        %v3830 = vunpack.c.h.b16 %v3538
        %v3831 = vunpack.c.l.b16 %v3539
        %v3832 = vunpack.c.h.b16 %v3539
        %v3833 = vunpack.c.l.b16 %v3540
        %v3834 = vunpack.c.h.b16 %v3540
        %v3835 = vunpack.c.l.b16 %v3541
        %v3836 = vunpack.c.h.b16 %v3541
        %v3837 = vunpack.c.l.b16 %v3542
        %v3838 = vunpack.c.h.b16 %v3542
        %v3839 = vunpack.c.l.b16 %v3543
        %v3840 = vunpack.c.h.b16 %v3543
        %v3841 = vunpack.c.l.b16 %v3544
        %v3842 = vunpack.c.h.b16 %v3544
        %v3843 = vunpack.c.l.b16 %v3545
        %v3844 = vunpack.c.h.b16 %v3545
        %v3845 = vunpack.c.l.b16 %v3546
        %v3846 = vunpack.c.h.b16 %v3546
        %v3847 = vunpack.c.l.b16 %v3547
        %v3848 = vunpack.c.h.b16 %v3547
        %v3849 = vunpack.c.l.b16 %v3548
        %v3850 = vunpack.c.h.b16 %v3548
        %v3851 = vunpack.c.l.b16 %v3549
        %v3852 = vunpack.c.h.b16 %v3549
        %v3853 = vunpack.c.l.b16 %v3550
        %v3854 = vunpack.c.h.b16 %v3550
        %v3855 = vunpack.c.l.b16 %v3551
        %v3856 = vunpack.c.h.b16 %v3551
        %v3857 = vunpack.c.l.b16 %v3552
        %v3858 = vunpack.c.h.b16 %v3552
        %v3859 = vunpack.c.l.b16 %v3553
        %v3860 = vunpack.c.h.b16 %v3553
        %v3861 = vunpack.c.l.b16 %v3554
        %v3862 = vunpack.c.h.b16 %v3554
        %v3863 = vunpack.c.l.b16 %v3555
        %v3864 = vunpack.c.h.b16 %v3555
        %v3865 = vunpack.c.l.b16 %v3556
        %v3866 = vunpack.c.h.b16 %v3556
        %v3867 = vunpack.c.l.b16 %v3557
        %v3868 = vunpack.c.h.b16 %v3557
        %v3869 = vunpack.c.l.b16 %v3558
        %v3870 = vunpack.c.h.b16 %v3558
        %v3871 = vunpack.c.l.b16 %v3559
        %v3872 = vunpack.c.h.b16 %v3559
        %v3873 = vunpack.c.l.b16 %v3560
        %v3874 = vunpack.c.h.b16 %v3560
        %v3875 = vunpack.c.l.b16 %v3561
        %v3876 = vunpack.c.h.b16 %v3561
        %v3877 = vunpack.c.l.b16 %v3562
        %v3878 = vunpack.c.h.b16 %v3562
        %v3879 = vunpack.c.l.b16 %v3563
        %v3880 = vunpack.c.h.b16 %v3563
        %v3881 = vunpack.c.l.b16 %v3564
        %v3882 = vunpack.c.h.b16 %v3564
        %v3883 = vunpack.c.l.b16 %v3565
        %v3884 = vunpack.c.h.b16 %v3565
        %v3885 = vunpack.c.l.b16 %v3566
        %v3886 = vunpack.c.h.b16 %v3566
        %v3887 = vunpack.c.l.b16 %v3567
        %v3888 = vunpack.c.h.b16 %v3567
        %v3889 = vunpack.c.l.b16 %v3568
        %v3890 = vunpack.c.h.b16 %v3568
        %v3891 = vunpack.c.l.b16 %v3569
        %v3892 = vunpack.c.h.b16 %v3569
        %v3893 = vunpack.c.l.b16 %v3570
        %v3894 = vunpack.c.h.b16 %v3570
        %v3895 = vunpack.c.l.b16 %v3571
        %v3896 = vunpack.c.h.b16 %v3571
        %v3897 = vunpack.c.l.b16 %v3572
        %v3898 = vunpack.c.h.b16 %v3572
        %v3899 = vunpack.c.l.b16 %v3573
        %v3900 = vunpack.c.h.b16 %v3573
        %v3901 = vunpack.c.l.b16 %v3574
        %v3902 = vunpack.c.h.b16 %v3574
        %v3903 = vunpack.c.l.b16 %v3575
        %v3904 = vunpack.c.h.b16 %v3575
        %v3905 = vunpack.c.l.b16 %v3576
        %v3906 = vunpack.c.h.b16 %v3576
        %v3907 = vunpack.c.l.b16 %v3577
        %v3908 = vunpack.c.h.b16 %v3577
        %v3909 = vunpack.c.l.b16 %v3578
        %v3910 = vunpack.c.h.b16 %v3578
        %v3911 = vunpack.c.l.b16 %v3579
        %v3912 = vunpack.c.h.b16 %v3579
        %v3913 = vunpack.c.l.b16 %v3580
        %v3914 = vunpack.c.h.b16 %v3580
        %v3915 = vunpack.c.l.b16 %v3581
        %v3916 = vunpack.c.h.b16 %v3581
        %v3917 = vunpack.c.l.b16 %v3582
        %v3918 = vunpack.c.h.b16 %v3582
        %v3919 = vunpack.c.l.b16 %v3583
        %v3920 = vunpack.c.h.b16 %v3583
        %v3921 = vunpack.c.l.b16 %v3584
        %v3922 = vunpack.c.h.b16 %v3584
        %v3923 = vunpack.c.l.b16 %v3585
        %v3924 = vunpack.c.h.b16 %v3585
        %v3925 = vunpack.c.l.b16 %v3586
        %v3926 = vunpack.c.h.b16 %v3586
        %v3927 = vunpack.c.l.b16 %v3587
        %v3928 = vunpack.c.h.b16 %v3587
        %v3929 = vunpack.c.l.b16 %v3588
        %v3930 = vunpack.c.h.b16 %v3588
        %v3931 = vunpack.c.l.b16 %v3589
        %v3932 = vunpack.c.h.b16 %v3589
        %v3933 = vunpack.c.l.b16 %v3590
        %v3934 = vunpack.c.h.b16 %v3590
        %v3935 = vunpack.c.l.b16 %v3591
        %v3936 = vunpack.c.h.b16 %v3591
        %v3937 = vunpack.c.l.b16 %v3592
        %v3938 = vunpack.c.h.b16 %v3592
        %v3939 = vunpack.c.l.b16 %v3593
        %v3940 = vunpack.c.h.b16 %v3593
        %v3941 = vunpack.c.l.b16 %v3594
        %v3942 = vunpack.c.h.b16 %v3594
        %v3943 = vunpack.c.l.b16 %v3595
        %v3944 = vunpack.c.h.b16 %v3595
        %v3945 = vunpack.c.l.b16 %v3596
        %v3946 = vunpack.c.h.b16 %v3596
        %v3947 = vunpack.c.l.b16 %v3597
        %v3948 = vunpack.c.h.b16 %v3597
        %v3949 = vunpack.c.l.b16 %v3598
        %v3950 = vunpack.c.h.b16 %v3598
        %v3951 = vunpack.c.l.b16 %v3599
        %v3952 = vunpack.c.h.b16 %v3599
        %v3953 = vunpack.c.l.b16 %v3600
        %v3954 = vunpack.c.h.b16 %v3600
        %v3955 = vunpack.c.l.b16 %v3601
        %v3956 = vunpack.c.h.b16 %v3601
        %v3957 = vunpack.c.l.b16 %v3602
        %v3958 = vunpack.c.h.b16 %v3602
        %v3959 = vunpack.c.l.b16 %v3603
        %v3960 = vunpack.c.h.b16 %v3603
        %v3961 = vunpack.c.l.b16 %v3604
        %v3962 = vunpack.c.h.b16 %v3604
        %v3963 = vunpack.c.l.b16 %v3605
        %v3964 = vunpack.c.h.b16 %v3605
        %v3965 = vunpack.c.l.b16 %v3606
        %v3966 = vunpack.c.h.b16 %v3606
        %v3967 = vunpack.c.l.b16 %v3607
        %v3968 = vunpack.c.h.b16 %v3607
        %v3969 = vunpack.c.l.b16 %v3608
        %v3970 = vunpack.c.h.b16 %v3608
        %v3971 = vunpack.c.l.b16 %v3609
        %v3972 = vunpack.c.h.b16 %v3609
        %v3973 = vunpack.c.l.b16 %v3610
        %v3974 = vunpack.c.h.b16 %v3610
        %v3975 = vunpack.c.l.b16 %v3611
        %v3976 = vunpack.c.h.b16 %v3611
        %v3977 = vunpack.c.l.b16 %v3612
        %v3978 = vunpack.c.h.b16 %v3612
        %v3979 = vunpack.c.l.b16 %v3613
        %v3980 = vunpack.c.h.b16 %v3613
        %v3981 = vunpack.c.l.b16 %v3614
        %v3982 = vunpack.c.h.b16 %v3614
        %v3983 = vunpack.c.l.b16 %v3615
        %v3984 = vunpack.c.h.b16 %v3615
        %v3985 = vunpack.c.l.b16 %v3616
        %v3986 = vunpack.c.h.b16 %v3616
        %v3987 = vunpack.c.l.b16 %v3617
        %v3988 = vunpack.c.h.b16 %v3617
        %v3989 = vunpack.c.l.b16 %v3618
        %v3990 = vunpack.c.h.b16 %v3618
        %v3991 = vunpack.c.l.b16 %v3619
        %v3992 = vunpack.c.h.b16 %v3619
        %v3993 = vunpack.c.l.b16 %v3620
        %v3994 = vunpack.c.h.b16 %v3620
        %v3995 = vunpack.c.l.b16 %v3621
        %v3996 = vunpack.c.h.b16 %v3621
        %v3997 = vunpack.c.l.b16 %v3622
        %v3998 = vunpack.c.h.b16 %v3622
        %v3999 = vunpack.c.l.b16 %v3623
        %v4000 = vunpack.c.h.b16 %v3623
        %v4001 = vunpack.c.l.b16 %v3624
        %v4002 = vunpack.c.h.b16 %v3624
        %v4003 = vunpack.c.l.b16 %v3625
        %v4004 = vunpack.c.h.b16 %v3625
        %v4005 = vunpack.c.l.b16 %v3626
        %v4006 = vunpack.c.h.b16 %v3626
        %v4007 = vunpack.c.l.b16 %v3627
        %v4008 = vunpack.c.h.b16 %v3627
        %v4009 = vunpack.c.l.b16 %v3628
        %v4010 = vunpack.c.h.b16 %v3628
        %v4011 = vunpack.c.l.b16 %v3629
        %v4012 = vunpack.c.h.b16 %v3629
        %v4013 = vunpack.c.l.b16 %v3630
        %v4014 = vunpack.c.h.b16 %v3630
        %v4015 = vunpack.c.l.b16 %v3631
        %v4016 = vunpack.c.h.b16 %v3631
        %v4017 = vunpack.c.l.b16 %v3632
        %v4018 = vunpack.c.h.b16 %v3632
        %v4019 = vunpack.c.l.b16 %v3633
        %v4020 = vunpack.c.h.b16 %v3633
        %v4021 = vunpack.c.l.b16 %v3634
        %v4022 = vunpack.c.h.b16 %v3634
        %v4023 = vunpack.c.l.b16 %v3635
        %v4024 = vunpack.c.h.b16 %v3635
        %v4025 = vunpack.c.l.b16 %v3636
        %v4026 = vunpack.c.h.b16 %v3636
        %v4027 = vunpack.c.l.b16 %v3637
        %v4028 = vunpack.c.h.b16 %v3637
        %v4029 = vunpack.c.l.b16 %v3638
        %v4030 = vunpack.c.h.b16 %v3638
        %v4031 = vunpack.c.l.b16 %v3639
        %v4032 = vunpack.c.h.b16 %v3639
        %v4033 = vunpack.c.l.b16 %v3640
        %v4034 = vunpack.c.h.b16 %v3640
        %v4035 = vunpack.c.l.b16 %v3641
        %v4036 = vunpack.c.h.b16 %v3641
        %v4037 = vunpack.c.l.b16 %v3642
        %v4038 = vunpack.c.h.b16 %v3642
        %v4039 = vpack.c.b16 %v3785, %v3783
        %v4040 = vpack.c.b16 %v3786, %v3784
        %v4041 = vpack.c.b16 %v3789, %v3787
        %v4042 = vpack.c.b16 %v3790, %v3788
        %v4043 = vpack.c.b16 %v3793, %v3791
        %v4044 = vpack.c.b16 %v3794, %v3792
        %v4045 = vpack.c.b16 %v3797, %v3795
        %v4046 = vpack.c.b16 %v3798, %v3796
        %v4047 = vpack.c.b16 %v3801, %v3799
        %v4048 = vpack.c.b16 %v3802, %v3800
        %v4049 = vpack.c.b16 %v3805, %v3803
        %v4050 = vpack.c.b16 %v3806, %v3804
        %v4051 = vpack.c.b16 %v3809, %v3807
        %v4052 = vpack.c.b16 %v3810, %v3808
        %v4053 = vpack.c.b16 %v3813, %v3811
        %v4054 = vpack.c.b16 %v3814, %v3812
        %v4055 = vpack.c.b16 %v3817, %v3815
        %v4056 = vpack.c.b16 %v3818, %v3816
        %v4057 = vpack.c.b16 %v3821, %v3819
        %v4058 = vpack.c.b16 %v3822, %v3820
        %v4059 = vpack.c.b16 %v3825, %v3823
        %v4060 = vpack.c.b16 %v3826, %v3824
        %v4061 = vpack.c.b16 %v3829, %v3827
        %v4062 = vpack.c.b16 %v3830, %v3828
        %v4063 = vpack.c.b16 %v3833, %v3831
        %v4064 = vpack.c.b16 %v3834, %v3832
        %v4065 = vpack.c.b16 %v3837, %v3835
        %v4066 = vpack.c.b16 %v3838, %v3836
        %v4067 = vpack.c.b16 %v3841, %v3839
        %v4068 = vpack.c.b16 %v3842, %v3840
        %v4069 = vpack.c.b16 %v3845, %v3843
        %v4070 = vpack.c.b16 %v3846, %v3844
        %v4071 = vpack.c.b16 %v3849, %v3847
        %v4072 = vpack.c.b16 %v3850, %v3848
        %v4073 = vpack.c.b16 %v3853, %v3851
        %v4074 = vpack.c.b16 %v3854, %v3852
        %v4075 = vpack.c.b16 %v3857, %v3855
        %v4076 = vpack.c.b16 %v3858, %v3856
        %v4077 = vpack.c.b16 %v3861, %v3859
        %v4078 = vpack.c.b16 %v3862, %v3860
        %v4079 = vpack.c.b16 %v3865, %v3863
        %v4080 = vpack.c.b16 %v3866, %v3864
        %v4081 = vpack.c.b16 %v3869, %v3867
        %v4082 = vpack.c.b16 %v3870, %v3868
        %v4083 = vpack.c.b16 %v3873, %v3871
        %v4084 = vpack.c.b16 %v3874, %v3872
        %v4085 = vpack.c.b16 %v3877, %v3875
        %v4086 = vpack.c.b16 %v3878, %v3876
        %v4087 = vpack.c.b16 %v3881, %v3879
        %v4088 = vpack.c.b16 %v3882, %v3880
        %v4089 = vpack.c.b16 %v3885, %v3883
        %v4090 = vpack.c.b16 %v3886, %v3884
        %v4091 = vpack.c.b16 %v3889, %v3887
        %v4092 = vpack.c.b16 %v3890, %v3888
        %v4093 = vpack.c.b16 %v3893, %v3891
        %v4094 = vpack.c.b16 %v3894, %v3892
        %v4095 = vpack.c.b16 %v3897, %v3895
        %v4096 = vpack.c.b16 %v3898, %v3896
        %v4097 = vpack.c.b16 %v3901, %v3899
        %v4098 = vpack.c.b16 %v3902, %v3900
        %v4099 = vpack.c.b16 %v3905, %v3903
        %v4100 = vpack.c.b16 %v3906, %v3904
        %v4101 = vpack.c.b16 %v3909, %v3907
        %v4102 = vpack.c.b16 %v3910, %v3908
        %v4103 = vpack.c.b16 %v3913, %v3911
        %v4104 = vpack.c.b16 %v3914, %v3912
        %v4105 = vpack.c.b16 %v3917, %v3915
        %v4106 = vpack.c.b16 %v3918, %v3916
        %v4107 = vpack.c.b16 %v3921, %v3919
        %v4108 = vpack.c.b16 %v3922, %v3920
        %v4109 = vpack.c.b16 %v3925, %v3923
        %v4110 = vpack.c.b16 %v3926, %v3924
        %v4111 = vpack.c.b16 %v3929, %v3927
        %v4112 = vpack.c.b16 %v3930, %v3928
        %v4113 = vpack.c.b16 %v3933, %v3931
        %v4114 = vpack.c.b16 %v3934, %v3932
        %v4115 = vpack.c.b16 %v3937, %v3935
        %v4116 = vpack.c.b16 %v3938, %v3936
        %v4117 = vpack.c.b16 %v3941, %v3939
        %v4118 = vpack.c.b16 %v3942, %v3940
        %v4119 = vpack.c.b16 %v3945, %v3943
        %v4120 = vpack.c.b16 %v3946, %v3944
        %v4121 = vpack.c.b16 %v3949, %v3947
        %v4122 = vpack.c.b16 %v3950, %v3948
        %v4123 = vpack.c.b16 %v3953, %v3951
        %v4124 = vpack.c.b16 %v3954, %v3952
        %v4125 = vpack.c.b16 %v3957, %v3955
        %v4126 = vpack.c.b16 %v3958, %v3956
        %v4127 = vpack.c.b16 %v3961, %v3959
        %v4128 = vpack.c.b16 %v3962, %v3960
        %v4129 = vpack.c.b16 %v3965, %v3963
        %v4130 = vpack.c.b16 %v3966, %v3964
        %v4131 = vpack.c.b16 %v3969, %v3967
        %v4132 = vpack.c.b16 %v3970, %v3968
        %v4133 = vpack.c.b16 %v3973, %v3971
        %v4134 = vpack.c.b16 %v3974, %v3972
        %v4135 = vpack.c.b16 %v3977, %v3975
        %v4136 = vpack.c.b16 %v3978, %v3976
        %v4137 = vpack.c.b16 %v3981, %v3979
        %v4138 = vpack.c.b16 %v3982, %v3980
        %v4139 = vpack.c.b16 %v3985, %v3983
        %v4140 = vpack.c.b16 %v3986, %v3984
        %v4141 = vpack.c.b16 %v3989, %v3987
        %v4142 = vpack.c.b16 %v3990, %v3988
        %v4143 = vpack.c.b16 %v3993, %v3991
        %v4144 = vpack.c.b16 %v3994, %v3992
        %v4145 = vpack.c.b16 %v3997, %v3995
        %v4146 = vpack.c.b16 %v3998, %v3996
        %v4147 = vpack.c.b16 %v4001, %v3999
        %v4148 = vpack.c.b16 %v4002, %v4000
        %v4149 = vpack.c.b16 %v4005, %v4003
        %v4150 = vpack.c.b16 %v4006, %v4004
        %v4151 = vpack.c.b16 %v4009, %v4007
        %v4152 = vpack.c.b16 %v4010, %v4008
        %v4153 = vpack.c.b16 %v4013, %v4011
        %v4154 = vpack.c.b16 %v4014, %v4012
        %v4155 = vpack.c.b16 %v4017, %v4015
        %v4156 = vpack.c.b16 %v4018, %v4016
        %v4157 = vpack.c.b16 %v4021, %v4019
        %v4158 = vpack.c.b16 %v4022, %v4020
        %v4159 = vpack.c.b16 %v4025, %v4023
        %v4160 = vpack.c.b16 %v4026, %v4024
        %v4161 = vpack.c.b16 %v4029, %v4027
        %v4162 = vpack.c.b16 %v4030, %v4028
        %v4163 = vpack.c.b16 %v4033, %v4031
        %v4164 = vpack.c.b16 %v4034, %v4032
        %v4165 = vpack.c.b16 %v4037, %v4035
        %v4166 = vpack.c.b16 %v4038, %v4036
        %4295 = vmatprep.subr.bf16.mxu0 %v4054
        %4296 = vmatpush1.bf16.msra.mxu0 %v4053
        %4297 = vmatprep.subr.bf16.mxu0 %v4052
        %4298 = vmatpush1.bf16.msra.mxu0 %v4051
        %4299 = vmatprep.subr.bf16.mxu0 %v4050
        %4300 = vmatpush1.bf16.msra.mxu0 %v4049
        %4301 = vmatprep.subr.bf16.mxu0 %v4048
        %4302 = vmatpush1.bf16.msra.mxu0 %v4047
        %4303 = vmatprep.subr.bf16.mxu0 %v4046
        %4304 = vmatpush1.bf16.msra.mxu0 %v4045
        %4305 = vmatprep.subr.bf16.mxu0 %v4044
        %4306 = vmatpush1.bf16.msra.mxu0 %v4043
        %4307 = vmatprep.subr.bf16.mxu0 %v4042
        %4308 = vmatpush1.bf16.msra.mxu0 %v4041
        %4309 = vmatprep.subr.bf16.mxu0 %v4040
        %4310 = vmatpush1.bf16.msra.mxu0 %v4039
        %4311 = vmatprep.subr.bf16.mxu0 %v4070
        %4312 = vmatpush2.bf16.msra.mxu0 %v4069
        %4313 = vmatprep.subr.bf16.mxu0 %v4068
        %4314 = vmatpush2.bf16.msra.mxu0 %v4067
        %4315 = vmatprep.subr.bf16.mxu0 %v4066
        %4316 = vmatpush2.bf16.msra.mxu0 %v4065
        %4317 = vmatprep.subr.bf16.mxu0 %v4064
        %4318 = vmatpush2.bf16.msra.mxu0 %v4063
        %4319 = vmatprep.subr.bf16.mxu0 %v4062
        %4320 = vmatpush2.bf16.msra.mxu0 %v4061
        %4321 = vmatprep.subr.bf16.mxu0 %v4060
        %4322 = vmatpush2.bf16.msra.mxu0 %v4059
        %4323 = vmatprep.subr.bf16.mxu0 %v4058
        %4324 = vmatpush2.bf16.msra.mxu0 %v4057
        %4325 = vmatprep.subr.bf16.mxu0 %v4056
        %4326 = vmatpush2.bf16.msra.mxu0 %v4055
        %4327 = vmatprep.mubr.bf16.mxu0 %v3508
        %4328 = vmatmul.mubr.bf16.gmra.mxu0 %v3507
        %v4329 = vpop.f32.mrf.mxu0
        %v4330 = vadd.f32 %v3648, %v4329
        %v4331 = vpop.f32.mrf.mxu0
        %v4332 = vadd.f32 %v3652, %v4331
        %v4333 = vpop.f32.mrf.mxu0
        %v4334 = vpop.f32.mrf.mxu0
        %4335 = vdwg.mxu0
        %4336 = vmatprep.subr.bf16.mxu0 %v4086
        %4337 = vmatpush1.bf16.msra.mxu0 %v4085
        %4338 = vmatprep.subr.bf16.mxu0 %v4084
        %4339 = vmatpush1.bf16.msra.mxu0 %v4083
        %4340 = vmatprep.subr.bf16.mxu0 %v4082
        %4341 = vmatpush1.bf16.msra.mxu0 %v4081
        %4342 = vmatprep.subr.bf16.mxu0 %v4080
        %4343 = vmatpush1.bf16.msra.mxu0 %v4079
        %4344 = vmatprep.subr.bf16.mxu0 %v4078
        %4345 = vmatpush1.bf16.msra.mxu0 %v4077
        %4346 = vmatprep.subr.bf16.mxu0 %v4076
        %4347 = vmatpush1.bf16.msra.mxu0 %v4075
        %4348 = vmatprep.subr.bf16.mxu0 %v4074
        %4349 = vmatpush1.bf16.msra.mxu0 %v4073
        %4350 = vmatprep.subr.bf16.mxu0 %v4072
        %4351 = vmatpush1.bf16.msra.mxu0 %v4071
        %4352 = vmatprep.subr.bf16.mxu0 %v4102
        %4353 = vmatpush2.bf16.msra.mxu0 %v4101
        %4354 = vmatprep.subr.bf16.mxu0 %v4100
        %4355 = vmatpush2.bf16.msra.mxu0 %v4099
        %4356 = vmatprep.subr.bf16.mxu0 %v4098
        %4357 = vmatpush2.bf16.msra.mxu0 %v4097
        %4358 = vmatprep.subr.bf16.mxu0 %v4096
        %4359 = vmatpush2.bf16.msra.mxu0 %v4095
        %4360 = vmatprep.subr.bf16.mxu0 %v4094
        %4361 = vmatpush2.bf16.msra.mxu0 %v4093
        %4362 = vmatprep.subr.bf16.mxu0 %v4092
        %4363 = vmatpush2.bf16.msra.mxu0 %v4091
        %4364 = vmatprep.subr.bf16.mxu0 %v4090
        %4365 = vmatpush2.bf16.msra.mxu0 %v4089
        %4366 = vmatprep.subr.bf16.mxu0 %v4088
        %4367 = vmatpush2.bf16.msra.mxu0 %v4087
        %4368 = vmatprep.mubr.bf16.mxu0 %v3510
        %4369 = vmatmul.mubr.bf16.gmra.mxu0 %v3509
        %v4370 = vpop.f32.mrf.mxu0
        %v4371 = vadd.f32 %v4330, %v4370
        %v4372 = vpop.f32.mrf.mxu0
        %v4373 = vadd.f32 %v4332, %v4372
        %v4374 = vpop.f32.mrf.mxu0
        %v4375 = vpop.f32.mrf.mxu0
        %4376 = vdwg.mxu0
        %4377 = vmatprep.subr.bf16.mxu0 %v4118
        %4378 = vmatpush1.bf16.msra.mxu0 %v4117
        %4379 = vmatprep.subr.bf16.mxu0 %v4116
        %4380 = vmatpush1.bf16.msra.mxu0 %v4115
        %4381 = vmatprep.subr.bf16.mxu0 %v4114
        %4382 = vmatpush1.bf16.msra.mxu0 %v4113
        %4383 = vmatprep.subr.bf16.mxu0 %v4112
        %4384 = vmatpush1.bf16.msra.mxu0 %v4111
        %4385 = vmatprep.subr.bf16.mxu0 %v4110
        %4386 = vmatpush1.bf16.msra.mxu0 %v4109
        %4387 = vmatprep.subr.bf16.mxu0 %v4108
        %4388 = vmatpush1.bf16.msra.mxu0 %v4107
        %4389 = vmatprep.subr.bf16.mxu0 %v4106
        %4390 = vmatpush1.bf16.msra.mxu0 %v4105
        %4391 = vmatprep.subr.bf16.mxu0 %v4104
        %4392 = vmatpush1.bf16.msra.mxu0 %v4103
        %4393 = vmatprep.subr.bf16.mxu0 %v4134
        %4394 = vmatpush2.bf16.msra.mxu0 %v4133
        %4395 = vmatprep.subr.bf16.mxu0 %v4132
        %4396 = vmatpush2.bf16.msra.mxu0 %v4131
        %4397 = vmatprep.subr.bf16.mxu0 %v4130
        %4398 = vmatpush2.bf16.msra.mxu0 %v4129
        %4399 = vmatprep.subr.bf16.mxu0 %v4128
        %4400 = vmatpush2.bf16.msra.mxu0 %v4127
        %4401 = vmatprep.subr.bf16.mxu0 %v4126
        %4402 = vmatpush2.bf16.msra.mxu0 %v4125
        %4403 = vmatprep.subr.bf16.mxu0 %v4124
        %4404 = vmatpush2.bf16.msra.mxu0 %v4123
        %4405 = vmatprep.subr.bf16.mxu0 %v4122
        %4406 = vmatpush2.bf16.msra.mxu0 %v4121
        %4407 = vmatprep.subr.bf16.mxu0 %v4120
        %4408 = vmatpush2.bf16.msra.mxu0 %v4119
        %4409 = vmatprep.mubr.bf16.mxu0 %v3512
        %4410 = vmatmul.mubr.bf16.gmra.mxu0 %v3511
        %v4411 = vpop.f32.mrf.mxu0
        %v4412 = vadd.f32 %v4371, %v4411
        %v4413 = vpop.f32.mrf.mxu0
        %v4414 = vadd.f32 %v4373, %v4413
        %v4415 = vpop.f32.mrf.mxu0
        %v4416 = vpop.f32.mrf.mxu0
        %4417 = vdwg.mxu0
        %4418 = vmatprep.subr.bf16.mxu0 %v4150
        %4419 = vmatpush1.bf16.msra.mxu0 %v4149
        %4420 = vmatprep.subr.bf16.mxu0 %v4148
        %4421 = vmatpush1.bf16.msra.mxu0 %v4147
        %4422 = vmatprep.subr.bf16.mxu0 %v4146
        %4423 = vmatpush1.bf16.msra.mxu0 %v4145
        %4424 = vmatprep.subr.bf16.mxu0 %v4144
        %4425 = vmatpush1.bf16.msra.mxu0 %v4143
        %4426 = vmatprep.subr.bf16.mxu0 %v4142
        %4427 = vmatpush1.bf16.msra.mxu0 %v4141
        %4428 = vmatprep.subr.bf16.mxu0 %v4140
        %4429 = vmatpush1.bf16.msra.mxu0 %v4139
        %4430 = vmatprep.subr.bf16.mxu0 %v4138
        %4431 = vmatpush1.bf16.msra.mxu0 %v4137
        %4432 = vmatprep.subr.bf16.mxu0 %v4136
        %4433 = vmatpush1.bf16.msra.mxu0 %v4135
        %4434 = vmatprep.subr.bf16.mxu0 %v4166
        %4435 = vmatpush2.bf16.msra.mxu0 %v4165
        %4436 = vmatprep.subr.bf16.mxu0 %v4164
        %4437 = vmatpush2.bf16.msra.mxu0 %v4163
        %4438 = vmatprep.subr.bf16.mxu0 %v4162
        %4439 = vmatpush2.bf16.msra.mxu0 %v4161
        %4440 = vmatprep.subr.bf16.mxu0 %v4160
        %4441 = vmatpush2.bf16.msra.mxu0 %v4159
        %4442 = vmatprep.subr.bf16.mxu0 %v4158
        %4443 = vmatpush2.bf16.msra.mxu0 %v4157
        %4444 = vmatprep.subr.bf16.mxu0 %v4156
        %4445 = vmatpush2.bf16.msra.mxu0 %v4155
        %4446 = vmatprep.subr.bf16.mxu0 %v4154
        %4447 = vmatpush2.bf16.msra.mxu0 %v4153
        %4448 = vmatprep.subr.bf16.mxu0 %v4152
        %4449 = vmatpush2.bf16.msra.mxu0 %v4151
        %4450 = vmatprep.mubr.bf16.mxu0 %v3514
        %4451 = vmatmul.mubr.bf16.gmra.mxu0 %v3513
        %v4452 = vpop.f32.mrf.mxu0
        %v4453 = vadd.f32 %v4412, %v4452
        %v4454 = vpop.f32.mrf.mxu0
        %v4455 = vadd.f32 %v4414, %v4454
        %v4456 = vpop.f32.mrf.mxu0
        %v4457 = vpop.f32.mrf.mxu0
        %4458 = vdwg.mxu0
        %v4459 = vadd.f32 %v2521, %v4453
        %v4460 = vadd.f32 %v2522, %v4455
        %v4461 = vld [vmem:[%s11] sm:$0x3]
        %v4462 = vld [vmem:[#allocation17] sm:$0x3]
        %v4463 = vadd.f32 %v4459, %v4460
        %4464 = vadd.xlane.f32.xlu0 %v4463
        %v4465 = vpop.xlane.xlu0 %4464
        %v4466 = vmul.f32 %v4465, %v2483
        %v4467 = vsub.f32 %v4459, %v4466
        %v4468 = vsub.f32 %v4460, %v4466
        %v4469 = vmul.f32 %v4467, %v4467
        %v4470 = vmul.f32 %v4468, %v4468
        %v4471 = vadd.f32 %v4469, %v4470
        %4472 = vadd.xlane.f32.xlu0 %v4471
        %v4473 = vpop.xlane.xlu0 %4472
        %v4474 = vmul.f32 %v4473, %v2483
        %v4475 = vadd.f32 %v4474, 1e-05
        %v4476 = vrsqrt.pop %v4475
        %v4477 = vmul.f32 %v4467, %v4476
        %v4478 = vmul.f32 %v4468, %v4476
        %v4480 = vlaneseq
        %v4481 = vshrl.u32 %v4480, 7
        %v4482 = vsub.s32 0, %v4481
        %v4483 = vrot.slane %v4461, %v4482
        %v4484 = vlaneseq
        %v4485 = vshrl.u32 %v4484, 7
        %v4486 = vsub.s32 1, %v4485
        %v4487 = vrot.slane %v4461, %v4486
        %v4490 = vmul.f32 %v4477, %v4483
        %v4491 = vmul.f32 %v4478, %v4487
        %v4493 = vlaneseq
        %v4494 = vshrl.u32 %v4493, 7
        %v4495 = vsub.s32 0, %v4494
        %v4496 = vrot.slane %v4462, %v4495
        %v4497 = vlaneseq
        %v4498 = vshrl.u32 %v4497, 7
        %v4499 = vsub.s32 1, %v4498
        %v4500 = vrot.slane %v4462, %v4499
        %v4503 = vadd.f32 %v4490, %v4496
        %v4504 = vadd.f32 %v4491, %v4500
        %4505 = vst [vmem:[%s564] sm:$0xff] %v4503
        %4506 = vst [vmem:[%s564 + $0x8] sm:$0xff] %v4504
        %s4507 = sand.u32 %s320, 1
        %s4508 = scalar_lea.sflag [#allocation5], %s4507
        %s4509 = sand.u32 %s320, 1
        %s4510 = smul.addr %s4509, 16
        %s4511 = scalar_lea.vmem [#allocation18], %s4510
        // Predicated region
        $region109: #{transformer_layer.1} parent=71 // pred_check
          %p4512 = pneg %p330
        $region110: #{transformer_layer.1} parent=71 // pred_check_branch
          %4514 = sbr.rel (%p4512) target = $region112
        $region111: #{transformer_layer.1} parent=71 // pred_region
          %s4516 = ssub.s32 256, 256
          %4517 = vsyncadd %s4508, %s4516
          %s4518 = smul.addr %s34, 2
          %s4519 = smul.addr %s4518, 128
          %s4520 = scalar_lea.hbm %s13, %s4519
          %s4522 = sshll.u32 %s4511, 4
          %s4523 = int_to_ptr.vmem [resolvable:$true] %s4522
          %4525 = dma.vmem_to_hbm [thread:$0]  %s4523, 256, %s4520, %s4508
        $region112: #{transformer_layer.1} parent=71 // pred_fallthru
          _
      $region72: #{transformer_layer.1} parent=5 // pred_fallthru
        _
      %p4526 = scmp.le.s32.totalorder 2, %s29
      // Predicated region
      $region113: #{transformer_layer.1} parent=5 // pred_check
        %p4527 = pneg %p4526
      $region114: #{transformer_layer.1} parent=5 // pred_check_branch
        %4529 = sbr.rel (%p4527) target = $region116
      $region115: #{transformer_layer.1} parent=5 // pred_region
        %s4530 = ssub.s32 %s29, 2
        // Predicated region
        $region117: #{transformer_layer.1} parent=115 // pred_check
          %p4531 = pneg %p336
        $region118: #{transformer_layer.1} parent=115 // pred_check_branch
          %4533 = sbr.rel (%p4531) target = $region120
        $region119: #{transformer_layer.1} parent=115 // pred_region
          %s4534 = sand.u32 %s321, 1
          %s4535 = scalar_lea.sflag [#allocation5], %s4534
          %s4536 = sand.u32 %s321, 1
          %s4537 = smul.addr %s4536, 16
          %s4538 = scalar_lea.vmem [#allocation18], %s4537
          %4539 = dma.done %s4535, 256
        $region120: #{transformer_layer.1} parent=115 // pred_fallthru
          _
      $region116: #{transformer_layer.1} parent=5 // pred_fallthru
        _
    $region6: #{transformer_layer.1} parent=1 // loop_footer
      %s33 = sadd.s32 1, %s29
    $region7: #{transformer_layer.1} parent=1 // loop_footer_branch
      %28 = sbr.rel target = $region3
    $region8: #{transformer_layer.1} parent=1 // loop_exit
      _
    %4540 = vsyncpa [#allocation4], 1
    %s4541 = scalar_lea.sflag [#allocation4], 1
    %4542 = vsyncpa %s4541, 1
    %4543 = vsyncpa [#allocation7], 1
    %4544 = vsyncpa [#allocation10], 1
    %4545 = vsyncpa [#allocation13], 1
    %4546 = vsyncpa [#allocation16], 1
    %4547 = vsyncpa [#allocation5], 1
    %s4548 = scalar_lea.sflag [#allocation5], 1
    %4549 = vsyncpa %s4548, 1

</llo_original>
